<compile_context>
chip_gen: v7x
topology: tpu7x:2x2x1
jax: 0.10.0
libtpu: 0.0.40
codegen_flags: <defaults>
</compile_context>

<pallas_src>
import functools

import jax
import jax.numpy as jnp
from jax.experimental import pallas as pl
from jax.experimental.pallas import tpu as pltpu

# ----------------------------- mini-BERT config -----------------------------
VOCAB = 64
HIDDEN = 128
N_HEADS = 4
HEAD_DIM = HIDDEN // N_HEADS
FFN = 256
N_LAYERS = 2
MAX_POS = 16
N_TYPES = 2
NUM_CLASSES = 2
CLS_PAD = 128          # classifier output padded to 128 lanes (dense store)
LN_EPS = 1e-12


# ------------------------------ in-kernel math -------------------------------
def _mm(x, w):
    """MXU matmul: bf16 operands, f32 accumulation."""
    return jnp.dot(x.astype(jnp.bfloat16), w.astype(jnp.bfloat16),
                   preferred_element_type=jnp.float32)


def _layernorm(x, g, b, eps=LN_EPS):
    mu = jnp.mean(x, axis=-1, keepdims=True)
    xc = x - mu
    var = jnp.mean(xc * xc, axis=-1, keepdims=True)
    return xc * jax.lax.rsqrt(var + eps) * g + b


def _gelu(y):
    # TODO(synk): HF BERT uses exact erf-GELU; tanh approximation used here.
    c = 0.7978845608028654
    return 0.5 * y * (1.0 + jnp.tanh(c * (y + 0.044715 * y * y * y)))


# ------------------------------ fused kernel --------------------------------
def _fused_forward_kernel(
        emb_ref, mask_ref,
        emb_g_ref, emb_b_ref,
        wqkv_ref, bqkv_ref, wo_ref, bo_ref, attn_g_ref, attn_b_ref,
        w1_ref, b1_ref, w2_ref, b2_ref, ffn_g_ref, ffn_b_ref,
        cls_w_ref, cls_b_ref,
        logits_ref,
        ctx_ref,
        *, batch, seq_len):
    B, S = batch, seq_len
    scale = 1.0 / (HEAD_DIM ** 0.5)

    # Embedding LayerNorm (no residual add).
    x = _layernorm(emb_ref[...], emb_g_ref[...], emb_b_ref[...])   # (B*S, H) f32

    for l in range(N_LAYERS):                       # static unroll (2 layers)
        # ---------------- self-attention (fused QKV projection) -------------
        qkv = _mm(x, wqkv_ref[l]) + bqkv_ref[l]     # (B*S, 3H) f32

        for b in range(B):                          # static unroll
            m_b = mask_ref[pl.ds(b, 1), :]          # (1, S) additive mask
            for h in range(N_HEADS):                # static unroll
                q = qkv[b * S:(b + 1) * S,
                        h * HEAD_DIM:(h + 1) * HEAD_DIM]
                k = qkv[b * S:(b + 1) * S,
                        HIDDEN + h * HEAD_DIM:HIDDEN + (h + 1) * HEAD_DIM]
                v = qkv[b * S:(b + 1) * S,
                        2 * HIDDEN + h * HEAD_DIM:2 * HIDDEN + (h + 1) * HEAD_DIM]
                s = jnp.dot(q, k.T, preferred_element_type=jnp.float32) * scale
                s = s + m_b                          # broadcast over query rows
                s = s - jnp.max(s, axis=-1, keepdims=True)
                p = jnp.exp(s)
                p = p * pl.reciprocal(jnp.sum(p, axis=-1, keepdims=True),
                                      approx=True)
                ctx_ref[pl.ds(b * S, S), pl.ds(h * HEAD_DIM, HEAD_DIM)] = (
                    jnp.dot(p, v, preferred_element_type=jnp.float32))

        attn_out = _mm(ctx_ref[...], wo_ref[l]) + bo_ref[l]
        x = _layernorm(attn_out + x, attn_g_ref[l], attn_b_ref[l])

        # ---------------------------- feed-forward ---------------------------
        hmid = _gelu(_mm(x, w1_ref[l]) + b1_ref[l])
        ffn_out = _mm(hmid, w2_ref[l]) + b2_ref[l]
        x = _layernorm(ffn_out + x, ffn_g_ref[l], ffn_b_ref[l])

    # -------- [CLS] rows -> classifier (128-lane padded, dense store) --------
    cls_rep = jnp.concatenate([x[b * S:b * S + 1, :] for b in range(B)], axis=0)
    logits_ref[...] = (_mm(cls_rep, cls_w_ref[...]) + cls_b_ref[...]
                       ).astype(logits_ref.dtype)


# ------------------------------- parameters ---------------------------------
def init_params(key):
    keys = iter(jax.random.split(key, 64))

    def nrm(shape, dtype=jnp.float32):
        return (0.02 * jax.random.normal(next(keys), shape, jnp.float32)
                ).astype(dtype)

    L = N_LAYERS
    cls_w = jnp.zeros((HIDDEN, CLS_PAD), jnp.float32)
    cls_w = cls_w.at[:, :NUM_CLASSES].set(
        0.02 * jax.random.normal(next(keys), (HIDDEN, NUM_CLASSES), jnp.float32))

    return {
        # embeddings (f32; gathered in XLA, LayerNorm in-kernel)
        "word_emb": nrm((VOCAB, HIDDEN)),
        "pos_emb": nrm((MAX_POS, HIDDEN)),
        "type_emb": nrm((N_TYPES, HIDDEN)),
        "emb_ln_g": jnp.ones((1, HIDDEN), jnp.float32),
        "emb_ln_b": jnp.zeros((1, HIDDEN), jnp.float32),
        # per-layer weights stacked on a leading (L, ...) axis;
        # matmul operands stored in bf16 (MXU fast path), the rest f32.
        "wqkv": nrm((L, HIDDEN, 3 * HIDDEN), jnp.bfloat16),
        "bqkv": jnp.zeros((L, 1, 3 * HIDDEN), jnp.float32),
        "wo": nrm((L, HIDDEN, HIDDEN), jnp.bfloat16),
        "bo": jnp.zeros((L, 1, HIDDEN), jnp.float32),
        "attn_ln_g": jnp.ones((L, 1, HIDDEN), jnp.float32),
        "attn_ln_b": jnp.zeros((L, 1, HIDDEN), jnp.float32),
        "w1": nrm((L, HIDDEN, FFN), jnp.bfloat16),
        "b1": jnp.zeros((L, 1, FFN), jnp.float32),
        "w2": nrm((L, FFN, HIDDEN), jnp.bfloat16),
        "b2": jnp.zeros((L, 1, HIDDEN), jnp.float32),
        "ffn_ln_g": jnp.ones((L, 1, HIDDEN), jnp.float32),
        "ffn_ln_b": jnp.zeros((L, 1, HIDDEN), jnp.float32),
        # classifier, padded to 128 output lanes (real logits in cols [:2])
        "cls_w": cls_w.astype(jnp.bfloat16),
        "cls_b": jnp.zeros((1, CLS_PAD), jnp.float32),
    }


# --------------------------------- forward ----------------------------------
def decision_classifier_forward(params, seq, attn_masks):
    """Mirrors: BERT(seq, attention_mask) -> last_hidden_state[:, 0] -> Linear."""
    B, S = seq.shape

    # Embedding gathers (XLA glue); everything else runs in the fused kernel.
    pos_ids = jnp.arange(S, dtype=jnp.int32)
    emb = (params["word_emb"][seq]
           + params["pos_emb"][pos_ids][None, :, :]
           + params["type_emb"][jnp.zeros_like(seq)])
    emb = emb.reshape(B * S, HIDDEN).astype(jnp.float32)

    # HF-style additive attention mask: 0 where attended, -1e4 where padded.
    mask_add = (1.0 - attn_masks.astype(jnp.float32)) * -10000.0      # (B, S)

    inputs = (
        emb, mask_add,
        params["emb_ln_g"], params["emb_ln_b"],
        params["wqkv"], params["bqkv"], params["wo"], params["bo"],
        params["attn_ln_g"], params["attn_ln_b"],
        params["w1"], params["b1"], params["w2"], params["b2"],
        params["ffn_ln_g"], params["ffn_ln_b"],
        params["cls_w"], params["cls_b"],
    )

    def full_spec(a):
        zeros = (0,) * a.ndim
        return pl.BlockSpec(a.shape, lambda i, zeros=zeros: zeros)

    logits_pad = pl.pallas_call(
        functools.partial(_fused_forward_kernel, batch=B, seq_len=S),
        out_shape=jax.ShapeDtypeStruct((B, CLS_PAD), jnp.float32),
        grid=(1,),
        in_specs=[full_spec(a) for a in inputs],
        out_specs=pl.BlockSpec((B, CLS_PAD), lambda i: (0, 0)),
        scratch_shapes=[pltpu.VMEM((B * S, HIDDEN), jnp.float32)],   # ctx buffer
        compiler_params=pltpu.CompilerParams(
            dimension_semantics=("arbitrary",)),
    )(*inputs)

    return logits_pad[:, :NUM_CLASSES]                                # (B, 2)


# ----------------------------------- main ------------------------------------
if __name__ == "__main__":
    key = jax.random.PRNGKey(0)
    pkey, skey = jax.random.split(key)
    params = init_params(pkey)

    B, S = 2, 8
    seq = jax.random.randint(skey, (B, S), 0, VOCAB, dtype=jnp.int32)
    attn_masks = jnp.ones((B, S), dtype=jnp.int32).at[1, 6:].set(0)  # some padding

    forward = jax.jit(decision_classifier_forward)
    logits = forward(params, seq, attn_masks)
    logits = jax.block_until_ready(logits)

    assert logits.shape == (B, NUM_CLASSES) and logits.dtype == jnp.float32
    assert bool(jnp.all(jnp.isfinite(logits)))
    print("KERNEL_OK")
</pallas_src>

<mosaic_0001>
module attributes {stable_mosaic.version = 11 : i64} {
  func.func @_fused_forward_kernel(%arg0: i32, %arg1: memref<16x128xf32, #tpu.memory_space<vmem>>, %arg2: memref<2x8xf32, #tpu.memory_space<vmem>>, %arg3: memref<1x128xf32, #tpu.memory_space<vmem>>, %arg4: memref<1x128xf32, #tpu.memory_space<vmem>>, %arg5: memref<2x128x384xbf16, #tpu.memory_space<vmem>>, %arg6: memref<2x1x384xf32, #tpu.memory_space<vmem>>, %arg7: memref<2x128x128xbf16, #tpu.memory_space<vmem>>, %arg8: memref<2x1x128xf32, #tpu.memory_space<vmem>>, %arg9: memref<2x1x128xf32, #tpu.memory_space<vmem>>, %arg10: memref<2x1x128xf32, #tpu.memory_space<vmem>>, %arg11: memref<2x128x256xbf16, #tpu.memory_space<vmem>>, %arg12: memref<2x1x256xf32, #tpu.memory_space<vmem>>, %arg13: memref<2x256x128xbf16, #tpu.memory_space<vmem>>, %arg14: memref<2x1x128xf32, #tpu.memory_space<vmem>>, %arg15: memref<2x1x128xf32, #tpu.memory_space<vmem>>, %arg16: memref<2x1x128xf32, #tpu.memory_space<vmem>>, %arg17: memref<128x128xbf16, #tpu.memory_space<vmem>>, %arg18: memref<1x128xf32, #tpu.memory_space<vmem>>, %arg19: memref<2x128xf32, #tpu.memory_space<vmem>>, %arg20: memref<16x128xf32, #tpu.memory_space<vmem>>) attributes {dimension_semantics = [#tpu.dimension_semantics<arbitrary>], iteration_bounds = array<i64: 1>, scalar_prefetch = 0 : i64, scratch_operands = 1 : i64, tpu.core_type = #tpu.core_type<tc>, window_params = [{pipeline_mode = #tpu.pipeline_mode<synchronous>, transform_indices = @transform_0, window_bounds = array<i64: 16, 128>}, {pipeline_mode = #tpu.pipeline_mode<synchronous>, transform_indices = @transform_1, window_bounds = array<i64: 2, 8>}, {pipeline_mode = #tpu.pipeline_mode<synchronous>, transform_indices = @transform_2, window_bounds = array<i64: 1, 128>}, {pipeline_mode = #tpu.pipeline_mode<synchronous>, transform_indices = @transform_3, window_bounds = array<i64: 1, 128>}, {pipeline_mode = #tpu.pipeline_mode<synchronous>, transform_indices = @transform_4, window_bounds = array<i64: 2, 128, 384>}, {pipeline_mode = #tpu.pipeline_mode<synchronous>, transform_indices = @transform_5, window_bounds = array<i64: 2, 1, 384>}, {pipeline_mode = #tpu.pipeline_mode<synchronous>, transform_indices = @transform_6, window_bounds = array<i64: 2, 128, 128>}, {pipeline_mode = #tpu.pipeline_mode<synchronous>, transform_indices = @transform_7, window_bounds = array<i64: 2, 1, 128>}, {pipeline_mode = #tpu.pipeline_mode<synchronous>, transform_indices = @transform_8, window_bounds = array<i64: 2, 1, 128>}, {pipeline_mode = #tpu.pipeline_mode<synchronous>, transform_indices = @transform_9, window_bounds = array<i64: 2, 1, 128>}, {pipeline_mode = #tpu.pipeline_mode<synchronous>, transform_indices = @transform_10, window_bounds = array<i64: 2, 128, 256>}, {pipeline_mode = #tpu.pipeline_mode<synchronous>, transform_indices = @transform_11, window_bounds = array<i64: 2, 1, 256>}, {pipeline_mode = #tpu.pipeline_mode<synchronous>, transform_indices = @transform_12, window_bounds = array<i64: 2, 256, 128>}, {pipeline_mode = #tpu.pipeline_mode<synchronous>, transform_indices = @transform_13, window_bounds = array<i64: 2, 1, 128>}, {pipeline_mode = #tpu.pipeline_mode<synchronous>, transform_indices = @transform_14, window_bounds = array<i64: 2, 1, 128>}, {pipeline_mode = #tpu.pipeline_mode<synchronous>, transform_indices = @transform_15, window_bounds = array<i64: 2, 1, 128>}, {pipeline_mode = #tpu.pipeline_mode<synchronous>, transform_indices = @transform_16, window_bounds = array<i64: 128, 128>}, {pipeline_mode = #tpu.pipeline_mode<synchronous>, transform_indices = @transform_17, window_bounds = array<i64: 1, 128>}, {pipeline_mode = #tpu.pipeline_mode<synchronous>, transform_indices = @transform_18, window_bounds = array<i64: 2, 128>}]} {
    %c0 = arith.constant 0 : index
    %c0_0 = arith.constant 0 : index
    %0 = vector.load %arg1[%c0, %c0_0] : memref<16x128xf32, #tpu.memory_space<vmem>>, vector<16x128xf32>
    %c0_1 = arith.constant 0 : index
    %c0_2 = arith.constant 0 : index
    %1 = vector.load %arg3[%c0_1, %c0_2] : memref<1x128xf32, #tpu.memory_space<vmem>>, vector<1x128xf32>
    %c0_3 = arith.constant 0 : index
    %c0_4 = arith.constant 0 : index
    %2 = vector.load %arg4[%c0_3, %c0_4] : memref<1x128xf32, #tpu.memory_space<vmem>>, vector<1x128xf32>
    %cst = arith.constant dense<0.000000e+00> : vector<16xf32>
    %3 = vector.multi_reduction <add>, %0, %cst [1] : vector<16x128xf32> to vector<16xf32>
    %4 = vector.shape_cast %3 : vector<16xf32> to vector<16x1xf32>
    %cst_5 = arith.constant 1.280000e+02 : f32
    %5 = vector.broadcast %cst_5 : f32 to vector<16x1xf32>
    %6 = arith.divf %4, %5 : vector<16x1xf32>
    %7 = vector.broadcast %6 : vector<16x1xf32> to vector<16x128xf32>
    %8 = arith.subf %0, %7 : vector<16x128xf32>
    %9 = arith.mulf %8, %8 : vector<16x128xf32>
    %cst_6 = arith.constant dense<0.000000e+00> : vector<16xf32>
    %10 = vector.multi_reduction <add>, %9, %cst_6 [1] : vector<16x128xf32> to vector<16xf32>
    %11 = vector.shape_cast %10 : vector<16xf32> to vector<16x1xf32>
    %cst_7 = arith.constant 1.280000e+02 : f32
    %12 = vector.broadcast %cst_7 : f32 to vector<16x1xf32>
    %13 = arith.divf %11, %12 : vector<16x1xf32>
    %cst_8 = arith.constant 9.99999996E-13 : f32
    %14 = vector.broadcast %cst_8 : f32 to vector<16x1xf32>
    %15 = arith.addf %13, %14 : vector<16x1xf32>
    %16 = math.rsqrt %15 : vector<16x1xf32>
    %17 = vector.broadcast %16 : vector<16x1xf32> to vector<16x128xf32>
    %18 = arith.mulf %8, %17 : vector<16x128xf32>
    %19 = vector.broadcast %1 : vector<1x128xf32> to vector<16x128xf32>
    %20 = arith.mulf %18, %19 : vector<16x128xf32>
    %21 = vector.broadcast %2 : vector<1x128xf32> to vector<16x128xf32>
    %22 = arith.addf %20, %21 : vector<16x128xf32>
    %c0_9 = arith.constant 0 : index
    %c0_10 = arith.constant 0 : index
    %c0_11 = arith.constant 0 : index
    %23 = vector.load %arg5[%c0_9, %c0_10, %c0_11] : memref<2x128x384xbf16, #tpu.memory_space<vmem>>, vector<1x128x384xbf16>
    %24 = vector.shape_cast %23 : vector<1x128x384xbf16> to vector<128x384xbf16>
    %25 = arith.truncf %22 : vector<16x128xf32> to vector<16x128xbf16>
    %cst_12 = arith.constant dense<0.000000e+00> : vector<16x384xf32>
    %26 = tpu.matmul %25, %24, %cst_12 {dimension_numbers = #tpu.dot_dimension_numbers<[1], [0], [0], [1], [0, 0, 1, 1], [], []>} : vector<16x128xbf16>, vector<128x384xbf16>, vector<16x384xf32> -> vector<16x384xf32>
    %c0_13 = arith.constant 0 : index
    %c0_14 = arith.constant 0 : index
    %c0_15 = arith.constant 0 : index
    %27 = vector.load %arg6[%c0_13, %c0_14, %c0_15] : memref<2x1x384xf32, #tpu.memory_space<vmem>>, vector<1x1x384xf32>
    %28 = vector.shape_cast %27 : vector<1x1x384xf32> to vector<1x384xf32>
    %29 = vector.broadcast %28 : vector<1x384xf32> to vector<16x384xf32>
    %30 = arith.addf %26, %29 : vector<16x384xf32>
    %c0_16 = arith.constant 0 : index
    %c0_17 = arith.constant 0 : index
    %31 = vector.load %arg2[%c0_16, %c0_17] : memref<2x8xf32, #tpu.memory_space<vmem>>, vector<1x8xf32>
    %32 = vector.extract_strided_slice %30 {offsets = [0, 0], sizes = [8, 32], strides = [1, 1]} : vector<16x384xf32> to vector<8x32xf32>
    %33 = vector.extract_strided_slice %30 {offsets = [0, 128], sizes = [8, 32], strides = [1, 1]} : vector<16x384xf32> to vector<8x32xf32>
    %34 = vector.extract_strided_slice %30 {offsets = [0, 256], sizes = [8, 32], strides = [1, 1]} : vector<16x384xf32> to vector<8x32xf32>
    %35 = tpu.transpose %33, [1, 0] : vector<8x32xf32> -> vector<32x8xf32>
    %cst_18 = arith.constant dense<0.000000e+00> : vector<8x8xf32>
    %36 = tpu.matmul %32, %35, %cst_18 {dimension_numbers = #tpu.dot_dimension_numbers<[1], [0], [0], [1], [0, 0, 1, 1], [], []>} : vector<8x32xf32>, vector<32x8xf32>, vector<8x8xf32> -> vector<8x8xf32>
    %cst_19 = arith.constant 0.176776692 : f32
    %37 = vector.broadcast %cst_19 : f32 to vector<8x8xf32>
    %38 = arith.mulf %36, %37 : vector<8x8xf32>
    %39 = vector.broadcast %31 : vector<1x8xf32> to vector<8x8xf32>
    %40 = arith.addf %38, %39 : vector<8x8xf32>
    %cst_20 = arith.constant dense<0xFF800000> : vector<8xf32>
    %41 = vector.multi_reduction <maximumf>, %40, %cst_20 [1] : vector<8x8xf32> to vector<8xf32>
    %42 = vector.shape_cast %41 : vector<8xf32> to vector<8x1xf32>
    %43 = vector.broadcast %42 : vector<8x1xf32> to vector<8x8xf32>
    %44 = arith.subf %40, %43 : vector<8x8xf32>
    %45 = math.exp %44 : vector<8x8xf32>
    %cst_21 = arith.constant dense<0.000000e+00> : vector<8xf32>
    %46 = vector.multi_reduction <add>, %45, %cst_21 [1] : vector<8x8xf32> to vector<8xf32>
    %47 = vector.shape_cast %46 : vector<8xf32> to vector<8x1xf32>
    %48 = tpu.reciprocal %47 {approx = true} : vector<8x1xf32> -> vector<8x1xf32>
    %49 = vector.broadcast %48 : vector<8x1xf32> to vector<8x8xf32>
    %50 = arith.mulf %45, %49 : vector<8x8xf32>
    %cst_22 = arith.constant dense<0.000000e+00> : vector<8x32xf32>
    %51 = tpu.matmul %50, %34, %cst_22 {dimension_numbers = #tpu.dot_dimension_numbers<[1], [0], [0], [1], [0, 0, 1, 1], [], []>} : vector<8x8xf32>, vector<8x32xf32>, vector<8x32xf32> -> vector<8x32xf32>
    %c0_23 = arith.constant 0 : index
    %c0_24 = arith.constant 0 : index
    %52 = vector.load %arg20[%c0_23, %c0_24] : memref<16x128xf32, #tpu.memory_space<vmem>>, vector<8x32xf32>
    tpu.vector_store %arg20[%c0_23, %c0_24], %51 {strides = array<i32>} : memref<16x128xf32, #tpu.memory_space<vmem>>, vector<8x32xf32>,
    %53 = vector.extract_strided_slice %30 {offsets = [0, 32], sizes = [8, 32], strides = [1, 1]} : vector<16x384xf32> to vector<8x32xf32>
    %54 = vector.extract_strided_slice %30 {offsets = [0, 160], sizes = [8, 32], strides = [1, 1]} : vector<16x384xf32> to vector<8x32xf32>
    %55 = vector.extract_strided_slice %30 {offsets = [0, 288], sizes = [8, 32], strides = [1, 1]} : vector<16x384xf32> to vector<8x32xf32>
    %56 = tpu.transpose %54, [1, 0] : vector<8x32xf32> -> vector<32x8xf32>
    %cst_25 = arith.constant dense<0.000000e+00> : vector<8x8xf32>
    %57 = tpu.matmul %53, %56, %cst_25 {dimension_numbers = #tpu.dot_dimension_numbers<[1], [0], [0], [1], [0, 0, 1, 1], [], []>} : vector<8x32xf32>, vector<32x8xf32>, vector<8x8xf32> -> vector<8x8xf32>
    %cst_26 = arith.constant 0.176776692 : f32
    %58 = vector.broadcast %cst_26 : f32 to vector<8x8xf32>
    %59 = arith.mulf %57, %58 : vector<8x8xf32>
    %60 = vector.broadcast %31 : vector<1x8xf32> to vector<8x8xf32>
    %61 = arith.addf %59, %60 : vector<8x8xf32>
    %cst_27 = arith.constant dense<0xFF800000> : vector<8xf32>
    %62 = vector.multi_reduction <maximumf>, %61, %cst_27 [1] : vector<8x8xf32> to vector<8xf32>
    %63 = vector.shape_cast %62 : vector<8xf32> to vector<8x1xf32>
    %64 = vector.broadcast %63 : vector<8x1xf32> to vector<8x8xf32>
    %65 = arith.subf %61, %64 : vector<8x8xf32>
    %66 = math.exp %65 : vector<8x8xf32>
    %cst_28 = arith.constant dense<0.000000e+00> : vector<8xf32>
    %67 = vector.multi_reduction <add>, %66, %cst_28 [1] : vector<8x8xf32> to vector<8xf32>
    %68 = vector.shape_cast %67 : vector<8xf32> to vector<8x1xf32>
    %69 = tpu.reciprocal %68 {approx = true} : vector<8x1xf32> -> vector<8x1xf32>
    %70 = vector.broadcast %69 : vector<8x1xf32> to vector<8x8xf32>
    %71 = arith.mulf %66, %70 : vector<8x8xf32>
    %cst_29 = arith.constant dense<0.000000e+00> : vector<8x32xf32>
    %72 = tpu.matmul %71, %55, %cst_29 {dimension_numbers = #tpu.dot_dimension_numbers<[1], [0], [0], [1], [0, 0, 1, 1], [], []>} : vector<8x8xf32>, vector<8x32xf32>, vector<8x32xf32> -> vector<8x32xf32>
    %c0_30 = arith.constant 0 : index
    %c32 = arith.constant 32 : index
    %73 = vector.load %arg20[%c0_30, %c32] : memref<16x128xf32, #tpu.memory_space<vmem>>, vector<8x32xf32>
    tpu.vector_store %arg20[%c0_30, %c32], %72 {strides = array<i32>} : memref<16x128xf32, #tpu.memory_space<vmem>>, vector<8x32xf32>,
    %74 = vector.extract_strided_slice %30 {offsets = [0, 64], sizes = [8, 32], strides = [1, 1]} : vector<16x384xf32> to vector<8x32xf32>
    %75 = vector.extract_strided_slice %30 {offsets = [0, 192], sizes = [8, 32], strides = [1, 1]} : vector<16x384xf32> to vector<8x32xf32>
    %76 = vector.extract_strided_slice %30 {offsets = [0, 320], sizes = [8, 32], strides = [1, 1]} : vector<16x384xf32> to vector<8x32xf32>
    %77 = tpu.transpose %75, [1, 0] : vector<8x32xf32> -> vector<32x8xf32>
    %cst_31 = arith.constant dense<0.000000e+00> : vector<8x8xf32>
    %78 = tpu.matmul %74, %77, %cst_31 {dimension_numbers = #tpu.dot_dimension_numbers<[1], [0], [0], [1], [0, 0, 1, 1], [], []>} : vector<8x32xf32>, vector<32x8xf32>, vector<8x8xf32> -> vector<8x8xf32>
    %cst_32 = arith.constant 0.176776692 : f32
    %79 = vector.broadcast %cst_32 : f32 to vector<8x8xf32>
    %80 = arith.mulf %78, %79 : vector<8x8xf32>
    %81 = vector.broadcast %31 : vector<1x8xf32> to vector<8x8xf32>
    %82 = arith.addf %80, %81 : vector<8x8xf32>
    %cst_33 = arith.constant dense<0xFF800000> : vector<8xf32>
    %83 = vector.multi_reduction <maximumf>, %82, %cst_33 [1] : vector<8x8xf32> to vector<8xf32>
    %84 = vector.shape_cast %83 : vector<8xf32> to vector<8x1xf32>
    %85 = vector.broadcast %84 : vector<8x1xf32> to vector<8x8xf32>
    %86 = arith.subf %82, %85 : vector<8x8xf32>
    %87 = math.exp %86 : vector<8x8xf32>
    %cst_34 = arith.constant dense<0.000000e+00> : vector<8xf32>
    %88 = vector.multi_reduction <add>, %87, %cst_34 [1] : vector<8x8xf32> to vector<8xf32>
    %89 = vector.shape_cast %88 : vector<8xf32> to vector<8x1xf32>
    %90 = tpu.reciprocal %89 {approx = true} : vector<8x1xf32> -> vector<8x1xf32>
    %91 = vector.broadcast %90 : vector<8x1xf32> to vector<8x8xf32>
    %92 = arith.mulf %87, %91 : vector<8x8xf32>
    %cst_35 = arith.constant dense<0.000000e+00> : vector<8x32xf32>
    %93 = tpu.matmul %92, %76, %cst_35 {dimension_numbers = #tpu.dot_dimension_numbers<[1], [0], [0], [1], [0, 0, 1, 1], [], []>} : vector<8x8xf32>, vector<8x32xf32>, vector<8x32xf32> -> vector<8x32xf32>
    %c0_36 = arith.constant 0 : index
    %c64 = arith.constant 64 : index
    %94 = vector.load %arg20[%c0_36, %c64] : memref<16x128xf32, #tpu.memory_space<vmem>>, vector<8x32xf32>
    tpu.vector_store %arg20[%c0_36, %c64], %93 {strides = array<i32>} : memref<16x128xf32, #tpu.memory_space<vmem>>, vector<8x32xf32>,
    %95 = vector.extract_strided_slice %30 {offsets = [0, 96], sizes = [8, 32], strides = [1, 1]} : vector<16x384xf32> to vector<8x32xf32>
    %96 = vector.extract_strided_slice %30 {offsets = [0, 224], sizes = [8, 32], strides = [1, 1]} : vector<16x384xf32> to vector<8x32xf32>
    %97 = vector.extract_strided_slice %30 {offsets = [0, 352], sizes = [8, 32], strides = [1, 1]} : vector<16x384xf32> to vector<8x32xf32>
    %98 = tpu.transpose %96, [1, 0] : vector<8x32xf32> -> vector<32x8xf32>
    %cst_37 = arith.constant dense<0.000000e+00> : vector<8x8xf32>
    %99 = tpu.matmul %95, %98, %cst_37 {dimension_numbers = #tpu.dot_dimension_numbers<[1], [0], [0], [1], [0, 0, 1, 1], [], []>} : vector<8x32xf32>, vector<32x8xf32>, vector<8x8xf32> -> vector<8x8xf32>
    %cst_38 = arith.constant 0.176776692 : f32
    %100 = vector.broadcast %cst_38 : f32 to vector<8x8xf32>
    %101 = arith.mulf %99, %100 : vector<8x8xf32>
    %102 = vector.broadcast %31 : vector<1x8xf32> to vector<8x8xf32>
    %103 = arith.addf %101, %102 : vector<8x8xf32>
    %cst_39 = arith.constant dense<0xFF800000> : vector<8xf32>
    %104 = vector.multi_reduction <maximumf>, %103, %cst_39 [1] : vector<8x8xf32> to vector<8xf32>
    %105 = vector.shape_cast %104 : vector<8xf32> to vector<8x1xf32>
    %106 = vector.broadcast %105 : vector<8x1xf32> to vector<8x8xf32>
    %107 = arith.subf %103, %106 : vector<8x8xf32>
    %108 = math.exp %107 : vector<8x8xf32>
    %cst_40 = arith.constant dense<0.000000e+00> : vector<8xf32>
    %109 = vector.multi_reduction <add>, %108, %cst_40 [1] : vector<8x8xf32> to vector<8xf32>
    %110 = vector.shape_cast %109 : vector<8xf32> to vector<8x1xf32>
    %111 = tpu.reciprocal %110 {approx = true} : vector<8x1xf32> -> vector<8x1xf32>
    %112 = vector.broadcast %111 : vector<8x1xf32> to vector<8x8xf32>
    %113 = arith.mulf %108, %112 : vector<8x8xf32>
    %cst_41 = arith.constant dense<0.000000e+00> : vector<8x32xf32>
    %114 = tpu.matmul %113, %97, %cst_41 {dimension_numbers = #tpu.dot_dimension_numbers<[1], [0], [0], [1], [0, 0, 1, 1], [], []>} : vector<8x8xf32>, vector<8x32xf32>, vector<8x32xf32> -> vector<8x32xf32>
    %c0_42 = arith.constant 0 : index
    %c96 = arith.constant 96 : index
    %115 = vector.load %arg20[%c0_42, %c96] : memref<16x128xf32, #tpu.memory_space<vmem>>, vector<8x32xf32>
    tpu.vector_store %arg20[%c0_42, %c96], %114 {strides = array<i32>} : memref<16x128xf32, #tpu.memory_space<vmem>>, vector<8x32xf32>,
    %c1 = arith.constant 1 : index
    %c0_43 = arith.constant 0 : index
    %116 = vector.load %arg2[%c1, %c0_43] : memref<2x8xf32, #tpu.memory_space<vmem>>, vector<1x8xf32>
    %117 = vector.extract_strided_slice %30 {offsets = [8, 0], sizes = [8, 32], strides = [1, 1]} : vector<16x384xf32> to vector<8x32xf32>
    %118 = vector.extract_strided_slice %30 {offsets = [8, 128], sizes = [8, 32], strides = [1, 1]} : vector<16x384xf32> to vector<8x32xf32>
    %119 = vector.extract_strided_slice %30 {offsets = [8, 256], sizes = [8, 32], strides = [1, 1]} : vector<16x384xf32> to vector<8x32xf32>
    %120 = tpu.transpose %118, [1, 0] : vector<8x32xf32> -> vector<32x8xf32>
    %cst_44 = arith.constant dense<0.000000e+00> : vector<8x8xf32>
    %121 = tpu.matmul %117, %120, %cst_44 {dimension_numbers = #tpu.dot_dimension_numbers<[1], [0], [0], [1], [0, 0, 1, 1], [], []>} : vector<8x32xf32>, vector<32x8xf32>, vector<8x8xf32> -> vector<8x8xf32>
    %cst_45 = arith.constant 0.176776692 : f32
    %122 = vector.broadcast %cst_45 : f32 to vector<8x8xf32>
    %123 = arith.mulf %121, %122 : vector<8x8xf32>
    %124 = vector.broadcast %116 : vector<1x8xf32> to vector<8x8xf32>
    %125 = arith.addf %123, %124 : vector<8x8xf32>
    %cst_46 = arith.constant dense<0xFF800000> : vector<8xf32>
    %126 = vector.multi_reduction <maximumf>, %125, %cst_46 [1] : vector<8x8xf32> to vector<8xf32>
    %127 = vector.shape_cast %126 : vector<8xf32> to vector<8x1xf32>
    %128 = vector.broadcast %127 : vector<8x1xf32> to vector<8x8xf32>
    %129 = arith.subf %125, %128 : vector<8x8xf32>
    %130 = math.exp %129 : vector<8x8xf32>
    %cst_47 = arith.constant dense<0.000000e+00> : vector<8xf32>
    %131 = vector.multi_reduction <add>, %130, %cst_47 [1] : vector<8x8xf32> to vector<8xf32>
    %132 = vector.shape_cast %131 : vector<8xf32> to vector<8x1xf32>
    %133 = tpu.reciprocal %132 {approx = true} : vector<8x1xf32> -> vector<8x1xf32>
    %134 = vector.broadcast %133 : vector<8x1xf32> to vector<8x8xf32>
    %135 = arith.mulf %130, %134 : vector<8x8xf32>
    %cst_48 = arith.constant dense<0.000000e+00> : vector<8x32xf32>
    %136 = tpu.matmul %135, %119, %cst_48 {dimension_numbers = #tpu.dot_dimension_numbers<[1], [0], [0], [1], [0, 0, 1, 1], [], []>} : vector<8x8xf32>, vector<8x32xf32>, vector<8x32xf32> -> vector<8x32xf32>
    %c8 = arith.constant 8 : index
    %c0_49 = arith.constant 0 : index
    %137 = vector.load %arg20[%c8, %c0_49] : memref<16x128xf32, #tpu.memory_space<vmem>>, vector<8x32xf32>
    tpu.vector_store %arg20[%c8, %c0_49], %136 {strides = array<i32>} : memref<16x128xf32, #tpu.memory_space<vmem>>, vector<8x32xf32>,
    %138 = vector.extract_strided_slice %30 {offsets = [8, 32], sizes = [8, 32], strides = [1, 1]} : vector<16x384xf32> to vector<8x32xf32>
    %139 = vector.extract_strided_slice %30 {offsets = [8, 160], sizes = [8, 32], strides = [1, 1]} : vector<16x384xf32> to vector<8x32xf32>
    %140 = vector.extract_strided_slice %30 {offsets = [8, 288], sizes = [8, 32], strides = [1, 1]} : vector<16x384xf32> to vector<8x32xf32>
    %141 = tpu.transpose %139, [1, 0] : vector<8x32xf32> -> vector<32x8xf32>
    %cst_50 = arith.constant dense<0.000000e+00> : vector<8x8xf32>
    %142 = tpu.matmul %138, %141, %cst_50 {dimension_numbers = #tpu.dot_dimension_numbers<[1], [0], [0], [1], [0, 0, 1, 1], [], []>} : vector<8x32xf32>, vector<32x8xf32>, vector<8x8xf32> -> vector<8x8xf32>
    %cst_51 = arith.constant 0.176776692 : f32
    %143 = vector.broadcast %cst_51 : f32 to vector<8x8xf32>
    %144 = arith.mulf %142, %143 : vector<8x8xf32>
    %145 = vector.broadcast %116 : vector<1x8xf32> to vector<8x8xf32>
    %146 = arith.addf %144, %145 : vector<8x8xf32>
    %cst_52 = arith.constant dense<0xFF800000> : vector<8xf32>
    %147 = vector.multi_reduction <maximumf>, %146, %cst_52 [1] : vector<8x8xf32> to vector<8xf32>
    %148 = vector.shape_cast %147 : vector<8xf32> to vector<8x1xf32>
    %149 = vector.broadcast %148 : vector<8x1xf32> to vector<8x8xf32>
    %150 = arith.subf %146, %149 : vector<8x8xf32>
    %151 = math.exp %150 : vector<8x8xf32>
    %cst_53 = arith.constant dense<0.000000e+00> : vector<8xf32>
    %152 = vector.multi_reduction <add>, %151, %cst_53 [1] : vector<8x8xf32> to vector<8xf32>
    %153 = vector.shape_cast %152 : vector<8xf32> to vector<8x1xf32>
    %154 = tpu.reciprocal %153 {approx = true} : vector<8x1xf32> -> vector<8x1xf32>
    %155 = vector.broadcast %154 : vector<8x1xf32> to vector<8x8xf32>
    %156 = arith.mulf %151, %155 : vector<8x8xf32>
    %cst_54 = arith.constant dense<0.000000e+00> : vector<8x32xf32>
    %157 = tpu.matmul %156, %140, %cst_54 {dimension_numbers = #tpu.dot_dimension_numbers<[1], [0], [0], [1], [0, 0, 1, 1], [], []>} : vector<8x8xf32>, vector<8x32xf32>, vector<8x32xf32> -> vector<8x32xf32>
    %c8_55 = arith.constant 8 : index
    %c32_56 = arith.constant 32 : index
    %158 = vector.load %arg20[%c8_55, %c32_56] : memref<16x128xf32, #tpu.memory_space<vmem>>, vector<8x32xf32>
    tpu.vector_store %arg20[%c8_55, %c32_56], %157 {strides = array<i32>} : memref<16x128xf32, #tpu.memory_space<vmem>>, vector<8x32xf32>,
    %159 = vector.extract_strided_slice %30 {offsets = [8, 64], sizes = [8, 32], strides = [1, 1]} : vector<16x384xf32> to vector<8x32xf32>
    %160 = vector.extract_strided_slice %30 {offsets = [8, 192], sizes = [8, 32], strides = [1, 1]} : vector<16x384xf32> to vector<8x32xf32>
    %161 = vector.extract_strided_slice %30 {offsets = [8, 320], sizes = [8, 32], strides = [1, 1]} : vector<16x384xf32> to vector<8x32xf32>
    %162 = tpu.transpose %160, [1, 0] : vector<8x32xf32> -> vector<32x8xf32>
    %cst_57 = arith.constant dense<0.000000e+00> : vector<8x8xf32>
    %163 = tpu.matmul %159, %162, %cst_57 {dimension_numbers = #tpu.dot_dimension_numbers<[1], [0], [0], [1], [0, 0, 1, 1], [], []>} : vector<8x32xf32>, vector<32x8xf32>, vector<8x8xf32> -> vector<8x8xf32>
    %cst_58 = arith.constant 0.176776692 : f32
    %164 = vector.broadcast %cst_58 : f32 to vector<8x8xf32>
    %165 = arith.mulf %163, %164 : vector<8x8xf32>
    %166 = vector.broadcast %116 : vector<1x8xf32> to vector<8x8xf32>
    %167 = arith.addf %165, %166 : vector<8x8xf32>
    %cst_59 = arith.constant dense<0xFF800000> : vector<8xf32>
    %168 = vector.multi_reduction <maximumf>, %167, %cst_59 [1] : vector<8x8xf32> to vector<8xf32>
    %169 = vector.shape_cast %168 : vector<8xf32> to vector<8x1xf32>
    %170 = vector.broadcast %169 : vector<8x1xf32> to vector<8x8xf32>
    %171 = arith.subf %167, %170 : vector<8x8xf32>
    %172 = math.exp %171 : vector<8x8xf32>
    %cst_60 = arith.constant dense<0.000000e+00> : vector<8xf32>
    %173 = vector.multi_reduction <add>, %172, %cst_60 [1] : vector<8x8xf32> to vector<8xf32>
    %174 = vector.shape_cast %173 : vector<8xf32> to vector<8x1xf32>
    %175 = tpu.reciprocal %174 {approx = true} : vector<8x1xf32> -> vector<8x1xf32>
    %176 = vector.broadcast %175 : vector<8x1xf32> to vector<8x8xf32>
    %177 = arith.mulf %172, %176 : vector<8x8xf32>
    %cst_61 = arith.constant dense<0.000000e+00> : vector<8x32xf32>
    %178 = tpu.matmul %177, %161, %cst_61 {dimension_numbers = #tpu.dot_dimension_numbers<[1], [0], [0], [1], [0, 0, 1, 1], [], []>} : vector<8x8xf32>, vector<8x32xf32>, vector<8x32xf32> -> vector<8x32xf32>
    %c8_62 = arith.constant 8 : index
    %c64_63 = arith.constant 64 : index
    %179 = vector.load %arg20[%c8_62, %c64_63] : memref<16x128xf32, #tpu.memory_space<vmem>>, vector<8x32xf32>
    tpu.vector_store %arg20[%c8_62, %c64_63], %178 {strides = array<i32>} : memref<16x128xf32, #tpu.memory_space<vmem>>, vector<8x32xf32>,
    %180 = vector.extract_strided_slice %30 {offsets = [8, 96], sizes = [8, 32], strides = [1, 1]} : vector<16x384xf32> to vector<8x32xf32>
    %181 = vector.extract_strided_slice %30 {offsets = [8, 224], sizes = [8, 32], strides = [1, 1]} : vector<16x384xf32> to vector<8x32xf32>
    %182 = vector.extract_strided_slice %30 {offsets = [8, 352], sizes = [8, 32], strides = [1, 1]} : vector<16x384xf32> to vector<8x32xf32>
    %183 = tpu.transpose %181, [1, 0] : vector<8x32xf32> -> vector<32x8xf32>
    %cst_64 = arith.constant dense<0.000000e+00> : vector<8x8xf32>
    %184 = tpu.matmul %180, %183, %cst_64 {dimension_numbers = #tpu.dot_dimension_numbers<[1], [0], [0], [1], [0, 0, 1, 1], [], []>} : vector<8x32xf32>, vector<32x8xf32>, vector<8x8xf32> -> vector<8x8xf32>
    %cst_65 = arith.constant 0.176776692 : f32
    %185 = vector.broadcast %cst_65 : f32 to vector<8x8xf32>
    %186 = arith.mulf %184, %185 : vector<8x8xf32>
    %187 = vector.broadcast %116 : vector<1x8xf32> to vector<8x8xf32>
    %188 = arith.addf %186, %187 : vector<8x8xf32>
    %cst_66 = arith.constant dense<0xFF800000> : vector<8xf32>
    %189 = vector.multi_reduction <maximumf>, %188, %cst_66 [1] : vector<8x8xf32> to vector<8xf32>
    %190 = vector.shape_cast %189 : vector<8xf32> to vector<8x1xf32>
    %191 = vector.broadcast %190 : vector<8x1xf32> to vector<8x8xf32>
    %192 = arith.subf %188, %191 : vector<8x8xf32>
    %193 = math.exp %192 : vector<8x8xf32>
    %cst_67 = arith.constant dense<0.000000e+00> : vector<8xf32>
    %194 = vector.multi_reduction <add>, %193, %cst_67 [1] : vector<8x8xf32> to vector<8xf32>
    %195 = vector.shape_cast %194 : vector<8xf32> to vector<8x1xf32>
    %196 = tpu.reciprocal %195 {approx = true} : vector<8x1xf32> -> vector<8x1xf32>
    %197 = vector.broadcast %196 : vector<8x1xf32> to vector<8x8xf32>
    %198 = arith.mulf %193, %197 : vector<8x8xf32>
    %cst_68 = arith.constant dense<0.000000e+00> : vector<8x32xf32>
    %199 = tpu.matmul %198, %182, %cst_68 {dimension_numbers = #tpu.dot_dimension_numbers<[1], [0], [0], [1], [0, 0, 1, 1], [], []>} : vector<8x8xf32>, vector<8x32xf32>, vector<8x32xf32> -> vector<8x32xf32>
    %c8_69 = arith.constant 8 : index
    %c96_70 = arith.constant 96 : index
    %200 = vector.load %arg20[%c8_69, %c96_70] : memref<16x128xf32, #tpu.memory_space<vmem>>, vector<8x32xf32>
    tpu.vector_store %arg20[%c8_69, %c96_70], %199 {strides = array<i32>} : memref<16x128xf32, #tpu.memory_space<vmem>>, vector<8x32xf32>,
    %c0_71 = arith.constant 0 : index
    %c0_72 = arith.constant 0 : index
    %201 = vector.load %arg20[%c0_71, %c0_72] : memref<16x128xf32, #tpu.memory_space<vmem>>, vector<16x128xf32>
    %c0_73 = arith.constant 0 : index
    %c0_74 = arith.constant 0 : index
    %c0_75 = arith.constant 0 : index
    %202 = vector.load %arg7[%c0_73, %c0_74, %c0_75] : memref<2x128x128xbf16, #tpu.memory_space<vmem>>, vector<1x128x128xbf16>
    %203 = vector.shape_cast %202 : vector<1x128x128xbf16> to vector<128x128xbf16>
    %204 = arith.truncf %201 : vector<16x128xf32> to vector<16x128xbf16>
    %cst_76 = arith.constant dense<0.000000e+00> : vector<16x128xf32>
    %205 = tpu.matmul %204, %203, %cst_76 {dimension_numbers = #tpu.dot_dimension_numbers<[1], [0], [0], [1], [0, 0, 1, 1], [], []>} : vector<16x128xbf16>, vector<128x128xbf16>, vector<16x128xf32> -> vector<16x128xf32>
    %c0_77 = arith.constant 0 : index
    %c0_78 = arith.constant 0 : index
    %c0_79 = arith.constant 0 : index
    %206 = vector.load %arg8[%c0_77, %c0_78, %c0_79] : memref<2x1x128xf32, #tpu.memory_space<vmem>>, vector<1x1x128xf32>
    %207 = vector.shape_cast %206 : vector<1x1x128xf32> to vector<1x128xf32>
    %208 = vector.broadcast %207 : vector<1x128xf32> to vector<16x128xf32>
    %209 = arith.addf %205, %208 : vector<16x128xf32>
    %210 = arith.addf %209, %22 : vector<16x128xf32>
    %c0_80 = arith.constant 0 : index
    %c0_81 = arith.constant 0 : index
    %c0_82 = arith.constant 0 : index
    %211 = vector.load %arg9[%c0_80, %c0_81, %c0_82] : memref<2x1x128xf32, #tpu.memory_space<vmem>>, vector<1x1x128xf32>
    %212 = vector.shape_cast %211 : vector<1x1x128xf32> to vector<1x128xf32>
    %c0_83 = arith.constant 0 : index
    %c0_84 = arith.constant 0 : index
    %c0_85 = arith.constant 0 : index
    %213 = vector.load %arg10[%c0_83, %c0_84, %c0_85] : memref<2x1x128xf32, #tpu.memory_space<vmem>>, vector<1x1x128xf32>
    %214 = vector.shape_cast %213 : vector<1x1x128xf32> to vector<1x128xf32>
    %cst_86 = arith.constant dense<0.000000e+00> : vector<16xf32>
    %215 = vector.multi_reduction <add>, %210, %cst_86 [1] : vector<16x128xf32> to vector<16xf32>
    %216 = vector.shape_cast %215 : vector<16xf32> to vector<16x1xf32>
    %cst_87 = arith.constant 1.280000e+02 : f32
    %217 = vector.broadcast %cst_87 : f32 to vector<16x1xf32>
    %218 = arith.divf %216, %217 : vector<16x1xf32>
    %219 = vector.broadcast %218 : vector<16x1xf32> to vector<16x128xf32>
    %220 = arith.subf %210, %219 : vector<16x128xf32>
    %221 = arith.mulf %220, %220 : vector<16x128xf32>
    %cst_88 = arith.constant dense<0.000000e+00> : vector<16xf32>
    %222 = vector.multi_reduction <add>, %221, %cst_88 [1] : vector<16x128xf32> to vector<16xf32>
    %223 = vector.shape_cast %222 : vector<16xf32> to vector<16x1xf32>
    %cst_89 = arith.constant 1.280000e+02 : f32
    %224 = vector.broadcast %cst_89 : f32 to vector<16x1xf32>
    %225 = arith.divf %223, %224 : vector<16x1xf32>
    %cst_90 = arith.constant 9.99999996E-13 : f32
    %226 = vector.broadcast %cst_90 : f32 to vector<16x1xf32>
    %227 = arith.addf %225, %226 : vector<16x1xf32>
    %228 = math.rsqrt %227 : vector<16x1xf32>
    %229 = vector.broadcast %228 : vector<16x1xf32> to vector<16x128xf32>
    %230 = arith.mulf %220, %229 : vector<16x128xf32>
    %231 = vector.broadcast %212 : vector<1x128xf32> to vector<16x128xf32>
    %232 = arith.mulf %230, %231 : vector<16x128xf32>
    %233 = vector.broadcast %214 : vector<1x128xf32> to vector<16x128xf32>
    %234 = arith.addf %232, %233 : vector<16x128xf32>
    %c0_91 = arith.constant 0 : index
    %c0_92 = arith.constant 0 : index
    %c0_93 = arith.constant 0 : index
    %235 = vector.load %arg11[%c0_91, %c0_92, %c0_93] : memref<2x128x256xbf16, #tpu.memory_space<vmem>>, vector<1x128x256xbf16>
    %236 = vector.shape_cast %235 : vector<1x128x256xbf16> to vector<128x256xbf16>
    %237 = arith.truncf %234 : vector<16x128xf32> to vector<16x128xbf16>
    %cst_94 = arith.constant dense<0.000000e+00> : vector<16x256xf32>
    %238 = tpu.matmul %237, %236, %cst_94 {dimension_numbers = #tpu.dot_dimension_numbers<[1], [0], [0], [1], [0, 0, 1, 1], [], []>} : vector<16x128xbf16>, vector<128x256xbf16>, vector<16x256xf32> -> vector<16x256xf32>
    %c0_95 = arith.constant 0 : index
    %c0_96 = arith.constant 0 : index
    %c0_97 = arith.constant 0 : index
    %239 = vector.load %arg12[%c0_95, %c0_96, %c0_97] : memref<2x1x256xf32, #tpu.memory_space<vmem>>, vector<1x1x256xf32>
    %240 = vector.shape_cast %239 : vector<1x1x256xf32> to vector<1x256xf32>
    %241 = vector.broadcast %240 : vector<1x256xf32> to vector<16x256xf32>
    %242 = arith.addf %238, %241 : vector<16x256xf32>
    %cst_98 = arith.constant 5.000000e-01 : f32
    %243 = vector.broadcast %cst_98 : f32 to vector<16x256xf32>
    %244 = arith.mulf %243, %242 : vector<16x256xf32>
    %cst_99 = arith.constant 4.471500e-02 : f32
    %245 = vector.broadcast %cst_99 : f32 to vector<16x256xf32>
    %246 = arith.mulf %245, %242 : vector<16x256xf32>
    %247 = arith.mulf %246, %242 : vector<16x256xf32>
    %248 = arith.mulf %247, %242 : vector<16x256xf32>
    %249 = arith.addf %242, %248 : vector<16x256xf32>
    %cst_100 = arith.constant 0.797884583 : f32
    %250 = vector.broadcast %cst_100 : f32 to vector<16x256xf32>
    %251 = arith.mulf %250, %249 : vector<16x256xf32>
    %252 = math.tanh %251 : vector<16x256xf32>
    %cst_101 = arith.constant 1.000000e+00 : f32
    %253 = vector.broadcast %cst_101 : f32 to vector<16x256xf32>
    %254 = arith.addf %253, %252 : vector<16x256xf32>
    %255 = arith.mulf %244, %254 : vector<16x256xf32>
    %c0_102 = arith.constant 0 : index
    %c0_103 = arith.constant 0 : index
    %c0_104 = arith.constant 0 : index
    %256 = vector.load %arg13[%c0_102, %c0_103, %c0_104] : memref<2x256x128xbf16, #tpu.memory_space<vmem>>, vector<1x256x128xbf16>
    %257 = vector.shape_cast %256 : vector<1x256x128xbf16> to vector<256x128xbf16>
    %258 = arith.truncf %255 : vector<16x256xf32> to vector<16x256xbf16>
    %cst_105 = arith.constant dense<0.000000e+00> : vector<16x128xf32>
    %259 = tpu.matmul %258, %257, %cst_105 {dimension_numbers = #tpu.dot_dimension_numbers<[1], [0], [0], [1], [0, 0, 1, 1], [], []>} : vector<16x256xbf16>, vector<256x128xbf16>, vector<16x128xf32> -> vector<16x128xf32>
    %c0_106 = arith.constant 0 : index
    %c0_107 = arith.constant 0 : index
    %c0_108 = arith.constant 0 : index
    %260 = vector.load %arg14[%c0_106, %c0_107, %c0_108] : memref<2x1x128xf32, #tpu.memory_space<vmem>>, vector<1x1x128xf32>
    %261 = vector.shape_cast %260 : vector<1x1x128xf32> to vector<1x128xf32>
    %262 = vector.broadcast %261 : vector<1x128xf32> to vector<16x128xf32>
    %263 = arith.addf %259, %262 : vector<16x128xf32>
    %264 = arith.addf %263, %234 : vector<16x128xf32>
    %c0_109 = arith.constant 0 : index
    %c0_110 = arith.constant 0 : index
    %c0_111 = arith.constant 0 : index
    %265 = vector.load %arg15[%c0_109, %c0_110, %c0_111] : memref<2x1x128xf32, #tpu.memory_space<vmem>>, vector<1x1x128xf32>
    %266 = vector.shape_cast %265 : vector<1x1x128xf32> to vector<1x128xf32>
    %c0_112 = arith.constant 0 : index
    %c0_113 = arith.constant 0 : index
    %c0_114 = arith.constant 0 : index
    %267 = vector.load %arg16[%c0_112, %c0_113, %c0_114] : memref<2x1x128xf32, #tpu.memory_space<vmem>>, vector<1x1x128xf32>
    %268 = vector.shape_cast %267 : vector<1x1x128xf32> to vector<1x128xf32>
    %cst_115 = arith.constant dense<0.000000e+00> : vector<16xf32>
    %269 = vector.multi_reduction <add>, %264, %cst_115 [1] : vector<16x128xf32> to vector<16xf32>
    %270 = vector.shape_cast %269 : vector<16xf32> to vector<16x1xf32>
    %cst_116 = arith.constant 1.280000e+02 : f32
    %271 = vector.broadcast %cst_116 : f32 to vector<16x1xf32>
    %272 = arith.divf %270, %271 : vector<16x1xf32>
    %273 = vector.broadcast %272 : vector<16x1xf32> to vector<16x128xf32>
    %274 = arith.subf %264, %273 : vector<16x128xf32>
    %275 = arith.mulf %274, %274 : vector<16x128xf32>
    %cst_117 = arith.constant dense<0.000000e+00> : vector<16xf32>
    %276 = vector.multi_reduction <add>, %275, %cst_117 [1] : vector<16x128xf32> to vector<16xf32>
    %277 = vector.shape_cast %276 : vector<16xf32> to vector<16x1xf32>
    %cst_118 = arith.constant 1.280000e+02 : f32
    %278 = vector.broadcast %cst_118 : f32 to vector<16x1xf32>
    %279 = arith.divf %277, %278 : vector<16x1xf32>
    %cst_119 = arith.constant 9.99999996E-13 : f32
    %280 = vector.broadcast %cst_119 : f32 to vector<16x1xf32>
    %281 = arith.addf %279, %280 : vector<16x1xf32>
    %282 = math.rsqrt %281 : vector<16x1xf32>
    %283 = vector.broadcast %282 : vector<16x1xf32> to vector<16x128xf32>
    %284 = arith.mulf %274, %283 : vector<16x128xf32>
    %285 = vector.broadcast %266 : vector<1x128xf32> to vector<16x128xf32>
    %286 = arith.mulf %284, %285 : vector<16x128xf32>
    %287 = vector.broadcast %268 : vector<1x128xf32> to vector<16x128xf32>
    %288 = arith.addf %286, %287 : vector<16x128xf32>
    %c1_120 = arith.constant 1 : index
    %c0_121 = arith.constant 0 : index
    %c0_122 = arith.constant 0 : index
    %289 = vector.load %arg5[%c1_120, %c0_121, %c0_122] : memref<2x128x384xbf16, #tpu.memory_space<vmem>>, vector<1x128x384xbf16>
    %290 = vector.shape_cast %289 : vector<1x128x384xbf16> to vector<128x384xbf16>
    %291 = arith.truncf %288 : vector<16x128xf32> to vector<16x128xbf16>
    %cst_123 = arith.constant dense<0.000000e+00> : vector<16x384xf32>
    %292 = tpu.matmul %291, %290, %cst_123 {dimension_numbers = #tpu.dot_dimension_numbers<[1], [0], [0], [1], [0, 0, 1, 1], [], []>} : vector<16x128xbf16>, vector<128x384xbf16>, vector<16x384xf32> -> vector<16x384xf32>
    %c1_124 = arith.constant 1 : index
    %c0_125 = arith.constant 0 : index
    %c0_126 = arith.constant 0 : index
    %293 = vector.load %arg6[%c1_124, %c0_125, %c0_126] : memref<2x1x384xf32, #tpu.memory_space<vmem>>, vector<1x1x384xf32>
    %294 = vector.shape_cast %293 : vector<1x1x384xf32> to vector<1x384xf32>
    %295 = vector.broadcast %294 : vector<1x384xf32> to vector<16x384xf32>
    %296 = arith.addf %292, %295 : vector<16x384xf32>
    %c0_127 = arith.constant 0 : index
    %c0_128 = arith.constant 0 : index
    %297 = vector.load %arg2[%c0_127, %c0_128] : memref<2x8xf32, #tpu.memory_space<vmem>>, vector<1x8xf32>
    %298 = vector.extract_strided_slice %296 {offsets = [0, 0], sizes = [8, 32], strides = [1, 1]} : vector<16x384xf32> to vector<8x32xf32>
    %299 = vector.extract_strided_slice %296 {offsets = [0, 128], sizes = [8, 32], strides = [1, 1]} : vector<16x384xf32> to vector<8x32xf32>
    %300 = vector.extract_strided_slice %296 {offsets = [0, 256], sizes = [8, 32], strides = [1, 1]} : vector<16x384xf32> to vector<8x32xf32>
    %301 = tpu.transpose %299, [1, 0] : vector<8x32xf32> -> vector<32x8xf32>
    %cst_129 = arith.constant dense<0.000000e+00> : vector<8x8xf32>
    %302 = tpu.matmul %298, %301, %cst_129 {dimension_numbers = #tpu.dot_dimension_numbers<[1], [0], [0], [1], [0, 0, 1, 1], [], []>} : vector<8x32xf32>, vector<32x8xf32>, vector<8x8xf32> -> vector<8x8xf32>
    %cst_130 = arith.constant 0.176776692 : f32
    %303 = vector.broadcast %cst_130 : f32 to vector<8x8xf32>
    %304 = arith.mulf %302, %303 : vector<8x8xf32>
    %305 = vector.broadcast %297 : vector<1x8xf32> to vector<8x8xf32>
    %306 = arith.addf %304, %305 : vector<8x8xf32>
    %cst_131 = arith.constant dense<0xFF800000> : vector<8xf32>
    %307 = vector.multi_reduction <maximumf>, %306, %cst_131 [1] : vector<8x8xf32> to vector<8xf32>
    %308 = vector.shape_cast %307 : vector<8xf32> to vector<8x1xf32>
    %309 = vector.broadcast %308 : vector<8x1xf32> to vector<8x8xf32>
    %310 = arith.subf %306, %309 : vector<8x8xf32>
    %311 = math.exp %310 : vector<8x8xf32>
    %cst_132 = arith.constant dense<0.000000e+00> : vector<8xf32>
    %312 = vector.multi_reduction <add>, %311, %cst_132 [1] : vector<8x8xf32> to vector<8xf32>
    %313 = vector.shape_cast %312 : vector<8xf32> to vector<8x1xf32>
    %314 = tpu.reciprocal %313 {approx = true} : vector<8x1xf32> -> vector<8x1xf32>
    %315 = vector.broadcast %314 : vector<8x1xf32> to vector<8x8xf32>
    %316 = arith.mulf %311, %315 : vector<8x8xf32>
    %cst_133 = arith.constant dense<0.000000e+00> : vector<8x32xf32>
    %317 = tpu.matmul %316, %300, %cst_133 {dimension_numbers = #tpu.dot_dimension_numbers<[1], [0], [0], [1], [0, 0, 1, 1], [], []>} : vector<8x8xf32>, vector<8x32xf32>, vector<8x32xf32> -> vector<8x32xf32>
    %c0_134 = arith.constant 0 : index
    %c0_135 = arith.constant 0 : index
    %318 = vector.load %arg20[%c0_134, %c0_135] : memref<16x128xf32, #tpu.memory_space<vmem>>, vector<8x32xf32>
    tpu.vector_store %arg20[%c0_134, %c0_135], %317 {strides = array<i32>} : memref<16x128xf32, #tpu.memory_space<vmem>>, vector<8x32xf32>,
    %319 = vector.extract_strided_slice %296 {offsets = [0, 32], sizes = [8, 32], strides = [1, 1]} : vector<16x384xf32> to vector<8x32xf32>
    %320 = vector.extract_strided_slice %296 {offsets = [0, 160], sizes = [8, 32], strides = [1, 1]} : vector<16x384xf32> to vector<8x32xf32>
    %321 = vector.extract_strided_slice %296 {offsets = [0, 288], sizes = [8, 32], strides = [1, 1]} : vector<16x384xf32> to vector<8x32xf32>
    %322 = tpu.transpose %320, [1, 0] : vector<8x32xf32> -> vector<32x8xf32>
    %cst_136 = arith.constant dense<0.000000e+00> : vector<8x8xf32>
    %323 = tpu.matmul %319, %322, %cst_136 {dimension_numbers = #tpu.dot_dimension_numbers<[1], [0], [0], [1], [0, 0, 1, 1], [], []>} : vector<8x32xf32>, vector<32x8xf32>, vector<8x8xf32> -> vector<8x8xf32>
    %cst_137 = arith.constant 0.176776692 : f32
    %324 = vector.broadcast %cst_137 : f32 to vector<8x8xf32>
    %325 = arith.mulf %323, %324 : vector<8x8xf32>
    %326 = vector.broadcast %297 : vector<1x8xf32> to vector<8x8xf32>
    %327 = arith.addf %325, %326 : vector<8x8xf32>
    %cst_138 = arith.constant dense<0xFF800000> : vector<8xf32>
    %328 = vector.multi_reduction <maximumf>, %327, %cst_138 [1] : vector<8x8xf32> to vector<8xf32>
    %329 = vector.shape_cast %328 : vector<8xf32> to vector<8x1xf32>
    %330 = vector.broadcast %329 : vector<8x1xf32> to vector<8x8xf32>
    %331 = arith.subf %327, %330 : vector<8x8xf32>
    %332 = math.exp %331 : vector<8x8xf32>
    %cst_139 = arith.constant dense<0.000000e+00> : vector<8xf32>
    %333 = vector.multi_reduction <add>, %332, %cst_139 [1] : vector<8x8xf32> to vector<8xf32>
    %334 = vector.shape_cast %333 : vector<8xf32> to vector<8x1xf32>
    %335 = tpu.reciprocal %334 {approx = true} : vector<8x1xf32> -> vector<8x1xf32>
    %336 = vector.broadcast %335 : vector<8x1xf32> to vector<8x8xf32>
    %337 = arith.mulf %332, %336 : vector<8x8xf32>
    %cst_140 = arith.constant dense<0.000000e+00> : vector<8x32xf32>
    %338 = tpu.matmul %337, %321, %cst_140 {dimension_numbers = #tpu.dot_dimension_numbers<[1], [0], [0], [1], [0, 0, 1, 1], [], []>} : vector<8x8xf32>, vector<8x32xf32>, vector<8x32xf32> -> vector<8x32xf32>
    %c0_141 = arith.constant 0 : index
    %c32_142 = arith.constant 32 : index
    %339 = vector.load %arg20[%c0_141, %c32_142] : memref<16x128xf32, #tpu.memory_space<vmem>>, vector<8x32xf32>
    tpu.vector_store %arg20[%c0_141, %c32_142], %338 {strides = array<i32>} : memref<16x128xf32, #tpu.memory_space<vmem>>, vector<8x32xf32>,
    %340 = vector.extract_strided_slice %296 {offsets = [0, 64], sizes = [8, 32], strides = [1, 1]} : vector<16x384xf32> to vector<8x32xf32>
    %341 = vector.extract_strided_slice %296 {offsets = [0, 192], sizes = [8, 32], strides = [1, 1]} : vector<16x384xf32> to vector<8x32xf32>
    %342 = vector.extract_strided_slice %296 {offsets = [0, 320], sizes = [8, 32], strides = [1, 1]} : vector<16x384xf32> to vector<8x32xf32>
    %343 = tpu.transpose %341, [1, 0] : vector<8x32xf32> -> vector<32x8xf32>
    %cst_143 = arith.constant dense<0.000000e+00> : vector<8x8xf32>
    %344 = tpu.matmul %340, %343, %cst_143 {dimension_numbers = #tpu.dot_dimension_numbers<[1], [0], [0], [1], [0, 0, 1, 1], [], []>} : vector<8x32xf32>, vector<32x8xf32>, vector<8x8xf32> -> vector<8x8xf32>
    %cst_144 = arith.constant 0.176776692 : f32
    %345 = vector.broadcast %cst_144 : f32 to vector<8x8xf32>
    %346 = arith.mulf %344, %345 : vector<8x8xf32>
    %347 = vector.broadcast %297 : vector<1x8xf32> to vector<8x8xf32>
    %348 = arith.addf %346, %347 : vector<8x8xf32>
    %cst_145 = arith.constant dense<0xFF800000> : vector<8xf32>
    %349 = vector.multi_reduction <maximumf>, %348, %cst_145 [1] : vector<8x8xf32> to vector<8xf32>
    %350 = vector.shape_cast %349 : vector<8xf32> to vector<8x1xf32>
    %351 = vector.broadcast %350 : vector<8x1xf32> to vector<8x8xf32>
    %352 = arith.subf %348, %351 : vector<8x8xf32>
    %353 = math.exp %352 : vector<8x8xf32>
    %cst_146 = arith.constant dense<0.000000e+00> : vector<8xf32>
    %354 = vector.multi_reduction <add>, %353, %cst_146 [1] : vector<8x8xf32> to vector<8xf32>
    %355 = vector.shape_cast %354 : vector<8xf32> to vector<8x1xf32>
    %356 = tpu.reciprocal %355 {approx = true} : vector<8x1xf32> -> vector<8x1xf32>
    %357 = vector.broadcast %356 : vector<8x1xf32> to vector<8x8xf32>
    %358 = arith.mulf %353, %357 : vector<8x8xf32>
    %cst_147 = arith.constant dense<0.000000e+00> : vector<8x32xf32>
    %359 = tpu.matmul %358, %342, %cst_147 {dimension_numbers = #tpu.dot_dimension_numbers<[1], [0], [0], [1], [0, 0, 1, 1], [], []>} : vector<8x8xf32>, vector<8x32xf32>, vector<8x32xf32> -> vector<8x32xf32>
    %c0_148 = arith.constant 0 : index
    %c64_149 = arith.constant 64 : index
    %360 = vector.load %arg20[%c0_148, %c64_149] : memref<16x128xf32, #tpu.memory_space<vmem>>, vector<8x32xf32>
    tpu.vector_store %arg20[%c0_148, %c64_149], %359 {strides = array<i32>} : memref<16x128xf32, #tpu.memory_space<vmem>>, vector<8x32xf32>,
    %361 = vector.extract_strided_slice %296 {offsets = [0, 96], sizes = [8, 32], strides = [1, 1]} : vector<16x384xf32> to vector<8x32xf32>
    %362 = vector.extract_strided_slice %296 {offsets = [0, 224], sizes = [8, 32], strides = [1, 1]} : vector<16x384xf32> to vector<8x32xf32>
    %363 = vector.extract_strided_slice %296 {offsets = [0, 352], sizes = [8, 32], strides = [1, 1]} : vector<16x384xf32> to vector<8x32xf32>
    %364 = tpu.transpose %362, [1, 0] : vector<8x32xf32> -> vector<32x8xf32>
    %cst_150 = arith.constant dense<0.000000e+00> : vector<8x8xf32>
    %365 = tpu.matmul %361, %364, %cst_150 {dimension_numbers = #tpu.dot_dimension_numbers<[1], [0], [0], [1], [0, 0, 1, 1], [], []>} : vector<8x32xf32>, vector<32x8xf32>, vector<8x8xf32> -> vector<8x8xf32>
    %cst_151 = arith.constant 0.176776692 : f32
    %366 = vector.broadcast %cst_151 : f32 to vector<8x8xf32>
    %367 = arith.mulf %365, %366 : vector<8x8xf32>
    %368 = vector.broadcast %297 : vector<1x8xf32> to vector<8x8xf32>
    %369 = arith.addf %367, %368 : vector<8x8xf32>
    %cst_152 = arith.constant dense<0xFF800000> : vector<8xf32>
    %370 = vector.multi_reduction <maximumf>, %369, %cst_152 [1] : vector<8x8xf32> to vector<8xf32>
    %371 = vector.shape_cast %370 : vector<8xf32> to vector<8x1xf32>
    %372 = vector.broadcast %371 : vector<8x1xf32> to vector<8x8xf32>
    %373 = arith.subf %369, %372 : vector<8x8xf32>
    %374 = math.exp %373 : vector<8x8xf32>
    %cst_153 = arith.constant dense<0.000000e+00> : vector<8xf32>
    %375 = vector.multi_reduction <add>, %374, %cst_153 [1] : vector<8x8xf32> to vector<8xf32>
    %376 = vector.shape_cast %375 : vector<8xf32> to vector<8x1xf32>
    %377 = tpu.reciprocal %376 {approx = true} : vector<8x1xf32> -> vector<8x1xf32>
    %378 = vector.broadcast %377 : vector<8x1xf32> to vector<8x8xf32>
    %379 = arith.mulf %374, %378 : vector<8x8xf32>
    %cst_154 = arith.constant dense<0.000000e+00> : vector<8x32xf32>
    %380 = tpu.matmul %379, %363, %cst_154 {dimension_numbers = #tpu.dot_dimension_numbers<[1], [0], [0], [1], [0, 0, 1, 1], [], []>} : vector<8x8xf32>, vector<8x32xf32>, vector<8x32xf32> -> vector<8x32xf32>
    %c0_155 = arith.constant 0 : index
    %c96_156 = arith.constant 96 : index
    %381 = vector.load %arg20[%c0_155, %c96_156] : memref<16x128xf32, #tpu.memory_space<vmem>>, vector<8x32xf32>
    tpu.vector_store %arg20[%c0_155, %c96_156], %380 {strides = array<i32>} : memref<16x128xf32, #tpu.memory_space<vmem>>, vector<8x32xf32>,
    %c1_157 = arith.constant 1 : index
    %c0_158 = arith.constant 0 : index
    %382 = vector.load %arg2[%c1_157, %c0_158] : memref<2x8xf32, #tpu.memory_space<vmem>>, vector<1x8xf32>
    %383 = vector.extract_strided_slice %296 {offsets = [8, 0], sizes = [8, 32], strides = [1, 1]} : vector<16x384xf32> to vector<8x32xf32>
    %384 = vector.extract_strided_slice %296 {offsets = [8, 128], sizes = [8, 32], strides = [1, 1]} : vector<16x384xf32> to vector<8x32xf32>
    %385 = vector.extract_strided_slice %296 {offsets = [8, 256], sizes = [8, 32], strides = [1, 1]} : vector<16x384xf32> to vector<8x32xf32>
    %386 = tpu.transpose %384, [1, 0] : vector<8x32xf32> -> vector<32x8xf32>
    %cst_159 = arith.constant dense<0.000000e+00> : vector<8x8xf32>
    %387 = tpu.matmul %383, %386, %cst_159 {dimension_numbers = #tpu.dot_dimension_numbers<[1], [0], [0], [1], [0, 0, 1, 1], [], []>} : vector<8x32xf32>, vector<32x8xf32>, vector<8x8xf32> -> vector<8x8xf32>
    %cst_160 = arith.constant 0.176776692 : f32
    %388 = vector.broadcast %cst_160 : f32 to vector<8x8xf32>
    %389 = arith.mulf %387, %388 : vector<8x8xf32>
    %390 = vector.broadcast %382 : vector<1x8xf32> to vector<8x8xf32>
    %391 = arith.addf %389, %390 : vector<8x8xf32>
    %cst_161 = arith.constant dense<0xFF800000> : vector<8xf32>
    %392 = vector.multi_reduction <maximumf>, %391, %cst_161 [1] : vector<8x8xf32> to vector<8xf32>
    %393 = vector.shape_cast %392 : vector<8xf32> to vector<8x1xf32>
    %394 = vector.broadcast %393 : vector<8x1xf32> to vector<8x8xf32>
    %395 = arith.subf %391, %394 : vector<8x8xf32>
    %396 = math.exp %395 : vector<8x8xf32>
    %cst_162 = arith.constant dense<0.000000e+00> : vector<8xf32>
    %397 = vector.multi_reduction <add>, %396, %cst_162 [1] : vector<8x8xf32> to vector<8xf32>
    %398 = vector.shape_cast %397 : vector<8xf32> to vector<8x1xf32>
    %399 = tpu.reciprocal %398 {approx = true} : vector<8x1xf32> -> vector<8x1xf32>
    %400 = vector.broadcast %399 : vector<8x1xf32> to vector<8x8xf32>
    %401 = arith.mulf %396, %400 : vector<8x8xf32>
    %cst_163 = arith.constant dense<0.000000e+00> : vector<8x32xf32>
    %402 = tpu.matmul %401, %385, %cst_163 {dimension_numbers = #tpu.dot_dimension_numbers<[1], [0], [0], [1], [0, 0, 1, 1], [], []>} : vector<8x8xf32>, vector<8x32xf32>, vector<8x32xf32> -> vector<8x32xf32>
    %c8_164 = arith.constant 8 : index
    %c0_165 = arith.constant 0 : index
    %403 = vector.load %arg20[%c8_164, %c0_165] : memref<16x128xf32, #tpu.memory_space<vmem>>, vector<8x32xf32>
    tpu.vector_store %arg20[%c8_164, %c0_165], %402 {strides = array<i32>} : memref<16x128xf32, #tpu.memory_space<vmem>>, vector<8x32xf32>,
    %404 = vector.extract_strided_slice %296 {offsets = [8, 32], sizes = [8, 32], strides = [1, 1]} : vector<16x384xf32> to vector<8x32xf32>
    %405 = vector.extract_strided_slice %296 {offsets = [8, 160], sizes = [8, 32], strides = [1, 1]} : vector<16x384xf32> to vector<8x32xf32>
    %406 = vector.extract_strided_slice %296 {offsets = [8, 288], sizes = [8, 32], strides = [1, 1]} : vector<16x384xf32> to vector<8x32xf32>
    %407 = tpu.transpose %405, [1, 0] : vector<8x32xf32> -> vector<32x8xf32>
    %cst_166 = arith.constant dense<0.000000e+00> : vector<8x8xf32>
    %408 = tpu.matmul %404, %407, %cst_166 {dimension_numbers = #tpu.dot_dimension_numbers<[1], [0], [0], [1], [0, 0, 1, 1], [], []>} : vector<8x32xf32>, vector<32x8xf32>, vector<8x8xf32> -> vector<8x8xf32>
    %cst_167 = arith.constant 0.176776692 : f32
    %409 = vector.broadcast %cst_167 : f32 to vector<8x8xf32>
    %410 = arith.mulf %408, %409 : vector<8x8xf32>
    %411 = vector.broadcast %382 : vector<1x8xf32> to vector<8x8xf32>
    %412 = arith.addf %410, %411 : vector<8x8xf32>
    %cst_168 = arith.constant dense<0xFF800000> : vector<8xf32>
    %413 = vector.multi_reduction <maximumf>, %412, %cst_168 [1] : vector<8x8xf32> to vector<8xf32>
    %414 = vector.shape_cast %413 : vector<8xf32> to vector<8x1xf32>
    %415 = vector.broadcast %414 : vector<8x1xf32> to vector<8x8xf32>
    %416 = arith.subf %412, %415 : vector<8x8xf32>
    %417 = math.exp %416 : vector<8x8xf32>
    %cst_169 = arith.constant dense<0.000000e+00> : vector<8xf32>
    %418 = vector.multi_reduction <add>, %417, %cst_169 [1] : vector<8x8xf32> to vector<8xf32>
    %419 = vector.shape_cast %418 : vector<8xf32> to vector<8x1xf32>
    %420 = tpu.reciprocal %419 {approx = true} : vector<8x1xf32> -> vector<8x1xf32>
    %421 = vector.broadcast %420 : vector<8x1xf32> to vector<8x8xf32>
    %422 = arith.mulf %417, %421 : vector<8x8xf32>
    %cst_170 = arith.constant dense<0.000000e+00> : vector<8x32xf32>
    %423 = tpu.matmul %422, %406, %cst_170 {dimension_numbers = #tpu.dot_dimension_numbers<[1], [0], [0], [1], [0, 0, 1, 1], [], []>} : vector<8x8xf32>, vector<8x32xf32>, vector<8x32xf32> -> vector<8x32xf32>
    %c8_171 = arith.constant 8 : index
    %c32_172 = arith.constant 32 : index
    %424 = vector.load %arg20[%c8_171, %c32_172] : memref<16x128xf32, #tpu.memory_space<vmem>>, vector<8x32xf32>
    tpu.vector_store %arg20[%c8_171, %c32_172], %423 {strides = array<i32>} : memref<16x128xf32, #tpu.memory_space<vmem>>, vector<8x32xf32>,
    %425 = vector.extract_strided_slice %296 {offsets = [8, 64], sizes = [8, 32], strides = [1, 1]} : vector<16x384xf32> to vector<8x32xf32>
    %426 = vector.extract_strided_slice %296 {offsets = [8, 192], sizes = [8, 32], strides = [1, 1]} : vector<16x384xf32> to vector<8x32xf32>
    %427 = vector.extract_strided_slice %296 {offsets = [8, 320], sizes = [8, 32], strides = [1, 1]} : vector<16x384xf32> to vector<8x32xf32>
    %428 = tpu.transpose %426, [1, 0] : vector<8x32xf32> -> vector<32x8xf32>
    %cst_173 = arith.constant dense<0.000000e+00> : vector<8x8xf32>
    %429 = tpu.matmul %425, %428, %cst_173 {dimension_numbers = #tpu.dot_dimension_numbers<[1], [0], [0], [1], [0, 0, 1, 1], [], []>} : vector<8x32xf32>, vector<32x8xf32>, vector<8x8xf32> -> vector<8x8xf32>
    %cst_174 = arith.constant 0.176776692 : f32
    %430 = vector.broadcast %cst_174 : f32 to vector<8x8xf32>
    %431 = arith.mulf %429, %430 : vector<8x8xf32>
    %432 = vector.broadcast %382 : vector<1x8xf32> to vector<8x8xf32>
    %433 = arith.addf %431, %432 : vector<8x8xf32>
    %cst_175 = arith.constant dense<0xFF800000> : vector<8xf32>
    %434 = vector.multi_reduction <maximumf>, %433, %cst_175 [1] : vector<8x8xf32> to vector<8xf32>
    %435 = vector.shape_cast %434 : vector<8xf32> to vector<8x1xf32>
    %436 = vector.broadcast %435 : vector<8x1xf32> to vector<8x8xf32>
    %437 = arith.subf %433, %436 : vector<8x8xf32>
    %438 = math.exp %437 : vector<8x8xf32>
    %cst_176 = arith.constant dense<0.000000e+00> : vector<8xf32>
    %439 = vector.multi_reduction <add>, %438, %cst_176 [1] : vector<8x8xf32> to vector<8xf32>
    %440 = vector.shape_cast %439 : vector<8xf32> to vector<8x1xf32>
    %441 = tpu.reciprocal %440 {approx = true} : vector<8x1xf32> -> vector<8x1xf32>
    %442 = vector.broadcast %441 : vector<8x1xf32> to vector<8x8xf32>
    %443 = arith.mulf %438, %442 : vector<8x8xf32>
    %cst_177 = arith.constant dense<0.000000e+00> : vector<8x32xf32>
    %444 = tpu.matmul %443, %427, %cst_177 {dimension_numbers = #tpu.dot_dimension_numbers<[1], [0], [0], [1], [0, 0, 1, 1], [], []>} : vector<8x8xf32>, vector<8x32xf32>, vector<8x32xf32> -> vector<8x32xf32>
    %c8_178 = arith.constant 8 : index
    %c64_179 = arith.constant 64 : index
    %445 = vector.load %arg20[%c8_178, %c64_179] : memref<16x128xf32, #tpu.memory_space<vmem>>, vector<8x32xf32>
    tpu.vector_store %arg20[%c8_178, %c64_179], %444 {strides = array<i32>} : memref<16x128xf32, #tpu.memory_space<vmem>>, vector<8x32xf32>,
    %446 = vector.extract_strided_slice %296 {offsets = [8, 96], sizes = [8, 32], strides = [1, 1]} : vector<16x384xf32> to vector<8x32xf32>
    %447 = vector.extract_strided_slice %296 {offsets = [8, 224], sizes = [8, 32], strides = [1, 1]} : vector<16x384xf32> to vector<8x32xf32>
    %448 = vector.extract_strided_slice %296 {offsets = [8, 352], sizes = [8, 32], strides = [1, 1]} : vector<16x384xf32> to vector<8x32xf32>
    %449 = tpu.transpose %447, [1, 0] : vector<8x32xf32> -> vector<32x8xf32>
    %cst_180 = arith.constant dense<0.000000e+00> : vector<8x8xf32>
    %450 = tpu.matmul %446, %449, %cst_180 {dimension_numbers = #tpu.dot_dimension_numbers<[1], [0], [0], [1], [0, 0, 1, 1], [], []>} : vector<8x32xf32>, vector<32x8xf32>, vector<8x8xf32> -> vector<8x8xf32>
    %cst_181 = arith.constant 0.176776692 : f32
    %451 = vector.broadcast %cst_181 : f32 to vector<8x8xf32>
    %452 = arith.mulf %450, %451 : vector<8x8xf32>
    %453 = vector.broadcast %382 : vector<1x8xf32> to vector<8x8xf32>
    %454 = arith.addf %452, %453 : vector<8x8xf32>
    %cst_182 = arith.constant dense<0xFF800000> : vector<8xf32>
    %455 = vector.multi_reduction <maximumf>, %454, %cst_182 [1] : vector<8x8xf32> to vector<8xf32>
    %456 = vector.shape_cast %455 : vector<8xf32> to vector<8x1xf32>
    %457 = vector.broadcast %456 : vector<8x1xf32> to vector<8x8xf32>
    %458 = arith.subf %454, %457 : vector<8x8xf32>
    %459 = math.exp %458 : vector<8x8xf32>
    %cst_183 = arith.constant dense<0.000000e+00> : vector<8xf32>
    %460 = vector.multi_reduction <add>, %459, %cst_183 [1] : vector<8x8xf32> to vector<8xf32>
    %461 = vector.shape_cast %460 : vector<8xf32> to vector<8x1xf32>
    %462 = tpu.reciprocal %461 {approx = true} : vector<8x1xf32> -> vector<8x1xf32>
    %463 = vector.broadcast %462 : vector<8x1xf32> to vector<8x8xf32>
    %464 = arith.mulf %459, %463 : vector<8x8xf32>
    %cst_184 = arith.constant dense<0.000000e+00> : vector<8x32xf32>
    %465 = tpu.matmul %464, %448, %cst_184 {dimension_numbers = #tpu.dot_dimension_numbers<[1], [0], [0], [1], [0, 0, 1, 1], [], []>} : vector<8x8xf32>, vector<8x32xf32>, vector<8x32xf32> -> vector<8x32xf32>
    %c8_185 = arith.constant 8 : index
    %c96_186 = arith.constant 96 : index
    %466 = vector.load %arg20[%c8_185, %c96_186] : memref<16x128xf32, #tpu.memory_space<vmem>>, vector<8x32xf32>
    tpu.vector_store %arg20[%c8_185, %c96_186], %465 {strides = array<i32>} : memref<16x128xf32, #tpu.memory_space<vmem>>, vector<8x32xf32>,
    %c0_187 = arith.constant 0 : index
    %c0_188 = arith.constant 0 : index
    %467 = vector.load %arg20[%c0_187, %c0_188] : memref<16x128xf32, #tpu.memory_space<vmem>>, vector<16x128xf32>
    %c1_189 = arith.constant 1 : index
    %c0_190 = arith.constant 0 : index
    %c0_191 = arith.constant 0 : index
    %468 = vector.load %arg7[%c1_189, %c0_190, %c0_191] : memref<2x128x128xbf16, #tpu.memory_space<vmem>>, vector<1x128x128xbf16>
    %469 = vector.shape_cast %468 : vector<1x128x128xbf16> to vector<128x128xbf16>
    %470 = arith.truncf %467 : vector<16x128xf32> to vector<16x128xbf16>
    %cst_192 = arith.constant dense<0.000000e+00> : vector<16x128xf32>
    %471 = tpu.matmul %470, %469, %cst_192 {dimension_numbers = #tpu.dot_dimension_numbers<[1], [0], [0], [1], [0, 0, 1, 1], [], []>} : vector<16x128xbf16>, vector<128x128xbf16>, vector<16x128xf32> -> vector<16x128xf32>
    %c1_193 = arith.constant 1 : index
    %c0_194 = arith.constant 0 : index
    %c0_195 = arith.constant 0 : index
    %472 = vector.load %arg8[%c1_193, %c0_194, %c0_195] : memref<2x1x128xf32, #tpu.memory_space<vmem>>, vector<1x1x128xf32>
    %473 = vector.shape_cast %472 : vector<1x1x128xf32> to vector<1x128xf32>
    %474 = vector.broadcast %473 : vector<1x128xf32> to vector<16x128xf32>
    %475 = arith.addf %471, %474 : vector<16x128xf32>
    %476 = arith.addf %475, %288 : vector<16x128xf32>
    %c1_196 = arith.constant 1 : index
    %c0_197 = arith.constant 0 : index
    %c0_198 = arith.constant 0 : index
    %477 = vector.load %arg9[%c1_196, %c0_197, %c0_198] : memref<2x1x128xf32, #tpu.memory_space<vmem>>, vector<1x1x128xf32>
    %478 = vector.shape_cast %477 : vector<1x1x128xf32> to vector<1x128xf32>
    %c1_199 = arith.constant 1 : index
    %c0_200 = arith.constant 0 : index
    %c0_201 = arith.constant 0 : index
    %479 = vector.load %arg10[%c1_199, %c0_200, %c0_201] : memref<2x1x128xf32, #tpu.memory_space<vmem>>, vector<1x1x128xf32>
    %480 = vector.shape_cast %479 : vector<1x1x128xf32> to vector<1x128xf32>
    %cst_202 = arith.constant dense<0.000000e+00> : vector<16xf32>
    %481 = vector.multi_reduction <add>, %476, %cst_202 [1] : vector<16x128xf32> to vector<16xf32>
    %482 = vector.shape_cast %481 : vector<16xf32> to vector<16x1xf32>
    %cst_203 = arith.constant 1.280000e+02 : f32
    %483 = vector.broadcast %cst_203 : f32 to vector<16x1xf32>
    %484 = arith.divf %482, %483 : vector<16x1xf32>
    %485 = vector.broadcast %484 : vector<16x1xf32> to vector<16x128xf32>
    %486 = arith.subf %476, %485 : vector<16x128xf32>
    %487 = arith.mulf %486, %486 : vector<16x128xf32>
    %cst_204 = arith.constant dense<0.000000e+00> : vector<16xf32>
    %488 = vector.multi_reduction <add>, %487, %cst_204 [1] : vector<16x128xf32> to vector<16xf32>
    %489 = vector.shape_cast %488 : vector<16xf32> to vector<16x1xf32>
    %cst_205 = arith.constant 1.280000e+02 : f32
    %490 = vector.broadcast %cst_205 : f32 to vector<16x1xf32>
    %491 = arith.divf %489, %490 : vector<16x1xf32>
    %cst_206 = arith.constant 9.99999996E-13 : f32
    %492 = vector.broadcast %cst_206 : f32 to vector<16x1xf32>
    %493 = arith.addf %491, %492 : vector<16x1xf32>
    %494 = math.rsqrt %493 : vector<16x1xf32>
    %495 = vector.broadcast %494 : vector<16x1xf32> to vector<16x128xf32>
    %496 = arith.mulf %486, %495 : vector<16x128xf32>
    %497 = vector.broadcast %478 : vector<1x128xf32> to vector<16x128xf32>
    %498 = arith.mulf %496, %497 : vector<16x128xf32>
    %499 = vector.broadcast %480 : vector<1x128xf32> to vector<16x128xf32>
    %500 = arith.addf %498, %499 : vector<16x128xf32>
    %c1_207 = arith.constant 1 : index
    %c0_208 = arith.constant 0 : index
    %c0_209 = arith.constant 0 : index
    %501 = vector.load %arg11[%c1_207, %c0_208, %c0_209] : memref<2x128x256xbf16, #tpu.memory_space<vmem>>, vector<1x128x256xbf16>
    %502 = vector.shape_cast %501 : vector<1x128x256xbf16> to vector<128x256xbf16>
    %503 = arith.truncf %500 : vector<16x128xf32> to vector<16x128xbf16>
    %cst_210 = arith.constant dense<0.000000e+00> : vector<16x256xf32>
    %504 = tpu.matmul %503, %502, %cst_210 {dimension_numbers = #tpu.dot_dimension_numbers<[1], [0], [0], [1], [0, 0, 1, 1], [], []>} : vector<16x128xbf16>, vector<128x256xbf16>, vector<16x256xf32> -> vector<16x256xf32>
    %c1_211 = arith.constant 1 : index
    %c0_212 = arith.constant 0 : index
    %c0_213 = arith.constant 0 : index
    %505 = vector.load %arg12[%c1_211, %c0_212, %c0_213] : memref<2x1x256xf32, #tpu.memory_space<vmem>>, vector<1x1x256xf32>
    %506 = vector.shape_cast %505 : vector<1x1x256xf32> to vector<1x256xf32>
    %507 = vector.broadcast %506 : vector<1x256xf32> to vector<16x256xf32>
    %508 = arith.addf %504, %507 : vector<16x256xf32>
    %cst_214 = arith.constant 5.000000e-01 : f32
    %509 = vector.broadcast %cst_214 : f32 to vector<16x256xf32>
    %510 = arith.mulf %509, %508 : vector<16x256xf32>
    %cst_215 = arith.constant 4.471500e-02 : f32
    %511 = vector.broadcast %cst_215 : f32 to vector<16x256xf32>
    %512 = arith.mulf %511, %508 : vector<16x256xf32>
    %513 = arith.mulf %512, %508 : vector<16x256xf32>
    %514 = arith.mulf %513, %508 : vector<16x256xf32>
    %515 = arith.addf %508, %514 : vector<16x256xf32>
    %cst_216 = arith.constant 0.797884583 : f32
    %516 = vector.broadcast %cst_216 : f32 to vector<16x256xf32>
    %517 = arith.mulf %516, %515 : vector<16x256xf32>
    %518 = math.tanh %517 : vector<16x256xf32>
    %cst_217 = arith.constant 1.000000e+00 : f32
    %519 = vector.broadcast %cst_217 : f32 to vector<16x256xf32>
    %520 = arith.addf %519, %518 : vector<16x256xf32>
    %521 = arith.mulf %510, %520 : vector<16x256xf32>
    %c1_218 = arith.constant 1 : index
    %c0_219 = arith.constant 0 : index
    %c0_220 = arith.constant 0 : index
    %522 = vector.load %arg13[%c1_218, %c0_219, %c0_220] : memref<2x256x128xbf16, #tpu.memory_space<vmem>>, vector<1x256x128xbf16>
    %523 = vector.shape_cast %522 : vector<1x256x128xbf16> to vector<256x128xbf16>
    %524 = arith.truncf %521 : vector<16x256xf32> to vector<16x256xbf16>
    %cst_221 = arith.constant dense<0.000000e+00> : vector<16x128xf32>
    %525 = tpu.matmul %524, %523, %cst_221 {dimension_numbers = #tpu.dot_dimension_numbers<[1], [0], [0], [1], [0, 0, 1, 1], [], []>} : vector<16x256xbf16>, vector<256x128xbf16>, vector<16x128xf32> -> vector<16x128xf32>
    %c1_222 = arith.constant 1 : index
    %c0_223 = arith.constant 0 : index
    %c0_224 = arith.constant 0 : index
    %526 = vector.load %arg14[%c1_222, %c0_223, %c0_224] : memref<2x1x128xf32, #tpu.memory_space<vmem>>, vector<1x1x128xf32>
    %527 = vector.shape_cast %526 : vector<1x1x128xf32> to vector<1x128xf32>
    %528 = vector.broadcast %527 : vector<1x128xf32> to vector<16x128xf32>
    %529 = arith.addf %525, %528 : vector<16x128xf32>
    %530 = arith.addf %529, %500 : vector<16x128xf32>
    %c1_225 = arith.constant 1 : index
    %c0_226 = arith.constant 0 : index
    %c0_227 = arith.constant 0 : index
    %531 = vector.load %arg15[%c1_225, %c0_226, %c0_227] : memref<2x1x128xf32, #tpu.memory_space<vmem>>, vector<1x1x128xf32>
    %532 = vector.shape_cast %531 : vector<1x1x128xf32> to vector<1x128xf32>
    %c1_228 = arith.constant 1 : index
    %c0_229 = arith.constant 0 : index
    %c0_230 = arith.constant 0 : index
    %533 = vector.load %arg16[%c1_228, %c0_229, %c0_230] : memref<2x1x128xf32, #tpu.memory_space<vmem>>, vector<1x1x128xf32>
    %534 = vector.shape_cast %533 : vector<1x1x128xf32> to vector<1x128xf32>
    %cst_231 = arith.constant dense<0.000000e+00> : vector<16xf32>
    %535 = vector.multi_reduction <add>, %530, %cst_231 [1] : vector<16x128xf32> to vector<16xf32>
    %536 = vector.shape_cast %535 : vector<16xf32> to vector<16x1xf32>
    %cst_232 = arith.constant 1.280000e+02 : f32
    %537 = vector.broadcast %cst_232 : f32 to vector<16x1xf32>
    %538 = arith.divf %536, %537 : vector<16x1xf32>
    %539 = vector.broadcast %538 : vector<16x1xf32> to vector<16x128xf32>
    %540 = arith.subf %530, %539 : vector<16x128xf32>
    %541 = arith.mulf %540, %540 : vector<16x128xf32>
    %cst_233 = arith.constant dense<0.000000e+00> : vector<16xf32>
    %542 = vector.multi_reduction <add>, %541, %cst_233 [1] : vector<16x128xf32> to vector<16xf32>
    %543 = vector.shape_cast %542 : vector<16xf32> to vector<16x1xf32>
    %cst_234 = arith.constant 1.280000e+02 : f32
    %544 = vector.broadcast %cst_234 : f32 to vector<16x1xf32>
    %545 = arith.divf %543, %544 : vector<16x1xf32>
    %cst_235 = arith.constant 9.99999996E-13 : f32
    %546 = vector.broadcast %cst_235 : f32 to vector<16x1xf32>
    %547 = arith.addf %545, %546 : vector<16x1xf32>
    %548 = math.rsqrt %547 : vector<16x1xf32>
    %549 = vector.broadcast %548 : vector<16x1xf32> to vector<16x128xf32>
    %550 = arith.mulf %540, %549 : vector<16x128xf32>
    %551 = vector.broadcast %532 : vector<1x128xf32> to vector<16x128xf32>
    %552 = arith.mulf %550, %551 : vector<16x128xf32>
    %553 = vector.broadcast %534 : vector<1x128xf32> to vector<16x128xf32>
    %554 = arith.addf %552, %553 : vector<16x128xf32>
    %555 = vector.extract_strided_slice %554 {offsets = [0, 0], sizes = [1, 128], strides = [1, 1]} : vector<16x128xf32> to vector<1x128xf32>
    %556 = vector.extract_strided_slice %554 {offsets = [8, 0], sizes = [1, 128], strides = [1, 1]} : vector<16x128xf32> to vector<1x128xf32>
    %557 = tpu.concatenate %555, %556 in 0 : vector<1x128xf32>, vector<1x128xf32> -> vector<2x128xf32>
    %c0_236 = arith.constant 0 : index
    %c0_237 = arith.constant 0 : index
    %558 = vector.load %arg17[%c0_236, %c0_237] : memref<128x128xbf16, #tpu.memory_space<vmem>>, vector<128x128xbf16>
    %559 = arith.truncf %557 : vector<2x128xf32> to vector<2x128xbf16>
    %cst_238 = arith.constant dense<0.000000e+00> : vector<2x128xf32>
    %560 = tpu.matmul %559, %558, %cst_238 {dimension_numbers = #tpu.dot_dimension_numbers<[1], [0], [0], [1], [0, 0, 1, 1], [], []>} : vector<2x128xbf16>, vector<128x128xbf16>, vector<2x128xf32> -> vector<2x128xf32>
    %c0_239 = arith.constant 0 : index
    %c0_240 = arith.constant 0 : index
    %561 = vector.load %arg18[%c0_239, %c0_240] : memref<1x128xf32, #tpu.memory_space<vmem>>, vector<1x128xf32>
    %562 = vector.broadcast %561 : vector<1x128xf32> to vector<2x128xf32>
    %563 = arith.addf %560, %562 : vector<2x128xf32>
    %c0_241 = arith.constant 0 : index
    %c0_242 = arith.constant 0 : index
    %564 = vector.load %arg19[%c0_241, %c0_242] : memref<2x128xf32, #tpu.memory_space<vmem>>, vector<2x128xf32>
    tpu.vector_store %arg19[%c0_241, %c0_242], %563 {strides = array<i32>} : memref<2x128xf32, #tpu.memory_space<vmem>>, vector<2x128xf32>,
    return
  }
  func.func @transform_0(%arg0: i32) -> (i32, i32) {
    %c0_i32 = arith.constant 0 : i32
    %c0_i32_0 = arith.constant 0 : i32
    %c0_i32_1 = arith.constant 0 : i32
    return %c0_i32, %c0_i32_0 : i32, i32
  }
  func.func @transform_1(%arg0: i32) -> (i32, i32) {
    %c0_i32 = arith.constant 0 : i32
    %c0_i32_0 = arith.constant 0 : i32
    %c0_i32_1 = arith.constant 0 : i32
    return %c0_i32, %c0_i32_0 : i32, i32
  }
  func.func @transform_2(%arg0: i32) -> (i32, i32) {
    %c0_i32 = arith.constant 0 : i32
    %c0_i32_0 = arith.constant 0 : i32
    %c0_i32_1 = arith.constant 0 : i32
    return %c0_i32, %c0_i32_0 : i32, i32
  }
  func.func @transform_3(%arg0: i32) -> (i32, i32) {
    %c0_i32 = arith.constant 0 : i32
    %c0_i32_0 = arith.constant 0 : i32
    %c0_i32_1 = arith.constant 0 : i32
    return %c0_i32, %c0_i32_0 : i32, i32
  }
  func.func @transform_4(%arg0: i32) -> (i32, i32, i32) {
    %c0_i32 = arith.constant 0 : i32
    %c0_i32_0 = arith.constant 0 : i32
    %c0_i32_1 = arith.constant 0 : i32
    %c0_i32_2 = arith.constant 0 : i32
    return %c0_i32, %c0_i32_0, %c0_i32_1 : i32, i32, i32
  }
  func.func @transform_5(%arg0: i32) -> (i32, i32, i32) {
    %c0_i32 = arith.constant 0 : i32
    %c0_i32_0 = arith.constant 0 : i32
    %c0_i32_1 = arith.constant 0 : i32
    %c0_i32_2 = arith.constant 0 : i32
    return %c0_i32, %c0_i32_0, %c0_i32_1 : i32, i32, i32
  }
  func.func @transform_6(%arg0: i32) -> (i32, i32, i32) {
    %c0_i32 = arith.constant 0 : i32
    %c0_i32_0 = arith.constant 0 : i32
    %c0_i32_1 = arith.constant 0 : i32
    %c0_i32_2 = arith.constant 0 : i32
    return %c0_i32, %c0_i32_0, %c0_i32_1 : i32, i32, i32
  }
  func.func @transform_7(%arg0: i32) -> (i32, i32, i32) {
    %c0_i32 = arith.constant 0 : i32
    %c0_i32_0 = arith.constant 0 : i32
    %c0_i32_1 = arith.constant 0 : i32
    %c0_i32_2 = arith.constant 0 : i32
    return %c0_i32, %c0_i32_0, %c0_i32_1 : i32, i32, i32
  }
  func.func @transform_8(%arg0: i32) -> (i32, i32, i32) {
    %c0_i32 = arith.constant 0 : i32
    %c0_i32_0 = arith.constant 0 : i32
    %c0_i32_1 = arith.constant 0 : i32
    %c0_i32_2 = arith.constant 0 : i32
    return %c0_i32, %c0_i32_0, %c0_i32_1 : i32, i32, i32
  }
  func.func @transform_9(%arg0: i32) -> (i32, i32, i32) {
    %c0_i32 = arith.constant 0 : i32
    %c0_i32_0 = arith.constant 0 : i32
    %c0_i32_1 = arith.constant 0 : i32
    %c0_i32_2 = arith.constant 0 : i32
    return %c0_i32, %c0_i32_0, %c0_i32_1 : i32, i32, i32
  }
  func.func @transform_10(%arg0: i32) -> (i32, i32, i32) {
    %c0_i32 = arith.constant 0 : i32
    %c0_i32_0 = arith.constant 0 : i32
    %c0_i32_1 = arith.constant 0 : i32
    %c0_i32_2 = arith.constant 0 : i32
    return %c0_i32, %c0_i32_0, %c0_i32_1 : i32, i32, i32
  }
  func.func @transform_11(%arg0: i32) -> (i32, i32, i32) {
    %c0_i32 = arith.constant 0 : i32
    %c0_i32_0 = arith.constant 0 : i32
    %c0_i32_1 = arith.constant 0 : i32
    %c0_i32_2 = arith.constant 0 : i32
    return %c0_i32, %c0_i32_0, %c0_i32_1 : i32, i32, i32
  }
  func.func @transform_12(%arg0: i32) -> (i32, i32, i32) {
    %c0_i32 = arith.constant 0 : i32
    %c0_i32_0 = arith.constant 0 : i32
    %c0_i32_1 = arith.constant 0 : i32
    %c0_i32_2 = arith.constant 0 : i32
    return %c0_i32, %c0_i32_0, %c0_i32_1 : i32, i32, i32
  }
  func.func @transform_13(%arg0: i32) -> (i32, i32, i32) {
    %c0_i32 = arith.constant 0 : i32
    %c0_i32_0 = arith.constant 0 : i32
    %c0_i32_1 = arith.constant 0 : i32
    %c0_i32_2 = arith.constant 0 : i32
    return %c0_i32, %c0_i32_0, %c0_i32_1 : i32, i32, i32
  }
  func.func @transform_14(%arg0: i32) -> (i32, i32, i32) {
    %c0_i32 = arith.constant 0 : i32
    %c0_i32_0 = arith.constant 0 : i32
    %c0_i32_1 = arith.constant 0 : i32
    %c0_i32_2 = arith.constant 0 : i32
    return %c0_i32, %c0_i32_0, %c0_i32_1 : i32, i32, i32
  }
  func.func @transform_15(%arg0: i32) -> (i32, i32, i32) {
    %c0_i32 = arith.constant 0 : i32
    %c0_i32_0 = arith.constant 0 : i32
    %c0_i32_1 = arith.constant 0 : i32
    %c0_i32_2 = arith.constant 0 : i32
    return %c0_i32, %c0_i32_0, %c0_i32_1 : i32, i32, i32
  }
  func.func @transform_16(%arg0: i32) -> (i32, i32) {
    %c0_i32 = arith.constant 0 : i32
    %c0_i32_0 = arith.constant 0 : i32
    %c0_i32_1 = arith.constant 0 : i32
    return %c0_i32, %c0_i32_0 : i32, i32
  }
  func.func @transform_17(%arg0: i32) -> (i32, i32) {
    %c0_i32 = arith.constant 0 : i32
    %c0_i32_0 = arith.constant 0 : i32
    %c0_i32_1 = arith.constant 0 : i32
    return %c0_i32, %c0_i32_0 : i32, i32
  }
  func.func @transform_18(%arg0: i32) -> (i32, i32) {
    %c0_i32 = arith.constant 0 : i32
    %c0_i32_0 = arith.constant 0 : i32
    %c0_i32_1 = arith.constant 0 : i32
    return %c0_i32, %c0_i32_0 : i32, i32
  }
}

</mosaic_0001>

<llo_original>
// kernel: decision_classifier_forward.1
$region0: #{decision_classifier_forward.1}
  #allocation0 [shape = 'u32[]', space=smem, size = 0x4, offset = 0x4, fixed_abs, tag = 'smem constant byte address 0x4 - core index']
  #allocation1 [shape = 'u32[144,128]{1,0:T(1,128)}', space=vmem, size = 0x12000, scoped, tag = 'internal scratch']
  #allocation2 [shape = 'f32[16,128]{1,0:T(8,128)}', space=vmem, size = 0x2000, scoped, tag = 'scratch operand']
  %s0 = inlined_call_operand.vmem [shape: f32[16,128], index: 0, kind: input, shape index: {}]
  %s1 = inlined_call_operand.vmem [shape: f32[2,8], index: 1, kind: input, shape index: {}]
  %s2 = inlined_call_operand.hbm [shape: f32[1,128], index: 2, kind: input, shape index: {}]
  %s3 = inlined_call_operand.hbm [shape: f32[1,128], index: 3, kind: input, shape index: {}]
  %s4 = inlined_call_operand.hbm [shape: bf16[2,128,384], index: 4, kind: input, shape index: {}]
  %s5 = inlined_call_operand.vmem [shape: f32[2,1,384], index: 5, kind: input, shape index: {}]
  %s6 = inlined_call_operand.vmem [shape: bf16[2,128,128], index: 6, kind: input, shape index: {}]
  %s7 = inlined_call_operand.vmem [shape: f32[2,1,128], index: 7, kind: input, shape index: {}]
  %s8 = inlined_call_operand.vmem [shape: f32[2,1,128], index: 8, kind: input, shape index: {}]
  %s9 = inlined_call_operand.vmem [shape: f32[2,1,128], index: 9, kind: input, shape index: {}]
  %s10 = inlined_call_operand.vmem [shape: bf16[2,128,256], index: 10, kind: input, shape index: {}]
  %s11 = inlined_call_operand.vmem [shape: f32[2,1,256], index: 11, kind: input, shape index: {}]
  %s12 = inlined_call_operand.hbm [shape: bf16[2,256,128], index: 12, kind: input, shape index: {}]
  %s13 = inlined_call_operand.vmem [shape: f32[2,1,128], index: 13, kind: input, shape index: {}]
  %s14 = inlined_call_operand.vmem [shape: f32[2,1,128], index: 14, kind: input, shape index: {}]
  %s15 = inlined_call_operand.vmem [shape: f32[2,1,128], index: 15, kind: input, shape index: {}]
  %s16 = inlined_call_operand.vmem [shape: bf16[128,128], index: 16, kind: input, shape index: {}]
  %s17 = inlined_call_operand.vmem [shape: f32[1,128], index: 17, kind: input, shape index: {}]
  %s18 = inlined_call_operand.hbm [shape: f32[2,128], index: 18, kind: output, shape index: {}]
  %s19 = sld [smem:[#allocation0]]
  $region98: #{decision_classifier_forward.1} parent=0
    _
  %s21 = ssub.s32 1, %s19
  %s22 = scalar_select 0, %s21, %s19
  $region1: #{decision_classifier_forward.1} parent=0
    #allocation3 [shape = 'u8[512]{0}', space=vmem, size = 0x400, scoped, tag = 'input window, operand 2, single buffered']
    #allocation4 [shape = 's32[1]{0}', space=sflag, size = 0x4, scoped, tag = 'scoped memory for decision_classifier_forward.1']
    #allocation5 [shape = 's32[1]{0}', space=sflag, size = 0x4, scoped, tag = 'scoped memory for decision_classifier_forward.1']
    #allocation6 [shape = 'u8[512]{0}', space=vmem, size = 0x400, scoped, tag = 'input window, operand 3, single buffered']
    #allocation7 [shape = 's32[1]{0}', space=sflag, size = 0x4, scoped, tag = 'scoped memory for decision_classifier_forward.1']
    #allocation8 [shape = 'u8[196608]{0}', space=vmem, size = 0x30000, scoped, tag = 'input window, operand 4, single buffered']
    #allocation9 [shape = 'u8[131072]{0}', space=vmem, size = 0x20000, scoped, tag = 'input window, operand 12, single buffered']
    #allocation10 [shape = 's32[1]{0}', space=sflag, size = 0x4, scoped, tag = 'scoped memory for decision_classifier_forward.1']
    #allocation11 [shape = 'u8[1024]{0}', space=vmem, size = 0x400, scoped, tag = 'output window, operand 0, single buffered']
    %23 = vsyncpa [#allocation4], 0
    %24 = vsyncpa [#allocation7], 0
    %25 = vsyncpa [#allocation10], 0
    %26 = vsyncpa [#allocation5], 0
    // Predicated region
    $region2: #{decision_classifier_forward.1} parent=1 // pred_check
      _
    $region3: #{decision_classifier_forward.1} parent=1 // pred_check_branch
      %28 = sbr.rel (0) target = $region5
    $region4: #{decision_classifier_forward.1} parent=1 // pred_region
      _
    $region5: #{decision_classifier_forward.1} parent=1 // pred_fallthru
      _
    // Predicated region
    $region6: #{decision_classifier_forward.1} parent=1 // pred_check
      _
    $region7: #{decision_classifier_forward.1} parent=1 // pred_check_branch
      %30 = sbr.rel (0) target = $region9
    $region8: #{decision_classifier_forward.1} parent=1 // pred_region
      _
    $region9: #{decision_classifier_forward.1} parent=1 // pred_fallthru
      _
    // Predicated region
    $region10: #{decision_classifier_forward.1} parent=1 // pred_check
      _
    $region11: #{decision_classifier_forward.1} parent=1 // pred_check_branch
      %32 = sbr.rel (0) target = $region13
    $region12: #{decision_classifier_forward.1} parent=1 // pred_region
      %s34 = ssub.s32 16, 16
      %35 = vsyncadd [#allocation4], %s34
      %s37 = sshll.u32 [#allocation3], 4
      %s38 = int_to_ptr.vmem [resolvable:$true] %s37
      %40 = dma.hbm_to_vmem [thread:$0]  %s2, 16, %s38, [#allocation4]
    $region13: #{decision_classifier_forward.1} parent=1 // pred_fallthru
      _
    // Predicated region
    $region14: #{decision_classifier_forward.1} parent=1 // pred_check
      _
    $region15: #{decision_classifier_forward.1} parent=1 // pred_check_branch
      %42 = sbr.rel (0) target = $region17
    $region16: #{decision_classifier_forward.1} parent=1 // pred_region
      %s44 = ssub.s32 16, 16
      %45 = vsyncadd [#allocation7], %s44
      %s47 = sshll.u32 [#allocation6], 4
      %s48 = int_to_ptr.vmem [resolvable:$true] %s47
      %50 = dma.hbm_to_vmem [thread:$0]  %s3, 16, %s48, [#allocation7]
    $region17: #{decision_classifier_forward.1} parent=1 // pred_fallthru
      _
    // Predicated region
    $region18: #{decision_classifier_forward.1} parent=1 // pred_check
      _
    $region19: #{decision_classifier_forward.1} parent=1 // pred_check_branch
      %52 = sbr.rel (0) target = $region21
    $region20: #{decision_classifier_forward.1} parent=1 // pred_region
      %s54 = ssub.s32 6144, 6144
      %55 = vsyncadd [#allocation7], %s54
      %s56 = sshll.u32 [#allocation8], 4
      %s57 = int_to_ptr.vmem [resolvable:$true] %s56
      %62 = dma.hbm_to_vmem [thread:$0]  %s4, 6144, %s57, [#allocation7], 192, 192, 12
    $region21: #{decision_classifier_forward.1} parent=1 // pred_fallthru
      _
    // Predicated region
    $region22: #{decision_classifier_forward.1} parent=1 // pred_check
      _
    $region23: #{decision_classifier_forward.1} parent=1 // pred_check_branch
      %64 = sbr.rel (0) target = $region25
    $region24: #{decision_classifier_forward.1} parent=1 // pred_region
      _
    $region25: #{decision_classifier_forward.1} parent=1 // pred_fallthru
      _
    // Predicated region
    $region26: #{decision_classifier_forward.1} parent=1 // pred_check
      _
    $region27: #{decision_classifier_forward.1} parent=1 // pred_check_branch
      %66 = sbr.rel (0) target = $region29
    $region28: #{decision_classifier_forward.1} parent=1 // pred_region
      _
    $region29: #{decision_classifier_forward.1} parent=1 // pred_fallthru
      _
    // Predicated region
    $region30: #{decision_classifier_forward.1} parent=1 // pred_check
      _
    $region31: #{decision_classifier_forward.1} parent=1 // pred_check_branch
      %68 = sbr.rel (0) target = $region33
    $region32: #{decision_classifier_forward.1} parent=1 // pred_region
      _
    $region33: #{decision_classifier_forward.1} parent=1 // pred_fallthru
      _
    // Predicated region
    $region34: #{decision_classifier_forward.1} parent=1 // pred_check
      _
    $region35: #{decision_classifier_forward.1} parent=1 // pred_check_branch
      %70 = sbr.rel (0) target = $region37
    $region36: #{decision_classifier_forward.1} parent=1 // pred_region
      _
    $region37: #{decision_classifier_forward.1} parent=1 // pred_fallthru
      _
    // Predicated region
    $region38: #{decision_classifier_forward.1} parent=1 // pred_check
      _
    $region39: #{decision_classifier_forward.1} parent=1 // pred_check_branch
      %72 = sbr.rel (0) target = $region41
    $region40: #{decision_classifier_forward.1} parent=1 // pred_region
      _
    $region41: #{decision_classifier_forward.1} parent=1 // pred_fallthru
      _
    // Predicated region
    $region42: #{decision_classifier_forward.1} parent=1 // pred_check
      _
    $region43: #{decision_classifier_forward.1} parent=1 // pred_check_branch
      %74 = sbr.rel (0) target = $region45
    $region44: #{decision_classifier_forward.1} parent=1 // pred_region
      _
    $region45: #{decision_classifier_forward.1} parent=1 // pred_fallthru
      _
    // Predicated region
    $region46: #{decision_classifier_forward.1} parent=1 // pred_check
      _
    $region47: #{decision_classifier_forward.1} parent=1 // pred_check_branch
      %76 = sbr.rel (0) target = $region49
    $region48: #{decision_classifier_forward.1} parent=1 // pred_region
      _
    $region49: #{decision_classifier_forward.1} parent=1 // pred_fallthru
      _
    // Predicated region
    $region50: #{decision_classifier_forward.1} parent=1 // pred_check
      _
    $region51: #{decision_classifier_forward.1} parent=1 // pred_check_branch
      %78 = sbr.rel (0) target = $region53
    $region52: #{decision_classifier_forward.1} parent=1 // pred_region
      %s80 = ssub.s32 4096, 4096
      %81 = vsyncadd [#allocation10], %s80
      %s82 = sshll.u32 [#allocation9], 4
      %s83 = int_to_ptr.vmem [resolvable:$true] %s82
      %88 = dma.hbm_to_vmem [thread:$0]  %s12, 4096, %s83, [#allocation10], 64, 64, 4
    $region53: #{decision_classifier_forward.1} parent=1 // pred_fallthru
      _
    // Predicated region
    $region54: #{decision_classifier_forward.1} parent=1 // pred_check
      _
    $region55: #{decision_classifier_forward.1} parent=1 // pred_check_branch
      %90 = sbr.rel (0) target = $region57
    $region56: #{decision_classifier_forward.1} parent=1 // pred_region
      _
    $region57: #{decision_classifier_forward.1} parent=1 // pred_fallthru
      _
    // Predicated region
    $region58: #{decision_classifier_forward.1} parent=1 // pred_check
      _
    $region59: #{decision_classifier_forward.1} parent=1 // pred_check_branch
      %92 = sbr.rel (0) target = $region61
    $region60: #{decision_classifier_forward.1} parent=1 // pred_region
      _
    $region61: #{decision_classifier_forward.1} parent=1 // pred_fallthru
      _
    // Predicated region
    $region62: #{decision_classifier_forward.1} parent=1 // pred_check
      _
    $region63: #{decision_classifier_forward.1} parent=1 // pred_check_branch
      %94 = sbr.rel (0) target = $region65
    $region64: #{decision_classifier_forward.1} parent=1 // pred_region
      _
    $region65: #{decision_classifier_forward.1} parent=1 // pred_fallthru
      _
    // Predicated region
    $region66: #{decision_classifier_forward.1} parent=1 // pred_check
      _
    $region67: #{decision_classifier_forward.1} parent=1 // pred_check_branch
      %96 = sbr.rel (0) target = $region69
    $region68: #{decision_classifier_forward.1} parent=1 // pred_region
      _
    $region69: #{decision_classifier_forward.1} parent=1 // pred_fallthru
      _
    // Predicated region
    $region70: #{decision_classifier_forward.1} parent=1 // pred_check
      _
    $region71: #{decision_classifier_forward.1} parent=1 // pred_check_branch
      %98 = sbr.rel (0) target = $region73
    $region72: #{decision_classifier_forward.1} parent=1 // pred_region
      _
    $region73: #{decision_classifier_forward.1} parent=1 // pred_fallthru
      _
    // Predicated region
    $region74: #{decision_classifier_forward.1} parent=1 // pred_check
      _
    $region75: #{decision_classifier_forward.1} parent=1 // pred_check_branch
      %100 = sbr.rel (0) target = $region77
    $region76: #{decision_classifier_forward.1} parent=1 // pred_region
      %101 = dma.done [#allocation4], 16
    $region77: #{decision_classifier_forward.1} parent=1 // pred_fallthru
      _
    // Predicated region
    $region78: #{decision_classifier_forward.1} parent=1 // pred_check
      _
    $region79: #{decision_classifier_forward.1} parent=1 // pred_check_branch
      %103 = sbr.rel (0) target = $region81
    $region80: #{decision_classifier_forward.1} parent=1 // pred_region
      %104 = dma.done [#allocation7], 16
    $region81: #{decision_classifier_forward.1} parent=1 // pred_fallthru
      _
    // Predicated region
    $region82: #{decision_classifier_forward.1} parent=1 // pred_check
      _
    $region83: #{decision_classifier_forward.1} parent=1 // pred_check_branch
      %106 = sbr.rel (0) target = $region85
    $region84: #{decision_classifier_forward.1} parent=1 // pred_region
      %107 = dma.done [#allocation7], 6144
    $region85: #{decision_classifier_forward.1} parent=1 // pred_fallthru
      _
    // Predicated region
    $region86: #{decision_classifier_forward.1} parent=1 // pred_check
      _
    $region87: #{decision_classifier_forward.1} parent=1 // pred_check_branch
      %109 = sbr.rel (0) target = $region89
    $region88: #{decision_classifier_forward.1} parent=1 // pred_region
      %110 = dma.done [#allocation10], 4096
    $region89: #{decision_classifier_forward.1} parent=1 // pred_fallthru
      _
    %v112 = vld [vmem:[%s0] sm:$0xff]
    %v113 = vld [vmem:[%s0 + $0x8] sm:$0xff]
    %v114 = vld [vmem:[#allocation3] sm:$0x1]
    %v115 = vld [vmem:[#allocation6] sm:$0x1]
    %116 = vadd.xlane.f32.xlu0 %v112
    %v117 = vpop.xlane.xlu0 %116
    %118 = vadd.xlane.f32.xlu0 %v113
    %v119 = vpop.xlane.xlu0 %118
    %v120 = vrcp.pop 128.0
    %v121 = vmul.f32 %v117, %v120
    %v122 = vmul.f32 %v119, %v120
    %v123 = vsub.f32 %v112, %v121
    %v124 = vsub.f32 %v113, %v122
    %v125 = vmul.f32 %v123, %v123
    %v126 = vmul.f32 %v124, %v124
    %127 = vadd.xlane.f32.xlu0 %v125
    %v128 = vpop.xlane.xlu0 %127
    %129 = vadd.xlane.f32.xlu0 %v126
    %v130 = vpop.xlane.xlu0 %129
    %v131 = vmul.f32 %v128, %v120
    %v132 = vmul.f32 %v130, %v120
    %v133 = vadd.f32 %v131, 1e-12
    %v134 = vadd.f32 %v132, 1e-12
    %v135 = vrsqrt.pop %v133
    %v136 = vrsqrt.pop %v134
    %v137 = vmul.f32 %v123, %v135
    %v138 = vmul.f32 %v124, %v136
    %v140 = vlaneseq
    %v141 = vshrl.u32 %v140, 7
    %v142 = vsub.s32 0, %v141
    %v143 = vrot.slane %v114, %v142
    %v145 = vmul.f32 %v137, %v143
    %v146 = vmul.f32 %v138, %v143
    %v148 = vlaneseq
    %v149 = vshrl.u32 %v148, 7
    %v150 = vsub.s32 0, %v149
    %v151 = vrot.slane %v115, %v150
    %v153 = vadd.f32 %v145, %v151
    %v154 = vadd.f32 %v146, %v151
    %v155 = vld [vmem:[#allocation8] sm:$0xff]
    %v156 = vld [vmem:[#allocation8 + $0x8] sm:$0xf]
    %v157 = vld [vmem:[#allocation8 + $0xc] sm:$0xff]
    %v158 = vld [vmem:[#allocation8 + $0x14] sm:$0xf]
    %v159 = vld [vmem:[#allocation8 + $0x18] sm:$0xff]
    %v160 = vld [vmem:[#allocation8 + $0x20] sm:$0xf]
    %v161 = vld [vmem:[#allocation8 + $0x24] sm:$0xff]
    %v162 = vld [vmem:[#allocation8 + $0x2c] sm:$0xf]
    %v163 = vld [vmem:[#allocation8 + $0x30] sm:$0xff]
    %v164 = vld [vmem:[#allocation8 + $0x38] sm:$0xf]
    %v165 = vld [vmem:[#allocation8 + $0x3c] sm:$0xff]
    %v166 = vld [vmem:[#allocation8 + $0x44] sm:$0xf]
    %v167 = vld [vmem:[#allocation8 + $0x48] sm:$0xff]
    %v168 = vld [vmem:[#allocation8 + $0x50] sm:$0xf]
    %v169 = vld [vmem:[#allocation8 + $0x54] sm:$0xff]
    %v170 = vld [vmem:[#allocation8 + $0x5c] sm:$0xf]
    %v171 = vld [vmem:[#allocation8 + $0x60] sm:$0xff]
    %v172 = vld [vmem:[#allocation8 + $0x68] sm:$0xf]
    %v173 = vld [vmem:[#allocation8 + $0x6c] sm:$0xff]
    %v174 = vld [vmem:[#allocation8 + $0x74] sm:$0xf]
    %v175 = vld [vmem:[#allocation8 + $0x78] sm:$0xff]
    %v176 = vld [vmem:[#allocation8 + $0x80] sm:$0xf]
    %v177 = vld [vmem:[#allocation8 + $0x84] sm:$0xff]
    %v178 = vld [vmem:[#allocation8 + $0x8c] sm:$0xf]
    %v179 = vld [vmem:[#allocation8 + $0x90] sm:$0xff]
    %v180 = vld [vmem:[#allocation8 + $0x98] sm:$0xf]
    %v181 = vld [vmem:[#allocation8 + $0x9c] sm:$0xff]
    %v182 = vld [vmem:[#allocation8 + $0xa4] sm:$0xf]
    %v183 = vld [vmem:[#allocation8 + $0xa8] sm:$0xff]
    %v184 = vld [vmem:[#allocation8 + $0xb0] sm:$0xf]
    %v185 = vld [vmem:[#allocation8 + $0xb4] sm:$0xff]
    %v186 = vld [vmem:[#allocation8 + $0xbc] sm:$0xf]
    %v187 = vpack.c.bf16 %v154, %v153
    %v188 = vld [vmem:[%s5] sm:$0x7]
    %v190 = vlaneseq
    %v191 = vshrl.u32 %v190, 7
    %v192 = vsub.s32 0, %v191
    %v193 = vrot.slane %v188, %v192
    %v194 = vlaneseq
    %v195 = vshrl.u32 %v194, 7
    %v196 = vsub.s32 1, %v195
    %v197 = vrot.slane %v188, %v196
    %v198 = vlaneseq
    %v199 = vshrl.u32 %v198, 7
    %v200 = vsub.s32 2, %v199
    %v201 = vrot.slane %v188, %v200
    %v237 = vunpack.c.l.b16 %v155
    %v238 = vunpack.c.h.b16 %v155
    %v239 = vunpack.c.l.b16 %v156
    %v240 = vunpack.c.l.b16 %v157
    %v241 = vunpack.c.h.b16 %v157
    %v242 = vunpack.c.l.b16 %v158
    %v243 = vunpack.c.l.b16 %v159
    %v244 = vunpack.c.h.b16 %v159
    %v245 = vunpack.c.l.b16 %v160
    %v246 = vunpack.c.l.b16 %v161
    %v247 = vunpack.c.h.b16 %v161
    %v248 = vunpack.c.l.b16 %v162
    %v249 = vunpack.c.l.b16 %v163
    %v250 = vunpack.c.h.b16 %v163
    %v251 = vunpack.c.l.b16 %v164
    %v252 = vunpack.c.l.b16 %v165
    %v253 = vunpack.c.h.b16 %v165
    %v254 = vunpack.c.l.b16 %v166
    %v255 = vunpack.c.l.b16 %v167
    %v256 = vunpack.c.h.b16 %v167
    %v257 = vunpack.c.l.b16 %v168
    %v258 = vunpack.c.l.b16 %v169
    %v259 = vunpack.c.h.b16 %v169
    %v260 = vunpack.c.l.b16 %v170
    %v261 = vunpack.c.l.b16 %v171
    %v262 = vunpack.c.h.b16 %v171
    %v263 = vunpack.c.l.b16 %v172
    %v264 = vunpack.c.l.b16 %v173
    %v265 = vunpack.c.h.b16 %v173
    %v266 = vunpack.c.l.b16 %v174
    %v267 = vunpack.c.l.b16 %v175
    %v268 = vunpack.c.h.b16 %v175
    %v269 = vunpack.c.l.b16 %v176
    %v270 = vunpack.c.l.b16 %v177
    %v271 = vunpack.c.h.b16 %v177
    %v272 = vunpack.c.l.b16 %v178
    %v273 = vunpack.c.l.b16 %v179
    %v274 = vunpack.c.h.b16 %v179
    %v275 = vunpack.c.l.b16 %v180
    %v276 = vunpack.c.l.b16 %v181
    %v277 = vunpack.c.h.b16 %v181
    %v278 = vunpack.c.l.b16 %v182
    %v279 = vunpack.c.l.b16 %v183
    %v280 = vunpack.c.h.b16 %v183
    %v281 = vunpack.c.l.b16 %v184
    %v282 = vunpack.c.l.b16 %v185
    %v283 = vunpack.c.h.b16 %v185
    %v284 = vunpack.c.l.b16 %v186
    %v285 = vpack.c.b16 %v240, %v237
    %v286 = vpack.c.b16 %v241, %v238
    %v287 = vpack.c.b16 %v242, %v239
    %v288 = vpack.c.b16 %v246, %v243
    %v289 = vpack.c.b16 %v247, %v244
    %v290 = vpack.c.b16 %v248, %v245
    %v291 = vpack.c.b16 %v252, %v249
    %v292 = vpack.c.b16 %v253, %v250
    %v293 = vpack.c.b16 %v254, %v251
    %v294 = vpack.c.b16 %v258, %v255
    %v295 = vpack.c.b16 %v259, %v256
    %v296 = vpack.c.b16 %v260, %v257
    %v297 = vpack.c.b16 %v264, %v261
    %v298 = vpack.c.b16 %v265, %v262
    %v299 = vpack.c.b16 %v266, %v263
    %v300 = vpack.c.b16 %v270, %v267
    %v301 = vpack.c.b16 %v271, %v268
    %v302 = vpack.c.b16 %v272, %v269
    %v303 = vpack.c.b16 %v276, %v273
    %v304 = vpack.c.b16 %v277, %v274
    %v305 = vpack.c.b16 %v278, %v275
    %v306 = vpack.c.b16 %v282, %v279
    %v307 = vpack.c.b16 %v283, %v280
    %v308 = vpack.c.b16 %v284, %v281
    %333 = vmatprep.subr.bf16.mxu0 %v286
    %334 = vmatpush1.bf16.msra.mxu0 %v285
    %335 = vmatprep.subr.bf16.mxu0 %v289
    %336 = vmatpush1.bf16.msra.mxu0 %v288
    %337 = vmatprep.subr.bf16.mxu0 %v292
    %338 = vmatpush1.bf16.msra.mxu0 %v291
    %339 = vmatprep.subr.bf16.mxu0 %v295
    %340 = vmatpush1.bf16.msra.mxu0 %v294
    %341 = vmatprep.subr.bf16.mxu0 %v298
    %342 = vmatpush1.bf16.msra.mxu0 %v297
    %343 = vmatprep.subr.bf16.mxu0 %v301
    %344 = vmatpush1.bf16.msra.mxu0 %v300
    %345 = vmatprep.subr.bf16.mxu0 %v304
    %346 = vmatpush1.bf16.msra.mxu0 %v303
    %347 = vmatprep.subr.bf16.mxu0 %v307
    %348 = vmatpush1.bf16.msra.mxu0 %v306
    %349 = vmatprep.subr.bf16.mxu0 0
    %350 = vmatpush1.bf16.msra.mxu0 0
    %351 = vmatprep.subr.bf16.mxu0 0
    %352 = vmatpush1.bf16.msra.mxu0 0
    %353 = vmatprep.subr.bf16.mxu0 0
    %354 = vmatpush1.bf16.msra.mxu0 0
    %355 = vmatprep.subr.bf16.mxu0 0
    %356 = vmatpush1.bf16.msra.mxu0 0
    %357 = vmatprep.subr.bf16.mxu0 0
    %358 = vmatpush1.bf16.msra.mxu0 0
    %359 = vmatprep.subr.bf16.mxu0 0
    %360 = vmatpush1.bf16.msra.mxu0 0
    %361 = vmatprep.subr.bf16.mxu0 0
    %362 = vmatpush1.bf16.msra.mxu0 0
    %363 = vmatprep.subr.bf16.mxu0 0
    %364 = vmatpush1.bf16.msra.mxu0 0
    %365 = vmatprep.mubr.bf16.mxu0 0
    %366 = vmatmul.mubr.bf16.gmra.mrb[0].mxu0 %v187
    %v367 = vpop.f32.mrb[0].mxu0
    %v368 = vadd.f32 %v193, %v367
    %v369 = vpop.f32.mrb[0].mxu0
    %v370 = vadd.f32 %v197, %v369
    %v371 = vpop.f32.mrb[0].mxu0
    %v372 = vadd.f32 %v193, %v371
    %v373 = vpop.f32.mrb[0].mxu0
    %v374 = vadd.f32 %v197, %v373
    %375 = vdwg.mxu0
    %376 = vmatprep.subr.bf16.mxu0 0
    %377 = vmatpush1.bf16.msra.mxu0 %v287
    %378 = vmatprep.subr.bf16.mxu0 0
    %379 = vmatpush1.bf16.msra.mxu0 %v290
    %380 = vmatprep.subr.bf16.mxu0 0
    %381 = vmatpush1.bf16.msra.mxu0 %v293
    %382 = vmatprep.subr.bf16.mxu0 0
    %383 = vmatpush1.bf16.msra.mxu0 %v296
    %384 = vmatprep.subr.bf16.mxu0 0
    %385 = vmatpush1.bf16.msra.mxu0 %v299
    %386 = vmatprep.subr.bf16.mxu0 0
    %387 = vmatpush1.bf16.msra.mxu0 %v302
    %388 = vmatprep.subr.bf16.mxu0 0
    %389 = vmatpush1.bf16.msra.mxu0 %v305
    %390 = vmatprep.subr.bf16.mxu0 0
    %391 = vmatpush1.bf16.msra.mxu0 %v308
    %392 = vmatprep.subr.bf16.mxu0 0
    %393 = vmatpush1.bf16.msra.mxu0 0
    %394 = vmatprep.subr.bf16.mxu0 0
    %395 = vmatpush1.bf16.msra.mxu0 0
    %396 = vmatprep.subr.bf16.mxu0 0
    %397 = vmatpush1.bf16.msra.mxu0 0
    %398 = vmatprep.subr.bf16.mxu0 0
    %399 = vmatpush1.bf16.msra.mxu0 0
    %400 = vmatprep.subr.bf16.mxu0 0
    %401 = vmatpush1.bf16.msra.mxu0 0
    %402 = vmatprep.subr.bf16.mxu0 0
    %403 = vmatpush1.bf16.msra.mxu0 0
    %404 = vmatprep.subr.bf16.mxu0 0
    %405 = vmatpush1.bf16.msra.mxu0 0
    %406 = vmatprep.subr.bf16.mxu0 0
    %407 = vmatpush1.bf16.msra.mxu0 0
    %408 = vmatprep.mubr.bf16.mxu0 0
    %409 = vmatmul.mubr.bf16.gmra.mrb[0].mxu0 %v187
    %v410 = vpop.f32.mrb[0].mxu0
    %v411 = vadd.f32 %v201, %v410
    %v412 = vpop.f32.mrb[0].mxu0
    %v413 = vpop.f32.mrb[0].mxu0
    %v414 = vadd.f32 %v201, %v413
    %v415 = vpop.f32.mrb[0].mxu0
    %416 = vdwg.mxu0
    %v417 = vld [vmem:[%s1] sm:$0x1]
    %vm418 = vcmask 261120
    %v420 = vsel %vm418, %v368, 0
    %v423 = vsel %vm418, %v370, 0
    %425 = vmatprep.subr.mxu0 0.0
    %426 = vmatpush1.xpose.msra.mxu0 %v423
    %427 = vmatprep.subr.mxu0 0.0
    %428 = vmatpush1.xpose.msra.mxu0 0.0
    %429 = vmatprep.subr.mxu0 0.0
    %430 = vmatpush1.xpose.msra.mxu0 0.0
    %431 = vmatprep.subr.mxu0 0.0
    %432 = vmatpush1.xpose.msra.mxu0 0.0
    %433 = vmatprep.subr.mxu0 0.0
    %434 = vmatpush1.xpose.msra.mxu0 0.0
    %435 = vmatprep.subr.mxu0 0.0
    %436 = vmatpush1.xpose.msra.mxu0 0.0
    %437 = vmatprep.subr.mxu0 0.0
    %438 = vmatpush1.xpose.msra.mxu0 0.0
    %439 = vmatprep.subr.mxu0 0.0
    %440 = vmatpush1.xpose.msra.mxu0 0.0
    %441 = vmatprep.subr.mxu0 0.0
    %442 = vmatpush1.xpose.msra.mxu0 0.0
    %443 = vmatprep.subr.mxu0 0.0
    %444 = vmatpush1.xpose.msra.mxu0 0.0
    %445 = vmatprep.subr.mxu0 0.0
    %446 = vmatpush1.xpose.msra.mxu0 0.0
    %447 = vmatprep.subr.mxu0 0.0
    %448 = vmatpush1.xpose.msra.mxu0 0.0
    %449 = vmatprep.subr.mxu0 0.0
    %450 = vmatpush1.xpose.msra.mxu0 0.0
    %451 = vmatprep.subr.mxu0 0.0
    %452 = vmatpush1.xpose.msra.mxu0 0.0
    %453 = vmatprep.subr.mxu0 0.0
    %454 = vmatpush1.xpose.msra.mxu0 0.0
    %455 = vmatprep.subr.mxu0 0.0
    %456 = vmatpush1.xpose.msra.mxu0 0.0
    %457 = vmatprep.subr.mxu0 0.0
    %458 = vmatpush1.xpose.msra.mxu0 0.0
    %459 = vmatprep.subr.mxu0 0.0
    %460 = vmatpush1.xpose.msra.mxu0 0.0
    %461 = vmatprep.subr.mxu0 0.0
    %462 = vmatpush1.xpose.msra.mxu0 0.0
    %463 = vmatprep.subr.mxu0 0.0
    %464 = vmatpush1.xpose.msra.mxu0 0.0
    %465 = vmatprep.subr.mxu0 0.0
    %466 = vmatpush1.xpose.msra.mxu0 0.0
    %467 = vmatprep.subr.mxu0 0.0
    %468 = vmatpush1.xpose.msra.mxu0 0.0
    %469 = vmatprep.subr.mxu0 0.0
    %470 = vmatpush1.xpose.msra.mxu0 0.0
    %471 = vmatprep.subr.mxu0 0.0
    %472 = vmatpush1.xpose.msra.mxu0 0.0
    %473 = vmatprep.subr.mxu0 0.0
    %474 = vmatpush1.xpose.msra.mxu0 0.0
    %475 = vmatprep.subr.mxu0 0.0
    %476 = vmatpush1.xpose.msra.mxu0 0.0
    %477 = vmatprep.subr.mxu0 0.0
    %478 = vmatpush1.xpose.msra.mxu0 0.0
    %479 = vmatprep.subr.mxu0 0.0
    %480 = vmatpush1.xpose.msra.mxu0 0.0
    %481 = vmatprep.subr.mxu0 0.0
    %482 = vmatpush1.xpose.msra.mxu0 0.0
    %483 = vmatprep.subr.mxu0 0.0
    %484 = vmatpush1.xpose.msra.mxu0 0.0
    %485 = vmatprep.subr.mxu0 0.0
    %486 = vmatpush1.xpose.msra.mxu0 0.0
    %487 = vmatprep.subr.mxu0 0.0
    %488 = vmatpush1.xpose.msra.mxu0 0.0
    %489 = vmatprep.mubr.f32.mxu0 0.0
    %490 = vmatmul.mubr.f32.gmra.mrb[0].mxu0 %v420
    %v491 = vpop.f32.mrb[0].mxu0
    %v492 = vadd.f32 0.0, %v491
    %v493 = vpop.f32.mrb[0].mxu0
    %494 = vdwg.mxu0
    %v495 = vmul.f32 %v492, 0.17677669
    %v496 = vlaneseq
    %v497 = vshrl.u32 %v496, 7
    %v498 = vsub.s32 0, %v497
    %v499 = vrot.slane %v417, %v498
    %v500 = vadd.f32 %v495, %v499
    %vm501 = vcmask 64512
    %v502 = vsel %vm501, %v500, -inf
    %503 = vmax.xlane.f32.xlu0 %v502
    %v504 = vpop.xlane.xlu0 %503
    %v505 = vsub.f32 %v500, %v504
    %v506 = vmul.f32 %v505, 1.442695
    %v507 = vpow.pop %v506
    %v508 = vsel %vm501, %v507, 0.0
    %509 = vadd.xlane.f32.xlu0 %v508
    %v510 = vpop.xlane.xlu0 %509
    %v511 = vrcp.pop %v510
    %v512 = vmul.f32 %v507, %v511
    %v514 = vsel %vm501, %v512, 0
    %516 = vmatprep.subr.mxu0 0.0
    %517 = vmatpush1.msra.mxu0 %v411
    %518 = vmatprep.subr.mxu0 0.0
    %519 = vmatpush1.msra.mxu0 0.0
    %520 = vmatprep.subr.mxu0 0.0
    %521 = vmatpush1.msra.mxu0 0.0
    %522 = vmatprep.subr.mxu0 0.0
    %523 = vmatpush1.msra.mxu0 0.0
    %524 = vmatprep.subr.mxu0 0.0
    %525 = vmatpush1.msra.mxu0 0.0
    %526 = vmatprep.subr.mxu0 0.0
    %527 = vmatpush1.msra.mxu0 0.0
    %528 = vmatprep.subr.mxu0 0.0
    %529 = vmatpush1.msra.mxu0 0.0
    %530 = vmatprep.subr.mxu0 0.0
    %531 = vmatpush1.msra.mxu0 0.0
    %532 = vmatprep.subr.mxu0 0.0
    %533 = vmatpush1.msra.mxu0 0.0
    %534 = vmatprep.subr.mxu0 0.0
    %535 = vmatpush1.msra.mxu0 0.0
    %536 = vmatprep.subr.mxu0 0.0
    %537 = vmatpush1.msra.mxu0 0.0
    %538 = vmatprep.subr.mxu0 0.0
    %539 = vmatpush1.msra.mxu0 0.0
    %540 = vmatprep.subr.mxu0 0.0
    %541 = vmatpush1.msra.mxu0 0.0
    %542 = vmatprep.subr.mxu0 0.0
    %543 = vmatpush1.msra.mxu0 0.0
    %544 = vmatprep.subr.mxu0 0.0
    %545 = vmatpush1.msra.mxu0 0.0
    %546 = vmatprep.subr.mxu0 0.0
    %547 = vmatpush1.msra.mxu0 0.0
    %548 = vmatprep.subr.mxu0 0.0
    %549 = vmatpush1.msra.mxu0 0.0
    %550 = vmatprep.subr.mxu0 0.0
    %551 = vmatpush1.msra.mxu0 0.0
    %552 = vmatprep.subr.mxu0 0.0
    %553 = vmatpush1.msra.mxu0 0.0
    %554 = vmatprep.subr.mxu0 0.0
    %555 = vmatpush1.msra.mxu0 0.0
    %556 = vmatprep.subr.mxu0 0.0
    %557 = vmatpush1.msra.mxu0 0.0
    %558 = vmatprep.subr.mxu0 0.0
    %559 = vmatpush1.msra.mxu0 0.0
    %560 = vmatprep.subr.mxu0 0.0
    %561 = vmatpush1.msra.mxu0 0.0
    %562 = vmatprep.subr.mxu0 0.0
    %563 = vmatpush1.msra.mxu0 0.0
    %564 = vmatprep.subr.mxu0 0.0
    %565 = vmatpush1.msra.mxu0 0.0
    %566 = vmatprep.subr.mxu0 0.0
    %567 = vmatpush1.msra.mxu0 0.0
    %568 = vmatprep.subr.mxu0 0.0
    %569 = vmatpush1.msra.mxu0 0.0
    %570 = vmatprep.subr.mxu0 0.0
    %571 = vmatpush1.msra.mxu0 0.0
    %572 = vmatprep.subr.mxu0 0.0
    %573 = vmatpush1.msra.mxu0 0.0
    %574 = vmatprep.subr.mxu0 0.0
    %575 = vmatpush1.msra.mxu0 0.0
    %576 = vmatprep.subr.mxu0 0.0
    %577 = vmatpush1.msra.mxu0 0.0
    %578 = vmatprep.subr.mxu0 0.0
    %579 = vmatpush1.msra.mxu0 0.0
    %580 = vmatprep.mubr.f32.mxu0 0.0
    %581 = vmatmul.mubr.f32.gmra.mrb[0].mxu0 %v514
    %v582 = vpop.f32.mrb[0].mxu0
    %v583 = vadd.f32 0.0, %v582
    %v584 = vpop.f32.mrb[0].mxu0
    %585 = vdwg.mxu0
    %586 = vst.msk [vmem:[#allocation2] sm:$0xff] %vm418, %v583
    %587 = vrot.lane.b32.xlu0 %v368, 96
    %v588 = vpop.permute.xlu0 %587
    %589 = vrot.lane.b32.xlu0 %v370, 96
    %v590 = vpop.permute.xlu0 %589
    %v591 = vsel %vm418, %v588, 0
    %v593 = vsel %vm418, %v590, 0
    %595 = vmatprep.subr.mxu0 0.0
    %596 = vmatpush1.xpose.msra.mxu0 %v593
    %597 = vmatprep.subr.mxu0 0.0
    %598 = vmatpush1.xpose.msra.mxu0 0.0
    %599 = vmatprep.subr.mxu0 0.0
    %600 = vmatpush1.xpose.msra.mxu0 0.0
    %601 = vmatprep.subr.mxu0 0.0
    %602 = vmatpush1.xpose.msra.mxu0 0.0
    %603 = vmatprep.subr.mxu0 0.0
    %604 = vmatpush1.xpose.msra.mxu0 0.0
    %605 = vmatprep.subr.mxu0 0.0
    %606 = vmatpush1.xpose.msra.mxu0 0.0
    %607 = vmatprep.subr.mxu0 0.0
    %608 = vmatpush1.xpose.msra.mxu0 0.0
    %609 = vmatprep.subr.mxu0 0.0
    %610 = vmatpush1.xpose.msra.mxu0 0.0
    %611 = vmatprep.subr.mxu0 0.0
    %612 = vmatpush1.xpose.msra.mxu0 0.0
    %613 = vmatprep.subr.mxu0 0.0
    %614 = vmatpush1.xpose.msra.mxu0 0.0
    %615 = vmatprep.subr.mxu0 0.0
    %616 = vmatpush1.xpose.msra.mxu0 0.0
    %617 = vmatprep.subr.mxu0 0.0
    %618 = vmatpush1.xpose.msra.mxu0 0.0
    %619 = vmatprep.subr.mxu0 0.0
    %620 = vmatpush1.xpose.msra.mxu0 0.0
    %621 = vmatprep.subr.mxu0 0.0
    %622 = vmatpush1.xpose.msra.mxu0 0.0
    %623 = vmatprep.subr.mxu0 0.0
    %624 = vmatpush1.xpose.msra.mxu0 0.0
    %625 = vmatprep.subr.mxu0 0.0
    %626 = vmatpush1.xpose.msra.mxu0 0.0
    %627 = vmatprep.subr.mxu0 0.0
    %628 = vmatpush1.xpose.msra.mxu0 0.0
    %629 = vmatprep.subr.mxu0 0.0
    %630 = vmatpush1.xpose.msra.mxu0 0.0
    %631 = vmatprep.subr.mxu0 0.0
    %632 = vmatpush1.xpose.msra.mxu0 0.0
    %633 = vmatprep.subr.mxu0 0.0
    %634 = vmatpush1.xpose.msra.mxu0 0.0
    %635 = vmatprep.subr.mxu0 0.0
    %636 = vmatpush1.xpose.msra.mxu0 0.0
    %637 = vmatprep.subr.mxu0 0.0
    %638 = vmatpush1.xpose.msra.mxu0 0.0
    %639 = vmatprep.subr.mxu0 0.0
    %640 = vmatpush1.xpose.msra.mxu0 0.0
    %641 = vmatprep.subr.mxu0 0.0
    %642 = vmatpush1.xpose.msra.mxu0 0.0
    %643 = vmatprep.subr.mxu0 0.0
    %644 = vmatpush1.xpose.msra.mxu0 0.0
    %645 = vmatprep.subr.mxu0 0.0
    %646 = vmatpush1.xpose.msra.mxu0 0.0
    %647 = vmatprep.subr.mxu0 0.0
    %648 = vmatpush1.xpose.msra.mxu0 0.0
    %649 = vmatprep.subr.mxu0 0.0
    %650 = vmatpush1.xpose.msra.mxu0 0.0
    %651 = vmatprep.subr.mxu0 0.0
    %652 = vmatpush1.xpose.msra.mxu0 0.0
    %653 = vmatprep.subr.mxu0 0.0
    %654 = vmatpush1.xpose.msra.mxu0 0.0
    %655 = vmatprep.subr.mxu0 0.0
    %656 = vmatpush1.xpose.msra.mxu0 0.0
    %657 = vmatprep.subr.mxu0 0.0
    %658 = vmatpush1.xpose.msra.mxu0 0.0
    %659 = vmatprep.mubr.f32.mxu0 0.0
    %660 = vmatmul.mubr.f32.gmra.mrb[0].mxu0 %v591
    %v661 = vpop.f32.mrb[0].mxu0
    %v662 = vadd.f32 0.0, %v661
    %v663 = vpop.f32.mrb[0].mxu0
    %664 = vdwg.mxu0
    %v665 = vmul.f32 %v662, 0.17677669
    %v666 = vadd.f32 %v665, %v499
    %v667 = vsel %vm501, %v666, -inf
    %668 = vmax.xlane.f32.xlu0 %v667
    %v669 = vpop.xlane.xlu0 %668
    %v670 = vsub.f32 %v666, %v669
    %v671 = vmul.f32 %v670, 1.442695
    %v672 = vpow.pop %v671
    %v673 = vsel %vm501, %v672, 0.0
    %674 = vadd.xlane.f32.xlu0 %v673
    %v675 = vpop.xlane.xlu0 %674
    %v676 = vrcp.pop %v675
    %v677 = vmul.f32 %v672, %v676
    %679 = vrot.lane.b32.xlu0 %v411, 96
    %v680 = vpop.permute.xlu0 %679
    %v683 = vsel %vm501, %v677, 0
    %685 = vmatprep.subr.mxu0 0.0
    %686 = vmatpush1.msra.mxu0 %v680
    %687 = vmatprep.subr.mxu0 0.0
    %688 = vmatpush1.msra.mxu0 0.0
    %689 = vmatprep.subr.mxu0 0.0
    %690 = vmatpush1.msra.mxu0 0.0
    %691 = vmatprep.subr.mxu0 0.0
    %692 = vmatpush1.msra.mxu0 0.0
    %693 = vmatprep.subr.mxu0 0.0
    %694 = vmatpush1.msra.mxu0 0.0
    %695 = vmatprep.subr.mxu0 0.0
    %696 = vmatpush1.msra.mxu0 0.0
    %697 = vmatprep.subr.mxu0 0.0
    %698 = vmatpush1.msra.mxu0 0.0
    %699 = vmatprep.subr.mxu0 0.0
    %700 = vmatpush1.msra.mxu0 0.0
    %701 = vmatprep.subr.mxu0 0.0
    %702 = vmatpush1.msra.mxu0 0.0
    %703 = vmatprep.subr.mxu0 0.0
    %704 = vmatpush1.msra.mxu0 0.0
    %705 = vmatprep.subr.mxu0 0.0
    %706 = vmatpush1.msra.mxu0 0.0
    %707 = vmatprep.subr.mxu0 0.0
    %708 = vmatpush1.msra.mxu0 0.0
    %709 = vmatprep.subr.mxu0 0.0
    %710 = vmatpush1.msra.mxu0 0.0
    %711 = vmatprep.subr.mxu0 0.0
    %712 = vmatpush1.msra.mxu0 0.0
    %713 = vmatprep.subr.mxu0 0.0
    %714 = vmatpush1.msra.mxu0 0.0
    %715 = vmatprep.subr.mxu0 0.0
    %716 = vmatpush1.msra.mxu0 0.0
    %717 = vmatprep.subr.mxu0 0.0
    %718 = vmatpush1.msra.mxu0 0.0
    %719 = vmatprep.subr.mxu0 0.0
    %720 = vmatpush1.msra.mxu0 0.0
    %721 = vmatprep.subr.mxu0 0.0
    %722 = vmatpush1.msra.mxu0 0.0
    %723 = vmatprep.subr.mxu0 0.0
    %724 = vmatpush1.msra.mxu0 0.0
    %725 = vmatprep.subr.mxu0 0.0
    %726 = vmatpush1.msra.mxu0 0.0
    %727 = vmatprep.subr.mxu0 0.0
    %728 = vmatpush1.msra.mxu0 0.0
    %729 = vmatprep.subr.mxu0 0.0
    %730 = vmatpush1.msra.mxu0 0.0
    %731 = vmatprep.subr.mxu0 0.0
    %732 = vmatpush1.msra.mxu0 0.0
    %733 = vmatprep.subr.mxu0 0.0
    %734 = vmatpush1.msra.mxu0 0.0
    %735 = vmatprep.subr.mxu0 0.0
    %736 = vmatpush1.msra.mxu0 0.0
    %737 = vmatprep.subr.mxu0 0.0
    %738 = vmatpush1.msra.mxu0 0.0
    %739 = vmatprep.subr.mxu0 0.0
    %740 = vmatpush1.msra.mxu0 0.0
    %741 = vmatprep.subr.mxu0 0.0
    %742 = vmatpush1.msra.mxu0 0.0
    %743 = vmatprep.subr.mxu0 0.0
    %744 = vmatpush1.msra.mxu0 0.0
    %745 = vmatprep.subr.mxu0 0.0
    %746 = vmatpush1.msra.mxu0 0.0
    %747 = vmatprep.subr.mxu0 0.0
    %748 = vmatpush1.msra.mxu0 0.0
    %749 = vmatprep.mubr.f32.mxu0 0.0
    %750 = vmatmul.mubr.f32.gmra.mrb[0].mxu0 %v683
    %v751 = vpop.f32.mrb[0].mxu0
    %v752 = vadd.f32 0.0, %v751
    %v753 = vpop.f32.mrb[0].mxu0
    %754 = vdwg.mxu0
    %756 = vrot.lane.b32.xlu0 %v752, 32
    %v757 = vpop.permute.xlu0 %756
    %vm759 = vcmask 523520
    %760 = vst.msk [vmem:[#allocation2] sm:$0xff] %vm759, %v757
    %761 = vrot.lane.b32.xlu0 %v368, 64
    %v762 = vpop.permute.xlu0 %761
    %763 = vrot.lane.b32.xlu0 %v370, 64
    %v764 = vpop.permute.xlu0 %763
    %v765 = vsel %vm418, %v762, 0
    %v767 = vsel %vm418, %v764, 0
    %769 = vmatprep.subr.mxu0 0.0
    %770 = vmatpush1.xpose.msra.mxu0 %v767
    %771 = vmatprep.subr.mxu0 0.0
    %772 = vmatpush1.xpose.msra.mxu0 0.0
    %773 = vmatprep.subr.mxu0 0.0
    %774 = vmatpush1.xpose.msra.mxu0 0.0
    %775 = vmatprep.subr.mxu0 0.0
    %776 = vmatpush1.xpose.msra.mxu0 0.0
    %777 = vmatprep.subr.mxu0 0.0
    %778 = vmatpush1.xpose.msra.mxu0 0.0
    %779 = vmatprep.subr.mxu0 0.0
    %780 = vmatpush1.xpose.msra.mxu0 0.0
    %781 = vmatprep.subr.mxu0 0.0
    %782 = vmatpush1.xpose.msra.mxu0 0.0
    %783 = vmatprep.subr.mxu0 0.0
    %784 = vmatpush1.xpose.msra.mxu0 0.0
    %785 = vmatprep.subr.mxu0 0.0
    %786 = vmatpush1.xpose.msra.mxu0 0.0
    %787 = vmatprep.subr.mxu0 0.0
    %788 = vmatpush1.xpose.msra.mxu0 0.0
    %789 = vmatprep.subr.mxu0 0.0
    %790 = vmatpush1.xpose.msra.mxu0 0.0
    %791 = vmatprep.subr.mxu0 0.0
    %792 = vmatpush1.xpose.msra.mxu0 0.0
    %793 = vmatprep.subr.mxu0 0.0
    %794 = vmatpush1.xpose.msra.mxu0 0.0
    %795 = vmatprep.subr.mxu0 0.0
    %796 = vmatpush1.xpose.msra.mxu0 0.0
    %797 = vmatprep.subr.mxu0 0.0
    %798 = vmatpush1.xpose.msra.mxu0 0.0
    %799 = vmatprep.subr.mxu0 0.0
    %800 = vmatpush1.xpose.msra.mxu0 0.0
    %801 = vmatprep.subr.mxu0 0.0
    %802 = vmatpush1.xpose.msra.mxu0 0.0
    %803 = vmatprep.subr.mxu0 0.0
    %804 = vmatpush1.xpose.msra.mxu0 0.0
    %805 = vmatprep.subr.mxu0 0.0
    %806 = vmatpush1.xpose.msra.mxu0 0.0
    %807 = vmatprep.subr.mxu0 0.0
    %808 = vmatpush1.xpose.msra.mxu0 0.0
    %809 = vmatprep.subr.mxu0 0.0
    %810 = vmatpush1.xpose.msra.mxu0 0.0
    %811 = vmatprep.subr.mxu0 0.0
    %812 = vmatpush1.xpose.msra.mxu0 0.0
    %813 = vmatprep.subr.mxu0 0.0
    %814 = vmatpush1.xpose.msra.mxu0 0.0
    %815 = vmatprep.subr.mxu0 0.0
    %816 = vmatpush1.xpose.msra.mxu0 0.0
    %817 = vmatprep.subr.mxu0 0.0
    %818 = vmatpush1.xpose.msra.mxu0 0.0
    %819 = vmatprep.subr.mxu0 0.0
    %820 = vmatpush1.xpose.msra.mxu0 0.0
    %821 = vmatprep.subr.mxu0 0.0
    %822 = vmatpush1.xpose.msra.mxu0 0.0
    %823 = vmatprep.subr.mxu0 0.0
    %824 = vmatpush1.xpose.msra.mxu0 0.0
    %825 = vmatprep.subr.mxu0 0.0
    %826 = vmatpush1.xpose.msra.mxu0 0.0
    %827 = vmatprep.subr.mxu0 0.0
    %828 = vmatpush1.xpose.msra.mxu0 0.0
    %829 = vmatprep.subr.mxu0 0.0
    %830 = vmatpush1.xpose.msra.mxu0 0.0
    %831 = vmatprep.subr.mxu0 0.0
    %832 = vmatpush1.xpose.msra.mxu0 0.0
    %833 = vmatprep.mubr.f32.mxu0 0.0
    %834 = vmatmul.mubr.f32.gmra.mrb[0].mxu0 %v765
    %v835 = vpop.f32.mrb[0].mxu0
    %v836 = vadd.f32 0.0, %v835
    %v837 = vpop.f32.mrb[0].mxu0
    %838 = vdwg.mxu0
    %v839 = vmul.f32 %v836, 0.17677669
    %v840 = vadd.f32 %v839, %v499
    %v841 = vsel %vm501, %v840, -inf
    %842 = vmax.xlane.f32.xlu0 %v841
    %v843 = vpop.xlane.xlu0 %842
    %v844 = vsub.f32 %v840, %v843
    %v845 = vmul.f32 %v844, 1.442695
    %v846 = vpow.pop %v845
    %v847 = vsel %vm501, %v846, 0.0
    %848 = vadd.xlane.f32.xlu0 %v847
    %v849 = vpop.xlane.xlu0 %848
    %v850 = vrcp.pop %v849
    %v851 = vmul.f32 %v846, %v850
    %852 = vrot.lane.b32.xlu0 %v411, 64
    %v853 = vpop.permute.xlu0 %852
    %v856 = vsel %vm501, %v851, 0
    %858 = vmatprep.subr.mxu0 0.0
    %859 = vmatpush1.msra.mxu0 %v853
    %860 = vmatprep.subr.mxu0 0.0
    %861 = vmatpush1.msra.mxu0 0.0
    %862 = vmatprep.subr.mxu0 0.0
    %863 = vmatpush1.msra.mxu0 0.0
    %864 = vmatprep.subr.mxu0 0.0
    %865 = vmatpush1.msra.mxu0 0.0
    %866 = vmatprep.subr.mxu0 0.0
    %867 = vmatpush1.msra.mxu0 0.0
    %868 = vmatprep.subr.mxu0 0.0
    %869 = vmatpush1.msra.mxu0 0.0
    %870 = vmatprep.subr.mxu0 0.0
    %871 = vmatpush1.msra.mxu0 0.0
    %872 = vmatprep.subr.mxu0 0.0
    %873 = vmatpush1.msra.mxu0 0.0
    %874 = vmatprep.subr.mxu0 0.0
    %875 = vmatpush1.msra.mxu0 0.0
    %876 = vmatprep.subr.mxu0 0.0
    %877 = vmatpush1.msra.mxu0 0.0
    %878 = vmatprep.subr.mxu0 0.0
    %879 = vmatpush1.msra.mxu0 0.0
    %880 = vmatprep.subr.mxu0 0.0
    %881 = vmatpush1.msra.mxu0 0.0
    %882 = vmatprep.subr.mxu0 0.0
    %883 = vmatpush1.msra.mxu0 0.0
    %884 = vmatprep.subr.mxu0 0.0
    %885 = vmatpush1.msra.mxu0 0.0
    %886 = vmatprep.subr.mxu0 0.0
    %887 = vmatpush1.msra.mxu0 0.0
    %888 = vmatprep.subr.mxu0 0.0
    %889 = vmatpush1.msra.mxu0 0.0
    %890 = vmatprep.subr.mxu0 0.0
    %891 = vmatpush1.msra.mxu0 0.0
    %892 = vmatprep.subr.mxu0 0.0
    %893 = vmatpush1.msra.mxu0 0.0
    %894 = vmatprep.subr.mxu0 0.0
    %895 = vmatpush1.msra.mxu0 0.0
    %896 = vmatprep.subr.mxu0 0.0
    %897 = vmatpush1.msra.mxu0 0.0
    %898 = vmatprep.subr.mxu0 0.0
    %899 = vmatpush1.msra.mxu0 0.0
    %900 = vmatprep.subr.mxu0 0.0
    %901 = vmatpush1.msra.mxu0 0.0
    %902 = vmatprep.subr.mxu0 0.0
    %903 = vmatpush1.msra.mxu0 0.0
    %904 = vmatprep.subr.mxu0 0.0
    %905 = vmatpush1.msra.mxu0 0.0
    %906 = vmatprep.subr.mxu0 0.0
    %907 = vmatpush1.msra.mxu0 0.0
    %908 = vmatprep.subr.mxu0 0.0
    %909 = vmatpush1.msra.mxu0 0.0
    %910 = vmatprep.subr.mxu0 0.0
    %911 = vmatpush1.msra.mxu0 0.0
    %912 = vmatprep.subr.mxu0 0.0
    %913 = vmatpush1.msra.mxu0 0.0
    %914 = vmatprep.subr.mxu0 0.0
    %915 = vmatpush1.msra.mxu0 0.0
    %916 = vmatprep.subr.mxu0 0.0
    %917 = vmatpush1.msra.mxu0 0.0
    %918 = vmatprep.subr.mxu0 0.0
    %919 = vmatpush1.msra.mxu0 0.0
    %920 = vmatprep.subr.mxu0 0.0
    %921 = vmatpush1.msra.mxu0 0.0
    %922 = vmatprep.mubr.f32.mxu0 0.0
    %923 = vmatmul.mubr.f32.gmra.mrb[0].mxu0 %v856
    %v924 = vpop.f32.mrb[0].mxu0
    %v925 = vadd.f32 0.0, %v924
    %v926 = vpop.f32.mrb[0].mxu0
    %927 = vdwg.mxu0
    %929 = vrot.lane.b32.xlu0 %v925, 64
    %v930 = vpop.permute.xlu0 %929
    %vm932 = vcmask 785920
    %933 = vst.msk [vmem:[#allocation2] sm:$0xff] %vm932, %v930
    %934 = vrot.lane.b32.xlu0 %v368, 32
    %v935 = vpop.permute.xlu0 %934
    %936 = vrot.lane.b32.xlu0 %v370, 32
    %v937 = vpop.permute.xlu0 %936
    %v938 = vsel %vm418, %v935, 0
    %v940 = vsel %vm418, %v937, 0
    %942 = vmatprep.subr.mxu0 0.0
    %943 = vmatpush1.xpose.msra.mxu0 %v940
    %944 = vmatprep.subr.mxu0 0.0
    %945 = vmatpush1.xpose.msra.mxu0 0.0
    %946 = vmatprep.subr.mxu0 0.0
    %947 = vmatpush1.xpose.msra.mxu0 0.0
    %948 = vmatprep.subr.mxu0 0.0
    %949 = vmatpush1.xpose.msra.mxu0 0.0
    %950 = vmatprep.subr.mxu0 0.0
    %951 = vmatpush1.xpose.msra.mxu0 0.0
    %952 = vmatprep.subr.mxu0 0.0
    %953 = vmatpush1.xpose.msra.mxu0 0.0
    %954 = vmatprep.subr.mxu0 0.0
    %955 = vmatpush1.xpose.msra.mxu0 0.0
    %956 = vmatprep.subr.mxu0 0.0
    %957 = vmatpush1.xpose.msra.mxu0 0.0
    %958 = vmatprep.subr.mxu0 0.0
    %959 = vmatpush1.xpose.msra.mxu0 0.0
    %960 = vmatprep.subr.mxu0 0.0
    %961 = vmatpush1.xpose.msra.mxu0 0.0
    %962 = vmatprep.subr.mxu0 0.0
    %963 = vmatpush1.xpose.msra.mxu0 0.0
    %964 = vmatprep.subr.mxu0 0.0
    %965 = vmatpush1.xpose.msra.mxu0 0.0
    %966 = vmatprep.subr.mxu0 0.0
    %967 = vmatpush1.xpose.msra.mxu0 0.0
    %968 = vmatprep.subr.mxu0 0.0
    %969 = vmatpush1.xpose.msra.mxu0 0.0
    %970 = vmatprep.subr.mxu0 0.0
    %971 = vmatpush1.xpose.msra.mxu0 0.0
    %972 = vmatprep.subr.mxu0 0.0
    %973 = vmatpush1.xpose.msra.mxu0 0.0
    %974 = vmatprep.subr.mxu0 0.0
    %975 = vmatpush1.xpose.msra.mxu0 0.0
    %976 = vmatprep.subr.mxu0 0.0
    %977 = vmatpush1.xpose.msra.mxu0 0.0
    %978 = vmatprep.subr.mxu0 0.0
    %979 = vmatpush1.xpose.msra.mxu0 0.0
    %980 = vmatprep.subr.mxu0 0.0
    %981 = vmatpush1.xpose.msra.mxu0 0.0
    %982 = vmatprep.subr.mxu0 0.0
    %983 = vmatpush1.xpose.msra.mxu0 0.0
    %984 = vmatprep.subr.mxu0 0.0
    %985 = vmatpush1.xpose.msra.mxu0 0.0
    %986 = vmatprep.subr.mxu0 0.0
    %987 = vmatpush1.xpose.msra.mxu0 0.0
    %988 = vmatprep.subr.mxu0 0.0
    %989 = vmatpush1.xpose.msra.mxu0 0.0
    %990 = vmatprep.subr.mxu0 0.0
    %991 = vmatpush1.xpose.msra.mxu0 0.0
    %992 = vmatprep.subr.mxu0 0.0
    %993 = vmatpush1.xpose.msra.mxu0 0.0
    %994 = vmatprep.subr.mxu0 0.0
    %995 = vmatpush1.xpose.msra.mxu0 0.0
    %996 = vmatprep.subr.mxu0 0.0
    %997 = vmatpush1.xpose.msra.mxu0 0.0
    %998 = vmatprep.subr.mxu0 0.0
    %999 = vmatpush1.xpose.msra.mxu0 0.0
    %1000 = vmatprep.subr.mxu0 0.0
    %1001 = vmatpush1.xpose.msra.mxu0 0.0
    %1002 = vmatprep.subr.mxu0 0.0
    %1003 = vmatpush1.xpose.msra.mxu0 0.0
    %1004 = vmatprep.subr.mxu0 0.0
    %1005 = vmatpush1.xpose.msra.mxu0 0.0
    %1006 = vmatprep.mubr.f32.mxu0 0.0
    %1007 = vmatmul.mubr.f32.gmra.mrb[0].mxu0 %v938
    %v1008 = vpop.f32.mrb[0].mxu0
    %v1009 = vadd.f32 0.0, %v1008
    %v1010 = vpop.f32.mrb[0].mxu0
    %1011 = vdwg.mxu0
    %v1012 = vmul.f32 %v1009, 0.17677669
    %v1013 = vadd.f32 %v1012, %v499
    %v1014 = vsel %vm501, %v1013, -inf
    %1015 = vmax.xlane.f32.xlu0 %v1014
    %v1016 = vpop.xlane.xlu0 %1015
    %v1017 = vsub.f32 %v1013, %v1016
    %v1018 = vmul.f32 %v1017, 1.442695
    %v1019 = vpow.pop %v1018
    %v1020 = vsel %vm501, %v1019, 0.0
    %1021 = vadd.xlane.f32.xlu0 %v1020
    %v1022 = vpop.xlane.xlu0 %1021
    %v1023 = vrcp.pop %v1022
    %v1024 = vmul.f32 %v1019, %v1023
    %1025 = vrot.lane.b32.xlu0 %v411, 32
    %v1026 = vpop.permute.xlu0 %1025
    %v1029 = vsel %vm501, %v1024, 0
    %1031 = vmatprep.subr.mxu0 0.0
    %1032 = vmatpush1.msra.mxu0 %v1026
    %1033 = vmatprep.subr.mxu0 0.0
    %1034 = vmatpush1.msra.mxu0 0.0
    %1035 = vmatprep.subr.mxu0 0.0
    %1036 = vmatpush1.msra.mxu0 0.0
    %1037 = vmatprep.subr.mxu0 0.0
    %1038 = vmatpush1.msra.mxu0 0.0
    %1039 = vmatprep.subr.mxu0 0.0
    %1040 = vmatpush1.msra.mxu0 0.0
    %1041 = vmatprep.subr.mxu0 0.0
    %1042 = vmatpush1.msra.mxu0 0.0
    %1043 = vmatprep.subr.mxu0 0.0
    %1044 = vmatpush1.msra.mxu0 0.0
    %1045 = vmatprep.subr.mxu0 0.0
    %1046 = vmatpush1.msra.mxu0 0.0
    %1047 = vmatprep.subr.mxu0 0.0
    %1048 = vmatpush1.msra.mxu0 0.0
    %1049 = vmatprep.subr.mxu0 0.0
    %1050 = vmatpush1.msra.mxu0 0.0
    %1051 = vmatprep.subr.mxu0 0.0
    %1052 = vmatpush1.msra.mxu0 0.0
    %1053 = vmatprep.subr.mxu0 0.0
    %1054 = vmatpush1.msra.mxu0 0.0
    %1055 = vmatprep.subr.mxu0 0.0
    %1056 = vmatpush1.msra.mxu0 0.0
    %1057 = vmatprep.subr.mxu0 0.0
    %1058 = vmatpush1.msra.mxu0 0.0
    %1059 = vmatprep.subr.mxu0 0.0
    %1060 = vmatpush1.msra.mxu0 0.0
    %1061 = vmatprep.subr.mxu0 0.0
    %1062 = vmatpush1.msra.mxu0 0.0
    %1063 = vmatprep.subr.mxu0 0.0
    %1064 = vmatpush1.msra.mxu0 0.0
    %1065 = vmatprep.subr.mxu0 0.0
    %1066 = vmatpush1.msra.mxu0 0.0
    %1067 = vmatprep.subr.mxu0 0.0
    %1068 = vmatpush1.msra.mxu0 0.0
    %1069 = vmatprep.subr.mxu0 0.0
    %1070 = vmatpush1.msra.mxu0 0.0
    %1071 = vmatprep.subr.mxu0 0.0
    %1072 = vmatpush1.msra.mxu0 0.0
    %1073 = vmatprep.subr.mxu0 0.0
    %1074 = vmatpush1.msra.mxu0 0.0
    %1075 = vmatprep.subr.mxu0 0.0
    %1076 = vmatpush1.msra.mxu0 0.0
    %1077 = vmatprep.subr.mxu0 0.0
    %1078 = vmatpush1.msra.mxu0 0.0
    %1079 = vmatprep.subr.mxu0 0.0
    %1080 = vmatpush1.msra.mxu0 0.0
    %1081 = vmatprep.subr.mxu0 0.0
    %1082 = vmatpush1.msra.mxu0 0.0
    %1083 = vmatprep.subr.mxu0 0.0
    %1084 = vmatpush1.msra.mxu0 0.0
    %1085 = vmatprep.subr.mxu0 0.0
    %1086 = vmatpush1.msra.mxu0 0.0
    %1087 = vmatprep.subr.mxu0 0.0
    %1088 = vmatpush1.msra.mxu0 0.0
    %1089 = vmatprep.subr.mxu0 0.0
    %1090 = vmatpush1.msra.mxu0 0.0
    %1091 = vmatprep.subr.mxu0 0.0
    %1092 = vmatpush1.msra.mxu0 0.0
    %1093 = vmatprep.subr.mxu0 0.0
    %1094 = vmatpush1.msra.mxu0 0.0
    %1095 = vmatprep.mubr.f32.mxu0 0.0
    %1096 = vmatmul.mubr.f32.gmra.mrb[0].mxu0 %v1029
    %v1097 = vpop.f32.mrb[0].mxu0
    %v1098 = vadd.f32 0.0, %v1097
    %v1099 = vpop.f32.mrb[0].mxu0
    %1100 = vdwg.mxu0
    %1102 = vrot.lane.b32.xlu0 %v1098, 96
    %v1103 = vpop.permute.xlu0 %1102
    %vm1105 = vcmask 1048320
    %1106 = vst.msk [vmem:[#allocation2] sm:$0xff] %vm1105, %v1103
    %v1107 = vld [vmem:[%s1 + $0x1] sm:$0x1]
    %v1109 = vsel %vm418, %v372, 0
    %v1112 = vsel %vm418, %v374, 0
    %1114 = vmatprep.subr.mxu0 0.0
    %1115 = vmatpush1.xpose.msra.mxu0 %v1112
    %1116 = vmatprep.subr.mxu0 0.0
    %1117 = vmatpush1.xpose.msra.mxu0 0.0
    %1118 = vmatprep.subr.mxu0 0.0
    %1119 = vmatpush1.xpose.msra.mxu0 0.0
    %1120 = vmatprep.subr.mxu0 0.0
    %1121 = vmatpush1.xpose.msra.mxu0 0.0
    %1122 = vmatprep.subr.mxu0 0.0
    %1123 = vmatpush1.xpose.msra.mxu0 0.0
    %1124 = vmatprep.subr.mxu0 0.0
    %1125 = vmatpush1.xpose.msra.mxu0 0.0
    %1126 = vmatprep.subr.mxu0 0.0
    %1127 = vmatpush1.xpose.msra.mxu0 0.0
    %1128 = vmatprep.subr.mxu0 0.0
    %1129 = vmatpush1.xpose.msra.mxu0 0.0
    %1130 = vmatprep.subr.mxu0 0.0
    %1131 = vmatpush1.xpose.msra.mxu0 0.0
    %1132 = vmatprep.subr.mxu0 0.0
    %1133 = vmatpush1.xpose.msra.mxu0 0.0
    %1134 = vmatprep.subr.mxu0 0.0
    %1135 = vmatpush1.xpose.msra.mxu0 0.0
    %1136 = vmatprep.subr.mxu0 0.0
    %1137 = vmatpush1.xpose.msra.mxu0 0.0
    %1138 = vmatprep.subr.mxu0 0.0
    %1139 = vmatpush1.xpose.msra.mxu0 0.0
    %1140 = vmatprep.subr.mxu0 0.0
    %1141 = vmatpush1.xpose.msra.mxu0 0.0
    %1142 = vmatprep.subr.mxu0 0.0
    %1143 = vmatpush1.xpose.msra.mxu0 0.0
    %1144 = vmatprep.subr.mxu0 0.0
    %1145 = vmatpush1.xpose.msra.mxu0 0.0
    %1146 = vmatprep.subr.mxu0 0.0
    %1147 = vmatpush1.xpose.msra.mxu0 0.0
    %1148 = vmatprep.subr.mxu0 0.0
    %1149 = vmatpush1.xpose.msra.mxu0 0.0
    %1150 = vmatprep.subr.mxu0 0.0
    %1151 = vmatpush1.xpose.msra.mxu0 0.0
    %1152 = vmatprep.subr.mxu0 0.0
    %1153 = vmatpush1.xpose.msra.mxu0 0.0
    %1154 = vmatprep.subr.mxu0 0.0
    %1155 = vmatpush1.xpose.msra.mxu0 0.0
    %1156 = vmatprep.subr.mxu0 0.0
    %1157 = vmatpush1.xpose.msra.mxu0 0.0
    %1158 = vmatprep.subr.mxu0 0.0
    %1159 = vmatpush1.xpose.msra.mxu0 0.0
    %1160 = vmatprep.subr.mxu0 0.0
    %1161 = vmatpush1.xpose.msra.mxu0 0.0
    %1162 = vmatprep.subr.mxu0 0.0
    %1163 = vmatpush1.xpose.msra.mxu0 0.0
    %1164 = vmatprep.subr.mxu0 0.0
    %1165 = vmatpush1.xpose.msra.mxu0 0.0
    %1166 = vmatprep.subr.mxu0 0.0
    %1167 = vmatpush1.xpose.msra.mxu0 0.0
    %1168 = vmatprep.subr.mxu0 0.0
    %1169 = vmatpush1.xpose.msra.mxu0 0.0
    %1170 = vmatprep.subr.mxu0 0.0
    %1171 = vmatpush1.xpose.msra.mxu0 0.0
    %1172 = vmatprep.subr.mxu0 0.0
    %1173 = vmatpush1.xpose.msra.mxu0 0.0
    %1174 = vmatprep.subr.mxu0 0.0
    %1175 = vmatpush1.xpose.msra.mxu0 0.0
    %1176 = vmatprep.subr.mxu0 0.0
    %1177 = vmatpush1.xpose.msra.mxu0 0.0
    %1178 = vmatprep.mubr.f32.mxu0 0.0
    %1179 = vmatmul.mubr.f32.gmra.mrb[0].mxu0 %v1109
    %v1180 = vpop.f32.mrb[0].mxu0
    %v1181 = vadd.f32 0.0, %v1180
    %v1182 = vpop.f32.mrb[0].mxu0
    %1183 = vdwg.mxu0
    %v1184 = vmul.f32 %v1181, 0.17677669
    %v1185 = vlaneseq
    %v1186 = vshrl.u32 %v1185, 7
    %v1187 = vsub.s32 0, %v1186
    %v1188 = vrot.slane %v1107, %v1187
    %v1189 = vadd.f32 %v1184, %v1188
    %v1190 = vsel %vm501, %v1189, -inf
    %1191 = vmax.xlane.f32.xlu0 %v1190
    %v1192 = vpop.xlane.xlu0 %1191
    %v1193 = vsub.f32 %v1189, %v1192
    %v1194 = vmul.f32 %v1193, 1.442695
    %v1195 = vpow.pop %v1194
    %v1196 = vsel %vm501, %v1195, 0.0
    %1197 = vadd.xlane.f32.xlu0 %v1196
    %v1198 = vpop.xlane.xlu0 %1197
    %v1199 = vrcp.pop %v1198
    %v1200 = vmul.f32 %v1195, %v1199
    %v1202 = vsel %vm501, %v1200, 0
    %1204 = vmatprep.subr.mxu0 0.0
    %1205 = vmatpush1.msra.mxu0 %v414
    %1206 = vmatprep.subr.mxu0 0.0
    %1207 = vmatpush1.msra.mxu0 0.0
    %1208 = vmatprep.subr.mxu0 0.0
    %1209 = vmatpush1.msra.mxu0 0.0
    %1210 = vmatprep.subr.mxu0 0.0
    %1211 = vmatpush1.msra.mxu0 0.0
    %1212 = vmatprep.subr.mxu0 0.0
    %1213 = vmatpush1.msra.mxu0 0.0
    %1214 = vmatprep.subr.mxu0 0.0
    %1215 = vmatpush1.msra.mxu0 0.0
    %1216 = vmatprep.subr.mxu0 0.0
    %1217 = vmatpush1.msra.mxu0 0.0
    %1218 = vmatprep.subr.mxu0 0.0
    %1219 = vmatpush1.msra.mxu0 0.0
    %1220 = vmatprep.subr.mxu0 0.0
    %1221 = vmatpush1.msra.mxu0 0.0
    %1222 = vmatprep.subr.mxu0 0.0
    %1223 = vmatpush1.msra.mxu0 0.0
    %1224 = vmatprep.subr.mxu0 0.0
    %1225 = vmatpush1.msra.mxu0 0.0
    %1226 = vmatprep.subr.mxu0 0.0
    %1227 = vmatpush1.msra.mxu0 0.0
    %1228 = vmatprep.subr.mxu0 0.0
    %1229 = vmatpush1.msra.mxu0 0.0
    %1230 = vmatprep.subr.mxu0 0.0
    %1231 = vmatpush1.msra.mxu0 0.0
    %1232 = vmatprep.subr.mxu0 0.0
    %1233 = vmatpush1.msra.mxu0 0.0
    %1234 = vmatprep.subr.mxu0 0.0
    %1235 = vmatpush1.msra.mxu0 0.0
    %1236 = vmatprep.subr.mxu0 0.0
    %1237 = vmatpush1.msra.mxu0 0.0
    %1238 = vmatprep.subr.mxu0 0.0
    %1239 = vmatpush1.msra.mxu0 0.0
    %1240 = vmatprep.subr.mxu0 0.0
    %1241 = vmatpush1.msra.mxu0 0.0
    %1242 = vmatprep.subr.mxu0 0.0
    %1243 = vmatpush1.msra.mxu0 0.0
    %1244 = vmatprep.subr.mxu0 0.0
    %1245 = vmatpush1.msra.mxu0 0.0
    %1246 = vmatprep.subr.mxu0 0.0
    %1247 = vmatpush1.msra.mxu0 0.0
    %1248 = vmatprep.subr.mxu0 0.0
    %1249 = vmatpush1.msra.mxu0 0.0
    %1250 = vmatprep.subr.mxu0 0.0
    %1251 = vmatpush1.msra.mxu0 0.0
    %1252 = vmatprep.subr.mxu0 0.0
    %1253 = vmatpush1.msra.mxu0 0.0
    %1254 = vmatprep.subr.mxu0 0.0
    %1255 = vmatpush1.msra.mxu0 0.0
    %1256 = vmatprep.subr.mxu0 0.0
    %1257 = vmatpush1.msra.mxu0 0.0
    %1258 = vmatprep.subr.mxu0 0.0
    %1259 = vmatpush1.msra.mxu0 0.0
    %1260 = vmatprep.subr.mxu0 0.0
    %1261 = vmatpush1.msra.mxu0 0.0
    %1262 = vmatprep.subr.mxu0 0.0
    %1263 = vmatpush1.msra.mxu0 0.0
    %1264 = vmatprep.subr.mxu0 0.0
    %1265 = vmatpush1.msra.mxu0 0.0
    %1266 = vmatprep.subr.mxu0 0.0
    %1267 = vmatpush1.msra.mxu0 0.0
    %1268 = vmatprep.mubr.f32.mxu0 0.0
    %1269 = vmatmul.mubr.f32.gmra.mrb[0].mxu0 %v1202
    %v1270 = vpop.f32.mrb[0].mxu0
    %v1271 = vadd.f32 0.0, %v1270
    %v1272 = vpop.f32.mrb[0].mxu0
    %1273 = vdwg.mxu0
    %1274 = vst.msk [vmem:[#allocation2 + $0x8] sm:$0xff] %vm418, %v1271
    %1275 = vrot.lane.b32.xlu0 %v372, 96
    %v1276 = vpop.permute.xlu0 %1275
    %1277 = vrot.lane.b32.xlu0 %v374, 96
    %v1278 = vpop.permute.xlu0 %1277
    %v1279 = vsel %vm418, %v1276, 0
    %v1281 = vsel %vm418, %v1278, 0
    %1283 = vmatprep.subr.mxu0 0.0
    %1284 = vmatpush1.xpose.msra.mxu0 %v1281
    %1285 = vmatprep.subr.mxu0 0.0
    %1286 = vmatpush1.xpose.msra.mxu0 0.0
    %1287 = vmatprep.subr.mxu0 0.0
    %1288 = vmatpush1.xpose.msra.mxu0 0.0
    %1289 = vmatprep.subr.mxu0 0.0
    %1290 = vmatpush1.xpose.msra.mxu0 0.0
    %1291 = vmatprep.subr.mxu0 0.0
    %1292 = vmatpush1.xpose.msra.mxu0 0.0
    %1293 = vmatprep.subr.mxu0 0.0
    %1294 = vmatpush1.xpose.msra.mxu0 0.0
    %1295 = vmatprep.subr.mxu0 0.0
    %1296 = vmatpush1.xpose.msra.mxu0 0.0
    %1297 = vmatprep.subr.mxu0 0.0
    %1298 = vmatpush1.xpose.msra.mxu0 0.0
    %1299 = vmatprep.subr.mxu0 0.0
    %1300 = vmatpush1.xpose.msra.mxu0 0.0
    %1301 = vmatprep.subr.mxu0 0.0
    %1302 = vmatpush1.xpose.msra.mxu0 0.0
    %1303 = vmatprep.subr.mxu0 0.0
    %1304 = vmatpush1.xpose.msra.mxu0 0.0
    %1305 = vmatprep.subr.mxu0 0.0
    %1306 = vmatpush1.xpose.msra.mxu0 0.0
    %1307 = vmatprep.subr.mxu0 0.0
    %1308 = vmatpush1.xpose.msra.mxu0 0.0
    %1309 = vmatprep.subr.mxu0 0.0
    %1310 = vmatpush1.xpose.msra.mxu0 0.0
    %1311 = vmatprep.subr.mxu0 0.0
    %1312 = vmatpush1.xpose.msra.mxu0 0.0
    %1313 = vmatprep.subr.mxu0 0.0
    %1314 = vmatpush1.xpose.msra.mxu0 0.0
    %1315 = vmatprep.subr.mxu0 0.0
    %1316 = vmatpush1.xpose.msra.mxu0 0.0
    %1317 = vmatprep.subr.mxu0 0.0
    %1318 = vmatpush1.xpose.msra.mxu0 0.0
    %1319 = vmatprep.subr.mxu0 0.0
    %1320 = vmatpush1.xpose.msra.mxu0 0.0
    %1321 = vmatprep.subr.mxu0 0.0
    %1322 = vmatpush1.xpose.msra.mxu0 0.0
    %1323 = vmatprep.subr.mxu0 0.0
    %1324 = vmatpush1.xpose.msra.mxu0 0.0
    %1325 = vmatprep.subr.mxu0 0.0
    %1326 = vmatpush1.xpose.msra.mxu0 0.0
    %1327 = vmatprep.subr.mxu0 0.0
    %1328 = vmatpush1.xpose.msra.mxu0 0.0
    %1329 = vmatprep.subr.mxu0 0.0
    %1330 = vmatpush1.xpose.msra.mxu0 0.0
    %1331 = vmatprep.subr.mxu0 0.0
    %1332 = vmatpush1.xpose.msra.mxu0 0.0
    %1333 = vmatprep.subr.mxu0 0.0
    %1334 = vmatpush1.xpose.msra.mxu0 0.0
    %1335 = vmatprep.subr.mxu0 0.0
    %1336 = vmatpush1.xpose.msra.mxu0 0.0
    %1337 = vmatprep.subr.mxu0 0.0
    %1338 = vmatpush1.xpose.msra.mxu0 0.0
    %1339 = vmatprep.subr.mxu0 0.0
    %1340 = vmatpush1.xpose.msra.mxu0 0.0
    %1341 = vmatprep.subr.mxu0 0.0
    %1342 = vmatpush1.xpose.msra.mxu0 0.0
    %1343 = vmatprep.subr.mxu0 0.0
    %1344 = vmatpush1.xpose.msra.mxu0 0.0
    %1345 = vmatprep.subr.mxu0 0.0
    %1346 = vmatpush1.xpose.msra.mxu0 0.0
    %1347 = vmatprep.mubr.f32.mxu0 0.0
    %1348 = vmatmul.mubr.f32.gmra.mrb[0].mxu0 %v1279
    %v1349 = vpop.f32.mrb[0].mxu0
    %v1350 = vadd.f32 0.0, %v1349
    %v1351 = vpop.f32.mrb[0].mxu0
    %1352 = vdwg.mxu0
    %v1353 = vmul.f32 %v1350, 0.17677669
    %v1354 = vadd.f32 %v1353, %v1188
    %v1355 = vsel %vm501, %v1354, -inf
    %1356 = vmax.xlane.f32.xlu0 %v1355
    %v1357 = vpop.xlane.xlu0 %1356
    %v1358 = vsub.f32 %v1354, %v1357
    %v1359 = vmul.f32 %v1358, 1.442695
    %v1360 = vpow.pop %v1359
    %v1361 = vsel %vm501, %v1360, 0.0
    %1362 = vadd.xlane.f32.xlu0 %v1361
    %v1363 = vpop.xlane.xlu0 %1362
    %v1364 = vrcp.pop %v1363
    %v1365 = vmul.f32 %v1360, %v1364
    %1367 = vrot.lane.b32.xlu0 %v414, 96
    %v1368 = vpop.permute.xlu0 %1367
    %v1371 = vsel %vm501, %v1365, 0
    %1373 = vmatprep.subr.mxu0 0.0
    %1374 = vmatpush1.msra.mxu0 %v1368
    %1375 = vmatprep.subr.mxu0 0.0
    %1376 = vmatpush1.msra.mxu0 0.0
    %1377 = vmatprep.subr.mxu0 0.0
    %1378 = vmatpush1.msra.mxu0 0.0
    %1379 = vmatprep.subr.mxu0 0.0
    %1380 = vmatpush1.msra.mxu0 0.0
    %1381 = vmatprep.subr.mxu0 0.0
    %1382 = vmatpush1.msra.mxu0 0.0
    %1383 = vmatprep.subr.mxu0 0.0
    %1384 = vmatpush1.msra.mxu0 0.0
    %1385 = vmatprep.subr.mxu0 0.0
    %1386 = vmatpush1.msra.mxu0 0.0
    %1387 = vmatprep.subr.mxu0 0.0
    %1388 = vmatpush1.msra.mxu0 0.0
    %1389 = vmatprep.subr.mxu0 0.0
    %1390 = vmatpush1.msra.mxu0 0.0
    %1391 = vmatprep.subr.mxu0 0.0
    %1392 = vmatpush1.msra.mxu0 0.0
    %1393 = vmatprep.subr.mxu0 0.0
    %1394 = vmatpush1.msra.mxu0 0.0
    %1395 = vmatprep.subr.mxu0 0.0
    %1396 = vmatpush1.msra.mxu0 0.0
    %1397 = vmatprep.subr.mxu0 0.0
    %1398 = vmatpush1.msra.mxu0 0.0
    %1399 = vmatprep.subr.mxu0 0.0
    %1400 = vmatpush1.msra.mxu0 0.0
    %1401 = vmatprep.subr.mxu0 0.0
    %1402 = vmatpush1.msra.mxu0 0.0
    %1403 = vmatprep.subr.mxu0 0.0
    %1404 = vmatpush1.msra.mxu0 0.0
    %1405 = vmatprep.subr.mxu0 0.0
    %1406 = vmatpush1.msra.mxu0 0.0
    %1407 = vmatprep.subr.mxu0 0.0
    %1408 = vmatpush1.msra.mxu0 0.0
    %1409 = vmatprep.subr.mxu0 0.0
    %1410 = vmatpush1.msra.mxu0 0.0
    %1411 = vmatprep.subr.mxu0 0.0
    %1412 = vmatpush1.msra.mxu0 0.0
    %1413 = vmatprep.subr.mxu0 0.0
    %1414 = vmatpush1.msra.mxu0 0.0
    %1415 = vmatprep.subr.mxu0 0.0
    %1416 = vmatpush1.msra.mxu0 0.0
    %1417 = vmatprep.subr.mxu0 0.0
    %1418 = vmatpush1.msra.mxu0 0.0
    %1419 = vmatprep.subr.mxu0 0.0
    %1420 = vmatpush1.msra.mxu0 0.0
    %1421 = vmatprep.subr.mxu0 0.0
    %1422 = vmatpush1.msra.mxu0 0.0
    %1423 = vmatprep.subr.mxu0 0.0
    %1424 = vmatpush1.msra.mxu0 0.0
    %1425 = vmatprep.subr.mxu0 0.0
    %1426 = vmatpush1.msra.mxu0 0.0
    %1427 = vmatprep.subr.mxu0 0.0
    %1428 = vmatpush1.msra.mxu0 0.0
    %1429 = vmatprep.subr.mxu0 0.0
    %1430 = vmatpush1.msra.mxu0 0.0
    %1431 = vmatprep.subr.mxu0 0.0
    %1432 = vmatpush1.msra.mxu0 0.0
    %1433 = vmatprep.subr.mxu0 0.0
    %1434 = vmatpush1.msra.mxu0 0.0
    %1435 = vmatprep.subr.mxu0 0.0
    %1436 = vmatpush1.msra.mxu0 0.0
    %1437 = vmatprep.mubr.f32.mxu0 0.0
    %1438 = vmatmul.mubr.f32.gmra.mrb[0].mxu0 %v1371
    %v1439 = vpop.f32.mrb[0].mxu0
    %v1440 = vadd.f32 0.0, %v1439
    %v1441 = vpop.f32.mrb[0].mxu0
    %1442 = vdwg.mxu0
    %1444 = vrot.lane.b32.xlu0 %v1440, 32
    %v1445 = vpop.permute.xlu0 %1444
    %1447 = vst.msk [vmem:[#allocation2 + $0x8] sm:$0xff] %vm759, %v1445
    %1448 = vrot.lane.b32.xlu0 %v372, 64
    %v1449 = vpop.permute.xlu0 %1448
    %1450 = vrot.lane.b32.xlu0 %v374, 64
    %v1451 = vpop.permute.xlu0 %1450
    %v1452 = vsel %vm418, %v1449, 0
    %v1454 = vsel %vm418, %v1451, 0
    %1456 = vmatprep.subr.mxu0 0.0
    %1457 = vmatpush1.xpose.msra.mxu0 %v1454
    %1458 = vmatprep.subr.mxu0 0.0
    %1459 = vmatpush1.xpose.msra.mxu0 0.0
    %1460 = vmatprep.subr.mxu0 0.0
    %1461 = vmatpush1.xpose.msra.mxu0 0.0
    %1462 = vmatprep.subr.mxu0 0.0
    %1463 = vmatpush1.xpose.msra.mxu0 0.0
    %1464 = vmatprep.subr.mxu0 0.0
    %1465 = vmatpush1.xpose.msra.mxu0 0.0
    %1466 = vmatprep.subr.mxu0 0.0
    %1467 = vmatpush1.xpose.msra.mxu0 0.0
    %1468 = vmatprep.subr.mxu0 0.0
    %1469 = vmatpush1.xpose.msra.mxu0 0.0
    %1470 = vmatprep.subr.mxu0 0.0
    %1471 = vmatpush1.xpose.msra.mxu0 0.0
    %1472 = vmatprep.subr.mxu0 0.0
    %1473 = vmatpush1.xpose.msra.mxu0 0.0
    %1474 = vmatprep.subr.mxu0 0.0
    %1475 = vmatpush1.xpose.msra.mxu0 0.0
    %1476 = vmatprep.subr.mxu0 0.0
    %1477 = vmatpush1.xpose.msra.mxu0 0.0
    %1478 = vmatprep.subr.mxu0 0.0
    %1479 = vmatpush1.xpose.msra.mxu0 0.0
    %1480 = vmatprep.subr.mxu0 0.0
    %1481 = vmatpush1.xpose.msra.mxu0 0.0
    %1482 = vmatprep.subr.mxu0 0.0
    %1483 = vmatpush1.xpose.msra.mxu0 0.0
    %1484 = vmatprep.subr.mxu0 0.0
    %1485 = vmatpush1.xpose.msra.mxu0 0.0
    %1486 = vmatprep.subr.mxu0 0.0
    %1487 = vmatpush1.xpose.msra.mxu0 0.0
    %1488 = vmatprep.subr.mxu0 0.0
    %1489 = vmatpush1.xpose.msra.mxu0 0.0
    %1490 = vmatprep.subr.mxu0 0.0
    %1491 = vmatpush1.xpose.msra.mxu0 0.0
    %1492 = vmatprep.subr.mxu0 0.0
    %1493 = vmatpush1.xpose.msra.mxu0 0.0
    %1494 = vmatprep.subr.mxu0 0.0
    %1495 = vmatpush1.xpose.msra.mxu0 0.0
    %1496 = vmatprep.subr.mxu0 0.0
    %1497 = vmatpush1.xpose.msra.mxu0 0.0
    %1498 = vmatprep.subr.mxu0 0.0
    %1499 = vmatpush1.xpose.msra.mxu0 0.0
    %1500 = vmatprep.subr.mxu0 0.0
    %1501 = vmatpush1.xpose.msra.mxu0 0.0
    %1502 = vmatprep.subr.mxu0 0.0
    %1503 = vmatpush1.xpose.msra.mxu0 0.0
    %1504 = vmatprep.subr.mxu0 0.0
    %1505 = vmatpush1.xpose.msra.mxu0 0.0
    %1506 = vmatprep.subr.mxu0 0.0
    %1507 = vmatpush1.xpose.msra.mxu0 0.0
    %1508 = vmatprep.subr.mxu0 0.0
    %1509 = vmatpush1.xpose.msra.mxu0 0.0
    %1510 = vmatprep.subr.mxu0 0.0
    %1511 = vmatpush1.xpose.msra.mxu0 0.0
    %1512 = vmatprep.subr.mxu0 0.0
    %1513 = vmatpush1.xpose.msra.mxu0 0.0
    %1514 = vmatprep.subr.mxu0 0.0
    %1515 = vmatpush1.xpose.msra.mxu0 0.0
    %1516 = vmatprep.subr.mxu0 0.0
    %1517 = vmatpush1.xpose.msra.mxu0 0.0
    %1518 = vmatprep.subr.mxu0 0.0
    %1519 = vmatpush1.xpose.msra.mxu0 0.0
    %1520 = vmatprep.mubr.f32.mxu0 0.0
    %1521 = vmatmul.mubr.f32.gmra.mrb[0].mxu0 %v1452
    %v1522 = vpop.f32.mrb[0].mxu0
    %v1523 = vadd.f32 0.0, %v1522
    %v1524 = vpop.f32.mrb[0].mxu0
    %1525 = vdwg.mxu0
    %v1526 = vmul.f32 %v1523, 0.17677669
    %v1527 = vadd.f32 %v1526, %v1188
    %v1528 = vsel %vm501, %v1527, -inf
    %1529 = vmax.xlane.f32.xlu0 %v1528
    %v1530 = vpop.xlane.xlu0 %1529
    %v1531 = vsub.f32 %v1527, %v1530
    %v1532 = vmul.f32 %v1531, 1.442695
    %v1533 = vpow.pop %v1532
    %v1534 = vsel %vm501, %v1533, 0.0
    %1535 = vadd.xlane.f32.xlu0 %v1534
    %v1536 = vpop.xlane.xlu0 %1535
    %v1537 = vrcp.pop %v1536
    %v1538 = vmul.f32 %v1533, %v1537
    %1539 = vrot.lane.b32.xlu0 %v414, 64
    %v1540 = vpop.permute.xlu0 %1539
    %v1543 = vsel %vm501, %v1538, 0
    %1545 = vmatprep.subr.mxu0 0.0
    %1546 = vmatpush1.msra.mxu0 %v1540
    %1547 = vmatprep.subr.mxu0 0.0
    %1548 = vmatpush1.msra.mxu0 0.0
    %1549 = vmatprep.subr.mxu0 0.0
    %1550 = vmatpush1.msra.mxu0 0.0
    %1551 = vmatprep.subr.mxu0 0.0
    %1552 = vmatpush1.msra.mxu0 0.0
    %1553 = vmatprep.subr.mxu0 0.0
    %1554 = vmatpush1.msra.mxu0 0.0
    %1555 = vmatprep.subr.mxu0 0.0
    %1556 = vmatpush1.msra.mxu0 0.0
    %1557 = vmatprep.subr.mxu0 0.0
    %1558 = vmatpush1.msra.mxu0 0.0
    %1559 = vmatprep.subr.mxu0 0.0
    %1560 = vmatpush1.msra.mxu0 0.0
    %1561 = vmatprep.subr.mxu0 0.0
    %1562 = vmatpush1.msra.mxu0 0.0
    %1563 = vmatprep.subr.mxu0 0.0
    %1564 = vmatpush1.msra.mxu0 0.0
    %1565 = vmatprep.subr.mxu0 0.0
    %1566 = vmatpush1.msra.mxu0 0.0
    %1567 = vmatprep.subr.mxu0 0.0
    %1568 = vmatpush1.msra.mxu0 0.0
    %1569 = vmatprep.subr.mxu0 0.0
    %1570 = vmatpush1.msra.mxu0 0.0
    %1571 = vmatprep.subr.mxu0 0.0
    %1572 = vmatpush1.msra.mxu0 0.0
    %1573 = vmatprep.subr.mxu0 0.0
    %1574 = vmatpush1.msra.mxu0 0.0
    %1575 = vmatprep.subr.mxu0 0.0
    %1576 = vmatpush1.msra.mxu0 0.0
    %1577 = vmatprep.subr.mxu0 0.0
    %1578 = vmatpush1.msra.mxu0 0.0
    %1579 = vmatprep.subr.mxu0 0.0
    %1580 = vmatpush1.msra.mxu0 0.0
    %1581 = vmatprep.subr.mxu0 0.0
    %1582 = vmatpush1.msra.mxu0 0.0
    %1583 = vmatprep.subr.mxu0 0.0
    %1584 = vmatpush1.msra.mxu0 0.0
    %1585 = vmatprep.subr.mxu0 0.0
    %1586 = vmatpush1.msra.mxu0 0.0
    %1587 = vmatprep.subr.mxu0 0.0
    %1588 = vmatpush1.msra.mxu0 0.0
    %1589 = vmatprep.subr.mxu0 0.0
    %1590 = vmatpush1.msra.mxu0 0.0
    %1591 = vmatprep.subr.mxu0 0.0
    %1592 = vmatpush1.msra.mxu0 0.0
    %1593 = vmatprep.subr.mxu0 0.0
    %1594 = vmatpush1.msra.mxu0 0.0
    %1595 = vmatprep.subr.mxu0 0.0
    %1596 = vmatpush1.msra.mxu0 0.0
    %1597 = vmatprep.subr.mxu0 0.0
    %1598 = vmatpush1.msra.mxu0 0.0
    %1599 = vmatprep.subr.mxu0 0.0
    %1600 = vmatpush1.msra.mxu0 0.0
    %1601 = vmatprep.subr.mxu0 0.0
    %1602 = vmatpush1.msra.mxu0 0.0
    %1603 = vmatprep.subr.mxu0 0.0
    %1604 = vmatpush1.msra.mxu0 0.0
    %1605 = vmatprep.subr.mxu0 0.0
    %1606 = vmatpush1.msra.mxu0 0.0
    %1607 = vmatprep.subr.mxu0 0.0
    %1608 = vmatpush1.msra.mxu0 0.0
    %1609 = vmatprep.mubr.f32.mxu0 0.0
    %1610 = vmatmul.mubr.f32.gmra.mrb[0].mxu0 %v1543
    %v1611 = vpop.f32.mrb[0].mxu0
    %v1612 = vadd.f32 0.0, %v1611
    %v1613 = vpop.f32.mrb[0].mxu0
    %1614 = vdwg.mxu0
    %1616 = vrot.lane.b32.xlu0 %v1612, 64
    %v1617 = vpop.permute.xlu0 %1616
    %1619 = vst.msk [vmem:[#allocation2 + $0x8] sm:$0xff] %vm932, %v1617
    %1620 = vrot.lane.b32.xlu0 %v372, 32
    %v1621 = vpop.permute.xlu0 %1620
    %1622 = vrot.lane.b32.xlu0 %v374, 32
    %v1623 = vpop.permute.xlu0 %1622
    %v1624 = vsel %vm418, %v1621, 0
    %v1626 = vsel %vm418, %v1623, 0
    %1628 = vmatprep.subr.mxu0 0.0
    %1629 = vmatpush1.xpose.msra.mxu0 %v1626
    %1630 = vmatprep.subr.mxu0 0.0
    %1631 = vmatpush1.xpose.msra.mxu0 0.0
    %1632 = vmatprep.subr.mxu0 0.0
    %1633 = vmatpush1.xpose.msra.mxu0 0.0
    %1634 = vmatprep.subr.mxu0 0.0
    %1635 = vmatpush1.xpose.msra.mxu0 0.0
    %1636 = vmatprep.subr.mxu0 0.0
    %1637 = vmatpush1.xpose.msra.mxu0 0.0
    %1638 = vmatprep.subr.mxu0 0.0
    %1639 = vmatpush1.xpose.msra.mxu0 0.0
    %1640 = vmatprep.subr.mxu0 0.0
    %1641 = vmatpush1.xpose.msra.mxu0 0.0
    %1642 = vmatprep.subr.mxu0 0.0
    %1643 = vmatpush1.xpose.msra.mxu0 0.0
    %1644 = vmatprep.subr.mxu0 0.0
    %1645 = vmatpush1.xpose.msra.mxu0 0.0
    %1646 = vmatprep.subr.mxu0 0.0
    %1647 = vmatpush1.xpose.msra.mxu0 0.0
    %1648 = vmatprep.subr.mxu0 0.0
    %1649 = vmatpush1.xpose.msra.mxu0 0.0
    %1650 = vmatprep.subr.mxu0 0.0
    %1651 = vmatpush1.xpose.msra.mxu0 0.0
    %1652 = vmatprep.subr.mxu0 0.0
    %1653 = vmatpush1.xpose.msra.mxu0 0.0
    %1654 = vmatprep.subr.mxu0 0.0
    %1655 = vmatpush1.xpose.msra.mxu0 0.0
    %1656 = vmatprep.subr.mxu0 0.0
    %1657 = vmatpush1.xpose.msra.mxu0 0.0
    %1658 = vmatprep.subr.mxu0 0.0
    %1659 = vmatpush1.xpose.msra.mxu0 0.0
    %1660 = vmatprep.subr.mxu0 0.0
    %1661 = vmatpush1.xpose.msra.mxu0 0.0
    %1662 = vmatprep.subr.mxu0 0.0
    %1663 = vmatpush1.xpose.msra.mxu0 0.0
    %1664 = vmatprep.subr.mxu0 0.0
    %1665 = vmatpush1.xpose.msra.mxu0 0.0
    %1666 = vmatprep.subr.mxu0 0.0
    %1667 = vmatpush1.xpose.msra.mxu0 0.0
    %1668 = vmatprep.subr.mxu0 0.0
    %1669 = vmatpush1.xpose.msra.mxu0 0.0
    %1670 = vmatprep.subr.mxu0 0.0
    %1671 = vmatpush1.xpose.msra.mxu0 0.0
    %1672 = vmatprep.subr.mxu0 0.0
    %1673 = vmatpush1.xpose.msra.mxu0 0.0
    %1674 = vmatprep.subr.mxu0 0.0
    %1675 = vmatpush1.xpose.msra.mxu0 0.0
    %1676 = vmatprep.subr.mxu0 0.0
    %1677 = vmatpush1.xpose.msra.mxu0 0.0
    %1678 = vmatprep.subr.mxu0 0.0
    %1679 = vmatpush1.xpose.msra.mxu0 0.0
    %1680 = vmatprep.subr.mxu0 0.0
    %1681 = vmatpush1.xpose.msra.mxu0 0.0
    %1682 = vmatprep.subr.mxu0 0.0
    %1683 = vmatpush1.xpose.msra.mxu0 0.0
    %1684 = vmatprep.subr.mxu0 0.0
    %1685 = vmatpush1.xpose.msra.mxu0 0.0
    %1686 = vmatprep.subr.mxu0 0.0
    %1687 = vmatpush1.xpose.msra.mxu0 0.0
    %1688 = vmatprep.subr.mxu0 0.0
    %1689 = vmatpush1.xpose.msra.mxu0 0.0
    %1690 = vmatprep.subr.mxu0 0.0
    %1691 = vmatpush1.xpose.msra.mxu0 0.0
    %1692 = vmatprep.mubr.f32.mxu0 0.0
    %1693 = vmatmul.mubr.f32.gmra.mrb[0].mxu0 %v1624
    %v1694 = vpop.f32.mrb[0].mxu0
    %v1695 = vadd.f32 0.0, %v1694
    %v1696 = vpop.f32.mrb[0].mxu0
    %1697 = vdwg.mxu0
    %v1698 = vmul.f32 %v1695, 0.17677669
    %v1699 = vadd.f32 %v1698, %v1188
    %v1700 = vsel %vm501, %v1699, -inf
    %1701 = vmax.xlane.f32.xlu0 %v1700
    %v1702 = vpop.xlane.xlu0 %1701
    %v1703 = vsub.f32 %v1699, %v1702
    %v1704 = vmul.f32 %v1703, 1.442695
    %v1705 = vpow.pop %v1704
    %v1706 = vsel %vm501, %v1705, 0.0
    %1707 = vadd.xlane.f32.xlu0 %v1706
    %v1708 = vpop.xlane.xlu0 %1707
    %v1709 = vrcp.pop %v1708
    %v1710 = vmul.f32 %v1705, %v1709
    %1711 = vrot.lane.b32.xlu0 %v414, 32
    %v1712 = vpop.permute.xlu0 %1711
    %v1715 = vsel %vm501, %v1710, 0
    %1717 = vmatprep.subr.mxu0 0.0
    %1718 = vmatpush1.msra.mxu0 %v1712
    %1719 = vmatprep.subr.mxu0 0.0
    %1720 = vmatpush1.msra.mxu0 0.0
    %1721 = vmatprep.subr.mxu0 0.0
    %1722 = vmatpush1.msra.mxu0 0.0
    %1723 = vmatprep.subr.mxu0 0.0
    %1724 = vmatpush1.msra.mxu0 0.0
    %1725 = vmatprep.subr.mxu0 0.0
    %1726 = vmatpush1.msra.mxu0 0.0
    %1727 = vmatprep.subr.mxu0 0.0
    %1728 = vmatpush1.msra.mxu0 0.0
    %1729 = vmatprep.subr.mxu0 0.0
    %1730 = vmatpush1.msra.mxu0 0.0
    %1731 = vmatprep.subr.mxu0 0.0
    %1732 = vmatpush1.msra.mxu0 0.0
    %1733 = vmatprep.subr.mxu0 0.0
    %1734 = vmatpush1.msra.mxu0 0.0
    %1735 = vmatprep.subr.mxu0 0.0
    %1736 = vmatpush1.msra.mxu0 0.0
    %1737 = vmatprep.subr.mxu0 0.0
    %1738 = vmatpush1.msra.mxu0 0.0
    %1739 = vmatprep.subr.mxu0 0.0
    %1740 = vmatpush1.msra.mxu0 0.0
    %1741 = vmatprep.subr.mxu0 0.0
    %1742 = vmatpush1.msra.mxu0 0.0
    %1743 = vmatprep.subr.mxu0 0.0
    %1744 = vmatpush1.msra.mxu0 0.0
    %1745 = vmatprep.subr.mxu0 0.0
    %1746 = vmatpush1.msra.mxu0 0.0
    %1747 = vmatprep.subr.mxu0 0.0
    %1748 = vmatpush1.msra.mxu0 0.0
    %1749 = vmatprep.subr.mxu0 0.0
    %1750 = vmatpush1.msra.mxu0 0.0
    %1751 = vmatprep.subr.mxu0 0.0
    %1752 = vmatpush1.msra.mxu0 0.0
    %1753 = vmatprep.subr.mxu0 0.0
    %1754 = vmatpush1.msra.mxu0 0.0
    %1755 = vmatprep.subr.mxu0 0.0
    %1756 = vmatpush1.msra.mxu0 0.0
    %1757 = vmatprep.subr.mxu0 0.0
    %1758 = vmatpush1.msra.mxu0 0.0
    %1759 = vmatprep.subr.mxu0 0.0
    %1760 = vmatpush1.msra.mxu0 0.0
    %1761 = vmatprep.subr.mxu0 0.0
    %1762 = vmatpush1.msra.mxu0 0.0
    %1763 = vmatprep.subr.mxu0 0.0
    %1764 = vmatpush1.msra.mxu0 0.0
    %1765 = vmatprep.subr.mxu0 0.0
    %1766 = vmatpush1.msra.mxu0 0.0
    %1767 = vmatprep.subr.mxu0 0.0
    %1768 = vmatpush1.msra.mxu0 0.0
    %1769 = vmatprep.subr.mxu0 0.0
    %1770 = vmatpush1.msra.mxu0 0.0
    %1771 = vmatprep.subr.mxu0 0.0
    %1772 = vmatpush1.msra.mxu0 0.0
    %1773 = vmatprep.subr.mxu0 0.0
    %1774 = vmatpush1.msra.mxu0 0.0
    %1775 = vmatprep.subr.mxu0 0.0
    %1776 = vmatpush1.msra.mxu0 0.0
    %1777 = vmatprep.subr.mxu0 0.0
    %1778 = vmatpush1.msra.mxu0 0.0
    %1779 = vmatprep.subr.mxu0 0.0
    %1780 = vmatpush1.msra.mxu0 0.0
    %1781 = vmatprep.mubr.f32.mxu0 0.0
    %1782 = vmatmul.mubr.f32.gmra.mrb[0].mxu0 %v1715
    %v1783 = vpop.f32.mrb[0].mxu0
    %v1784 = vadd.f32 0.0, %v1783
    %v1785 = vpop.f32.mrb[0].mxu0
    %1786 = vdwg.mxu0
    %1788 = vrot.lane.b32.xlu0 %v1784, 96
    %v1789 = vpop.permute.xlu0 %1788
    %1791 = vst.msk [vmem:[#allocation2 + $0x8] sm:$0xff] %vm1105, %v1789
    %v1792 = vld [vmem:[#allocation2] sm:$0xff]
    %v1793 = vld [vmem:[#allocation2 + $0x8] sm:$0xff]
    %v1794 = vld [vmem:[%s6] sm:$0xf]
    %v1795 = vld [vmem:[%s6 + $0x4] sm:$0xf]
    %v1796 = vld [vmem:[%s6 + $0x8] sm:$0xf]
    %v1797 = vld [vmem:[%s6 + $0xc] sm:$0xf]
    %v1798 = vld [vmem:[%s6 + $0x10] sm:$0xf]
    %v1799 = vld [vmem:[%s6 + $0x14] sm:$0xf]
    %v1800 = vld [vmem:[%s6 + $0x18] sm:$0xf]
    %v1801 = vld [vmem:[%s6 + $0x1c] sm:$0xf]
    %v1802 = vld [vmem:[%s6 + $0x20] sm:$0xf]
    %v1803 = vld [vmem:[%s6 + $0x24] sm:$0xf]
    %v1804 = vld [vmem:[%s6 + $0x28] sm:$0xf]
    %v1805 = vld [vmem:[%s6 + $0x2c] sm:$0xf]
    %v1806 = vld [vmem:[%s6 + $0x30] sm:$0xf]
    %v1807 = vld [vmem:[%s6 + $0x34] sm:$0xf]
    %v1808 = vld [vmem:[%s6 + $0x38] sm:$0xf]
    %v1809 = vld [vmem:[%s6 + $0x3c] sm:$0xf]
    %v1810 = vpack.c.bf16 %v1793, %v1792
    %v1811 = vld [vmem:[%s7] sm:$0x1]
    %v1813 = vlaneseq
    %v1814 = vshrl.u32 %v1813, 7
    %v1815 = vsub.s32 0, %v1814
    %v1816 = vrot.slane %v1811, %v1815
    %v1834 = vunpack.c.l.b16 %v1794
    %v1835 = vunpack.c.l.b16 %v1795
    %v1836 = vunpack.c.l.b16 %v1796
    %v1837 = vunpack.c.l.b16 %v1797
    %v1838 = vunpack.c.l.b16 %v1798
    %v1839 = vunpack.c.l.b16 %v1799
    %v1840 = vunpack.c.l.b16 %v1800
    %v1841 = vunpack.c.l.b16 %v1801
    %v1842 = vunpack.c.l.b16 %v1802
    %v1843 = vunpack.c.l.b16 %v1803
    %v1844 = vunpack.c.l.b16 %v1804
    %v1845 = vunpack.c.l.b16 %v1805
    %v1846 = vunpack.c.l.b16 %v1806
    %v1847 = vunpack.c.l.b16 %v1807
    %v1848 = vunpack.c.l.b16 %v1808
    %v1849 = vunpack.c.l.b16 %v1809
    %v1850 = vpack.c.b16 %v1835, %v1834
    %v1851 = vpack.c.b16 %v1837, %v1836
    %v1852 = vpack.c.b16 %v1839, %v1838
    %v1853 = vpack.c.b16 %v1841, %v1840
    %v1854 = vpack.c.b16 %v1843, %v1842
    %v1855 = vpack.c.b16 %v1845, %v1844
    %v1856 = vpack.c.b16 %v1847, %v1846
    %v1857 = vpack.c.b16 %v1849, %v1848
    %1866 = vmatprep.subr.bf16.mxu0 0
    %1867 = vmatpush1.bf16.msra.mxu0 %v1850
    %1868 = vmatprep.subr.bf16.mxu0 0
    %1869 = vmatpush1.bf16.msra.mxu0 %v1851
    %1870 = vmatprep.subr.bf16.mxu0 0
    %1871 = vmatpush1.bf16.msra.mxu0 %v1852
    %1872 = vmatprep.subr.bf16.mxu0 0
    %1873 = vmatpush1.bf16.msra.mxu0 %v1853
    %1874 = vmatprep.subr.bf16.mxu0 0
    %1875 = vmatpush1.bf16.msra.mxu0 %v1854
    %1876 = vmatprep.subr.bf16.mxu0 0
    %1877 = vmatpush1.bf16.msra.mxu0 %v1855
    %1878 = vmatprep.subr.bf16.mxu0 0
    %1879 = vmatpush1.bf16.msra.mxu0 %v1856
    %1880 = vmatprep.subr.bf16.mxu0 0
    %1881 = vmatpush1.bf16.msra.mxu0 %v1857
    %1882 = vmatprep.subr.bf16.mxu0 0
    %1883 = vmatpush1.bf16.msra.mxu0 0
    %1884 = vmatprep.subr.bf16.mxu0 0
    %1885 = vmatpush1.bf16.msra.mxu0 0
    %1886 = vmatprep.subr.bf16.mxu0 0
    %1887 = vmatpush1.bf16.msra.mxu0 0
    %1888 = vmatprep.subr.bf16.mxu0 0
    %1889 = vmatpush1.bf16.msra.mxu0 0
    %1890 = vmatprep.subr.bf16.mxu0 0
    %1891 = vmatpush1.bf16.msra.mxu0 0
    %1892 = vmatprep.subr.bf16.mxu0 0
    %1893 = vmatpush1.bf16.msra.mxu0 0
    %1894 = vmatprep.subr.bf16.mxu0 0
    %1895 = vmatpush1.bf16.msra.mxu0 0
    %1896 = vmatprep.subr.bf16.mxu0 0
    %1897 = vmatpush1.bf16.msra.mxu0 0
    %1898 = vmatprep.mubr.bf16.mxu0 0
    %1899 = vmatmul.mubr.bf16.gmra.mrb[0].mxu0 %v1810
    %v1900 = vpop.f32.mrb[0].mxu0
    %v1901 = vadd.f32 %v1816, %v1900
    %v1902 = vpop.f32.mrb[0].mxu0
    %v1903 = vpop.f32.mrb[0].mxu0
    %v1904 = vadd.f32 %v1816, %v1903
    %v1905 = vpop.f32.mrb[0].mxu0
    %1906 = vdwg.mxu0
    %v1907 = vadd.f32 %v1901, %v153
    %v1908 = vadd.f32 %v1904, %v154
    %v1909 = vld [vmem:[%s8] sm:$0x1]
    %v1910 = vld [vmem:[%s9] sm:$0x1]
    %1911 = vadd.xlane.f32.xlu0 %v1907
    %v1912 = vpop.xlane.xlu0 %1911
    %1913 = vadd.xlane.f32.xlu0 %v1908
    %v1914 = vpop.xlane.xlu0 %1913
    %v1915 = vmul.f32 %v1912, %v120
    %v1916 = vmul.f32 %v1914, %v120
    %v1917 = vsub.f32 %v1907, %v1915
    %v1918 = vsub.f32 %v1908, %v1916
    %v1919 = vmul.f32 %v1917, %v1917
    %v1920 = vmul.f32 %v1918, %v1918
    %1921 = vadd.xlane.f32.xlu0 %v1919
    %v1922 = vpop.xlane.xlu0 %1921
    %1923 = vadd.xlane.f32.xlu0 %v1920
    %v1924 = vpop.xlane.xlu0 %1923
    %v1925 = vmul.f32 %v1922, %v120
    %v1926 = vmul.f32 %v1924, %v120
    %v1927 = vadd.f32 %v1925, 1e-12
    %v1928 = vadd.f32 %v1926, 1e-12
    %v1929 = vrsqrt.pop %v1927
    %v1930 = vrsqrt.pop %v1928
    %v1931 = vmul.f32 %v1917, %v1929
    %v1932 = vmul.f32 %v1918, %v1930
    %v1934 = vlaneseq
    %v1935 = vshrl.u32 %v1934, 7
    %v1936 = vsub.s32 0, %v1935
    %v1937 = vrot.slane %v1909, %v1936
    %v1939 = vmul.f32 %v1931, %v1937
    %v1940 = vmul.f32 %v1932, %v1937
    %v1942 = vlaneseq
    %v1943 = vshrl.u32 %v1942, 7
    %v1944 = vsub.s32 0, %v1943
    %v1945 = vrot.slane %v1910, %v1944
    %v1947 = vadd.f32 %v1939, %v1945
    %v1948 = vadd.f32 %v1940, %v1945
    %v1949 = vld [vmem:[%s10] sm:$0xff]
    %v1950 = vld [vmem:[%s10 + $0x8] sm:$0xff]
    %v1951 = vld [vmem:[%s10 + $0x10] sm:$0xff]
    %v1952 = vld [vmem:[%s10 + $0x18] sm:$0xff]
    %v1953 = vld [vmem:[%s10 + $0x20] sm:$0xff]
    %v1954 = vld [vmem:[%s10 + $0x28] sm:$0xff]
    %v1955 = vld [vmem:[%s10 + $0x30] sm:$0xff]
    %v1956 = vld [vmem:[%s10 + $0x38] sm:$0xff]
    %v1957 = vld [vmem:[%s10 + $0x40] sm:$0xff]
    %v1958 = vld [vmem:[%s10 + $0x48] sm:$0xff]
    %v1959 = vld [vmem:[%s10 + $0x50] sm:$0xff]
    %v1960 = vld [vmem:[%s10 + $0x58] sm:$0xff]
    %v1961 = vld [vmem:[%s10 + $0x60] sm:$0xff]
    %v1962 = vld [vmem:[%s10 + $0x68] sm:$0xff]
    %v1963 = vld [vmem:[%s10 + $0x70] sm:$0xff]
    %v1964 = vld [vmem:[%s10 + $0x78] sm:$0xff]
    %v1965 = vpack.c.bf16 %v1948, %v1947
    %v1966 = vld [vmem:[%s11] sm:$0x3]
    %v1968 = vlaneseq
    %v1969 = vshrl.u32 %v1968, 7
    %v1970 = vsub.s32 0, %v1969
    %v1971 = vrot.slane %v1966, %v1970
    %v1972 = vlaneseq
    %v1973 = vshrl.u32 %v1972, 7
    %v1974 = vsub.s32 1, %v1973
    %v1975 = vrot.slane %v1966, %v1974
    %v1994 = vunpack.c.l.b16 %v1949
    %v1995 = vunpack.c.h.b16 %v1949
    %v1996 = vunpack.c.l.b16 %v1950
    %v1997 = vunpack.c.h.b16 %v1950
    %v1998 = vunpack.c.l.b16 %v1951
    %v1999 = vunpack.c.h.b16 %v1951
    %v2000 = vunpack.c.l.b16 %v1952
    %v2001 = vunpack.c.h.b16 %v1952
    %v2002 = vunpack.c.l.b16 %v1953
    %v2003 = vunpack.c.h.b16 %v1953
    %v2004 = vunpack.c.l.b16 %v1954
    %v2005 = vunpack.c.h.b16 %v1954
    %v2006 = vunpack.c.l.b16 %v1955
    %v2007 = vunpack.c.h.b16 %v1955
    %v2008 = vunpack.c.l.b16 %v1956
    %v2009 = vunpack.c.h.b16 %v1956
    %v2010 = vunpack.c.l.b16 %v1957
    %v2011 = vunpack.c.h.b16 %v1957
    %v2012 = vunpack.c.l.b16 %v1958
    %v2013 = vunpack.c.h.b16 %v1958
    %v2014 = vunpack.c.l.b16 %v1959
    %v2015 = vunpack.c.h.b16 %v1959
    %v2016 = vunpack.c.l.b16 %v1960
    %v2017 = vunpack.c.h.b16 %v1960
    %v2018 = vunpack.c.l.b16 %v1961
    %v2019 = vunpack.c.h.b16 %v1961
    %v2020 = vunpack.c.l.b16 %v1962
    %v2021 = vunpack.c.h.b16 %v1962
    %v2022 = vunpack.c.l.b16 %v1963
    %v2023 = vunpack.c.h.b16 %v1963
    %v2024 = vunpack.c.l.b16 %v1964
    %v2025 = vunpack.c.h.b16 %v1964
    %v2026 = vpack.c.b16 %v1996, %v1994
    %v2027 = vpack.c.b16 %v1997, %v1995
    %v2028 = vpack.c.b16 %v2000, %v1998
    %v2029 = vpack.c.b16 %v2001, %v1999
    %v2030 = vpack.c.b16 %v2004, %v2002
    %v2031 = vpack.c.b16 %v2005, %v2003
    %v2032 = vpack.c.b16 %v2008, %v2006
    %v2033 = vpack.c.b16 %v2009, %v2007
    %v2034 = vpack.c.b16 %v2012, %v2010
    %v2035 = vpack.c.b16 %v2013, %v2011
    %v2036 = vpack.c.b16 %v2016, %v2014
    %v2037 = vpack.c.b16 %v2017, %v2015
    %v2038 = vpack.c.b16 %v2020, %v2018
    %v2039 = vpack.c.b16 %v2021, %v2019
    %v2040 = vpack.c.b16 %v2024, %v2022
    %v2041 = vpack.c.b16 %v2025, %v2023
    %2058 = vmatprep.subr.bf16.mxu0 %v2027
    %2059 = vmatpush1.bf16.msra.mxu0 %v2026
    %2060 = vmatprep.subr.bf16.mxu0 %v2029
    %2061 = vmatpush1.bf16.msra.mxu0 %v2028
    %2062 = vmatprep.subr.bf16.mxu0 %v2031
    %2063 = vmatpush1.bf16.msra.mxu0 %v2030
    %2064 = vmatprep.subr.bf16.mxu0 %v2033
    %2065 = vmatpush1.bf16.msra.mxu0 %v2032
    %2066 = vmatprep.subr.bf16.mxu0 %v2035
    %2067 = vmatpush1.bf16.msra.mxu0 %v2034
    %2068 = vmatprep.subr.bf16.mxu0 %v2037
    %2069 = vmatpush1.bf16.msra.mxu0 %v2036
    %2070 = vmatprep.subr.bf16.mxu0 %v2039
    %2071 = vmatpush1.bf16.msra.mxu0 %v2038
    %2072 = vmatprep.subr.bf16.mxu0 %v2041
    %2073 = vmatpush1.bf16.msra.mxu0 %v2040
    %2074 = vmatprep.subr.bf16.mxu0 0
    %2075 = vmatpush1.bf16.msra.mxu0 0
    %2076 = vmatprep.subr.bf16.mxu0 0
    %2077 = vmatpush1.bf16.msra.mxu0 0
    %2078 = vmatprep.subr.bf16.mxu0 0
    %2079 = vmatpush1.bf16.msra.mxu0 0
    %2080 = vmatprep.subr.bf16.mxu0 0
    %2081 = vmatpush1.bf16.msra.mxu0 0
    %2082 = vmatprep.subr.bf16.mxu0 0
    %2083 = vmatpush1.bf16.msra.mxu0 0
    %2084 = vmatprep.subr.bf16.mxu0 0
    %2085 = vmatpush1.bf16.msra.mxu0 0
    %2086 = vmatprep.subr.bf16.mxu0 0
    %2087 = vmatpush1.bf16.msra.mxu0 0
    %2088 = vmatprep.subr.bf16.mxu0 0
    %2089 = vmatpush1.bf16.msra.mxu0 0
    %2090 = vmatprep.mubr.bf16.mxu0 0
    %2091 = vmatmul.mubr.bf16.gmra.mrb[0].mxu0 %v1965
    %v2092 = vpop.f32.mrb[0].mxu0
    %v2093 = vadd.f32 %v1971, %v2092
    %v2094 = vpop.f32.mrb[0].mxu0
    %v2095 = vadd.f32 %v1975, %v2094
    %v2096 = vpop.f32.mrb[0].mxu0
    %v2097 = vadd.f32 %v1971, %v2096
    %v2098 = vpop.f32.mrb[0].mxu0
    %v2099 = vadd.f32 %v1975, %v2098
    %2100 = vdwg.mxu0
    %v2101 = vmul.f32 %v2093, 0.5
    %v2102 = vmul.f32 %v2095, 0.5
    %v2103 = vmul.f32 %v2097, 0.5
    %v2104 = vmul.f32 %v2099, 0.5
    %v2105 = vmul.f32 %v2093, 0.044715
    %v2106 = vmul.f32 %v2095, 0.044715
    %v2107 = vmul.f32 %v2097, 0.044715
    %v2108 = vmul.f32 %v2099, 0.044715
    %v2109 = vmul.f32 %v2105, %v2093
    %v2110 = vmul.f32 %v2106, %v2095
    %v2111 = vmul.f32 %v2107, %v2097
    %v2112 = vmul.f32 %v2108, %v2099
    %v2113 = vmul.f32 %v2109, %v2093
    %v2114 = vmul.f32 %v2110, %v2095
    %v2115 = vmul.f32 %v2111, %v2097
    %v2116 = vmul.f32 %v2112, %v2099
    %v2117 = vadd.f32 %v2093, %v2113
    %v2118 = vadd.f32 %v2095, %v2114
    %v2119 = vadd.f32 %v2097, %v2115
    %v2120 = vadd.f32 %v2099, %v2116
    %v2121 = vmul.f32 %v2117, 0.7978846
    %v2122 = vmul.f32 %v2118, 0.7978846
    %v2123 = vmul.f32 %v2119, 0.7978846
    %v2124 = vmul.f32 %v2120, 0.7978846
    %v2125 = vtanh.pop %v2121
    %v2126 = vtanh.pop %v2122
    %v2127 = vtanh.pop %v2123
    %v2128 = vtanh.pop %v2124
    %v2129 = vadd.f32 %v2125, 1.0
    %v2130 = vadd.f32 %v2126, 1.0
    %v2131 = vadd.f32 %v2127, 1.0
    %v2132 = vadd.f32 %v2128, 1.0
    %v2133 = vmul.f32 %v2101, %v2129
    %v2134 = vmul.f32 %v2102, %v2130
    %v2135 = vmul.f32 %v2103, %v2131
    %v2136 = vmul.f32 %v2104, %v2132
    %v2137 = vld [vmem:[#allocation9] sm:$0xf]
    %v2138 = vld [vmem:[#allocation9 + $0x4] sm:$0xf]
    %v2139 = vld [vmem:[#allocation9 + $0x8] sm:$0xf]
    %v2140 = vld [vmem:[#allocation9 + $0xc] sm:$0xf]
    %v2141 = vld [vmem:[#allocation9 + $0x10] sm:$0xf]
    %v2142 = vld [vmem:[#allocation9 + $0x14] sm:$0xf]
    %v2143 = vld [vmem:[#allocation9 + $0x18] sm:$0xf]
    %v2144 = vld [vmem:[#allocation9 + $0x1c] sm:$0xf]
    %v2145 = vld [vmem:[#allocation9 + $0x20] sm:$0xf]
    %v2146 = vld [vmem:[#allocation9 + $0x24] sm:$0xf]
    %v2147 = vld [vmem:[#allocation9 + $0x28] sm:$0xf]
    %v2148 = vld [vmem:[#allocation9 + $0x2c] sm:$0xf]
    %v2149 = vld [vmem:[#allocation9 + $0x30] sm:$0xf]
    %v2150 = vld [vmem:[#allocation9 + $0x34] sm:$0xf]
    %v2151 = vld [vmem:[#allocation9 + $0x38] sm:$0xf]
    %v2152 = vld [vmem:[#allocation9 + $0x3c] sm:$0xf]
    %v2153 = vld [vmem:[#allocation9 + $0x40] sm:$0xf]
    %v2154 = vld [vmem:[#allocation9 + $0x44] sm:$0xf]
    %v2155 = vld [vmem:[#allocation9 + $0x48] sm:$0xf]
    %v2156 = vld [vmem:[#allocation9 + $0x4c] sm:$0xf]
    %v2157 = vld [vmem:[#allocation9 + $0x50] sm:$0xf]
    %v2158 = vld [vmem:[#allocation9 + $0x54] sm:$0xf]
    %v2159 = vld [vmem:[#allocation9 + $0x58] sm:$0xf]
    %v2160 = vld [vmem:[#allocation9 + $0x5c] sm:$0xf]
    %v2161 = vld [vmem:[#allocation9 + $0x60] sm:$0xf]
    %v2162 = vld [vmem:[#allocation9 + $0x64] sm:$0xf]
    %v2163 = vld [vmem:[#allocation9 + $0x68] sm:$0xf]
    %v2164 = vld [vmem:[#allocation9 + $0x6c] sm:$0xf]
    %v2165 = vld [vmem:[#allocation9 + $0x70] sm:$0xf]
    %v2166 = vld [vmem:[#allocation9 + $0x74] sm:$0xf]
    %v2167 = vld [vmem:[#allocation9 + $0x78] sm:$0xf]
    %v2168 = vld [vmem:[#allocation9 + $0x7c] sm:$0xf]
    %v2169 = vpack.c.bf16 %v2135, %v2133
    %v2170 = vpack.c.bf16 %v2136, %v2134
    %v2171 = vld [vmem:[%s13] sm:$0x1]
    %v2173 = vlaneseq
    %v2174 = vshrl.u32 %v2173, 7
    %v2175 = vsub.s32 0, %v2174
    %v2176 = vrot.slane %v2171, %v2175
    %v2210 = vunpack.c.l.b16 %v2137
    %v2211 = vunpack.c.l.b16 %v2138
    %v2212 = vunpack.c.l.b16 %v2139
    %v2213 = vunpack.c.l.b16 %v2140
    %v2214 = vunpack.c.l.b16 %v2141
    %v2215 = vunpack.c.l.b16 %v2142
    %v2216 = vunpack.c.l.b16 %v2143
    %v2217 = vunpack.c.l.b16 %v2144
    %v2218 = vunpack.c.l.b16 %v2145
    %v2219 = vunpack.c.l.b16 %v2146
    %v2220 = vunpack.c.l.b16 %v2147
    %v2221 = vunpack.c.l.b16 %v2148
    %v2222 = vunpack.c.l.b16 %v2149
    %v2223 = vunpack.c.l.b16 %v2150
    %v2224 = vunpack.c.l.b16 %v2151
    %v2225 = vunpack.c.l.b16 %v2152
    %v2226 = vunpack.c.l.b16 %v2153
    %v2227 = vunpack.c.l.b16 %v2154
    %v2228 = vunpack.c.l.b16 %v2155
    %v2229 = vunpack.c.l.b16 %v2156
    %v2230 = vunpack.c.l.b16 %v2157
    %v2231 = vunpack.c.l.b16 %v2158
    %v2232 = vunpack.c.l.b16 %v2159
    %v2233 = vunpack.c.l.b16 %v2160
    %v2234 = vunpack.c.l.b16 %v2161
    %v2235 = vunpack.c.l.b16 %v2162
    %v2236 = vunpack.c.l.b16 %v2163
    %v2237 = vunpack.c.l.b16 %v2164
    %v2238 = vunpack.c.l.b16 %v2165
    %v2239 = vunpack.c.l.b16 %v2166
    %v2240 = vunpack.c.l.b16 %v2167
    %v2241 = vunpack.c.l.b16 %v2168
    %v2242 = vpack.c.b16 %v2211, %v2210
    %v2243 = vpack.c.b16 %v2213, %v2212
    %v2244 = vpack.c.b16 %v2215, %v2214
    %v2245 = vpack.c.b16 %v2217, %v2216
    %v2246 = vpack.c.b16 %v2219, %v2218
    %v2247 = vpack.c.b16 %v2221, %v2220
    %v2248 = vpack.c.b16 %v2223, %v2222
    %v2249 = vpack.c.b16 %v2225, %v2224
    %v2250 = vpack.c.b16 %v2227, %v2226
    %v2251 = vpack.c.b16 %v2229, %v2228
    %v2252 = vpack.c.b16 %v2231, %v2230
    %v2253 = vpack.c.b16 %v2233, %v2232
    %v2254 = vpack.c.b16 %v2235, %v2234
    %v2255 = vpack.c.b16 %v2237, %v2236
    %v2256 = vpack.c.b16 %v2239, %v2238
    %v2257 = vpack.c.b16 %v2241, %v2240
    %2274 = vmatprep.subr.bf16.mxu0 0
    %2275 = vmatpush1.bf16.msra.mxu0 %v2242
    %2276 = vmatprep.subr.bf16.mxu0 0
    %2277 = vmatpush1.bf16.msra.mxu0 %v2243
    %2278 = vmatprep.subr.bf16.mxu0 0
    %2279 = vmatpush1.bf16.msra.mxu0 %v2244
    %2280 = vmatprep.subr.bf16.mxu0 0
    %2281 = vmatpush1.bf16.msra.mxu0 %v2245
    %2282 = vmatprep.subr.bf16.mxu0 0
    %2283 = vmatpush1.bf16.msra.mxu0 %v2246
    %2284 = vmatprep.subr.bf16.mxu0 0
    %2285 = vmatpush1.bf16.msra.mxu0 %v2247
    %2286 = vmatprep.subr.bf16.mxu0 0
    %2287 = vmatpush1.bf16.msra.mxu0 %v2248
    %2288 = vmatprep.subr.bf16.mxu0 0
    %2289 = vmatpush1.bf16.msra.mxu0 %v2249
    %2290 = vmatprep.subr.bf16.mxu0 0
    %2291 = vmatpush1.bf16.msra.mxu0 %v2250
    %2292 = vmatprep.subr.bf16.mxu0 0
    %2293 = vmatpush1.bf16.msra.mxu0 %v2251
    %2294 = vmatprep.subr.bf16.mxu0 0
    %2295 = vmatpush1.bf16.msra.mxu0 %v2252
    %2296 = vmatprep.subr.bf16.mxu0 0
    %2297 = vmatpush1.bf16.msra.mxu0 %v2253
    %2298 = vmatprep.subr.bf16.mxu0 0
    %2299 = vmatpush1.bf16.msra.mxu0 %v2254
    %2300 = vmatprep.subr.bf16.mxu0 0
    %2301 = vmatpush1.bf16.msra.mxu0 %v2255
    %2302 = vmatprep.subr.bf16.mxu0 0
    %2303 = vmatpush1.bf16.msra.mxu0 %v2256
    %2304 = vmatprep.subr.bf16.mxu0 0
    %2305 = vmatpush1.bf16.msra.mxu0 %v2257
    %2306 = vmatprep.mubr.bf16.mxu0 %v2170
    %2307 = vmatmul.mubr.bf16.gmra.mrb[0].mxu0 %v2169
    %v2308 = vpop.f32.mrb[0].mxu0
    %v2309 = vadd.f32 %v2176, %v2308
    %v2310 = vpop.f32.mrb[0].mxu0
    %v2311 = vpop.f32.mrb[0].mxu0
    %v2312 = vadd.f32 %v2176, %v2311
    %v2313 = vpop.f32.mrb[0].mxu0
    %2314 = vdwg.mxu0
    %v2315 = vadd.f32 %v2309, %v1947
    %v2316 = vadd.f32 %v2312, %v1948
    %v2317 = vld [vmem:[%s14] sm:$0x1]
    %v2318 = vld [vmem:[%s15] sm:$0x1]
    %2319 = vadd.xlane.f32.xlu0 %v2315
    %v2320 = vpop.xlane.xlu0 %2319
    %2321 = vadd.xlane.f32.xlu0 %v2316
    %v2322 = vpop.xlane.xlu0 %2321
    %v2323 = vmul.f32 %v2320, %v120
    %v2324 = vmul.f32 %v2322, %v120
    %v2325 = vsub.f32 %v2315, %v2323
    %v2326 = vsub.f32 %v2316, %v2324
    %v2327 = vmul.f32 %v2325, %v2325
    %v2328 = vmul.f32 %v2326, %v2326
    %2329 = vadd.xlane.f32.xlu0 %v2327
    %v2330 = vpop.xlane.xlu0 %2329
    %2331 = vadd.xlane.f32.xlu0 %v2328
    %v2332 = vpop.xlane.xlu0 %2331
    %v2333 = vmul.f32 %v2330, %v120
    %v2334 = vmul.f32 %v2332, %v120
    %v2335 = vadd.f32 %v2333, 1e-12
    %v2336 = vadd.f32 %v2334, 1e-12
    %v2337 = vrsqrt.pop %v2335
    %v2338 = vrsqrt.pop %v2336
    %v2339 = vmul.f32 %v2325, %v2337
    %v2340 = vmul.f32 %v2326, %v2338
    %v2342 = vlaneseq
    %v2343 = vshrl.u32 %v2342, 7
    %v2344 = vsub.s32 0, %v2343
    %v2345 = vrot.slane %v2317, %v2344
    %v2347 = vmul.f32 %v2339, %v2345
    %v2348 = vmul.f32 %v2340, %v2345
    %v2350 = vlaneseq
    %v2351 = vshrl.u32 %v2350, 7
    %v2352 = vsub.s32 0, %v2351
    %v2353 = vrot.slane %v2318, %v2352
    %v2355 = vadd.f32 %v2347, %v2353
    %v2356 = vadd.f32 %v2348, %v2353
    %s2357 = scalar_lea.vmem [#allocation8], 192
    %v2358 = vld [vmem:[%s2357] sm:$0xff]
    %v2359 = vld [vmem:[%s2357 + $0x8] sm:$0xf]
    %v2360 = vld [vmem:[%s2357 + $0xc] sm:$0xff]
    %v2361 = vld [vmem:[%s2357 + $0x14] sm:$0xf]
    %v2362 = vld [vmem:[%s2357 + $0x18] sm:$0xff]
    %v2363 = vld [vmem:[%s2357 + $0x20] sm:$0xf]
    %v2364 = vld [vmem:[%s2357 + $0x24] sm:$0xff]
    %v2365 = vld [vmem:[%s2357 + $0x2c] sm:$0xf]
    %v2366 = vld [vmem:[%s2357 + $0x30] sm:$0xff]
    %v2367 = vld [vmem:[%s2357 + $0x38] sm:$0xf]
    %v2368 = vld [vmem:[%s2357 + $0x3c] sm:$0xff]
    %v2369 = vld [vmem:[%s2357 + $0x44] sm:$0xf]
    %v2370 = vld [vmem:[%s2357 + $0x48] sm:$0xff]
    %v2371 = vld [vmem:[%s2357 + $0x50] sm:$0xf]
    %v2372 = vld [vmem:[%s2357 + $0x54] sm:$0xff]
    %v2373 = vld [vmem:[%s2357 + $0x5c] sm:$0xf]
    %v2374 = vld [vmem:[%s2357 + $0x60] sm:$0xff]
    %v2375 = vld [vmem:[%s2357 + $0x68] sm:$0xf]
    %v2376 = vld [vmem:[%s2357 + $0x6c] sm:$0xff]
    %v2377 = vld [vmem:[%s2357 + $0x74] sm:$0xf]
    %v2378 = vld [vmem:[%s2357 + $0x78] sm:$0xff]
    %v2379 = vld [vmem:[%s2357 + $0x80] sm:$0xf]
    %v2380 = vld [vmem:[%s2357 + $0x84] sm:$0xff]
    %v2381 = vld [vmem:[%s2357 + $0x8c] sm:$0xf]
    %v2382 = vld [vmem:[%s2357 + $0x90] sm:$0xff]
    %v2383 = vld [vmem:[%s2357 + $0x98] sm:$0xf]
    %v2384 = vld [vmem:[%s2357 + $0x9c] sm:$0xff]
    %v2385 = vld [vmem:[%s2357 + $0xa4] sm:$0xf]
    %v2386 = vld [vmem:[%s2357 + $0xa8] sm:$0xff]
    %v2387 = vld [vmem:[%s2357 + $0xb0] sm:$0xf]
    %v2388 = vld [vmem:[%s2357 + $0xb4] sm:$0xff]
    %v2389 = vld [vmem:[%s2357 + $0xbc] sm:$0xf]
    %v2390 = vpack.c.bf16 %v2356, %v2355
    %s2391 = scalar_lea.vmem %s5, 3
    %v2392 = vld [vmem:[%s2391] sm:$0x7]
    %v2394 = vlaneseq
    %v2395 = vshrl.u32 %v2394, 7
    %v2396 = vsub.s32 0, %v2395
    %v2397 = vrot.slane %v2392, %v2396
    %v2398 = vlaneseq
    %v2399 = vshrl.u32 %v2398, 7
    %v2400 = vsub.s32 1, %v2399
    %v2401 = vrot.slane %v2392, %v2400
    %v2402 = vlaneseq
    %v2403 = vshrl.u32 %v2402, 7
    %v2404 = vsub.s32 2, %v2403
    %v2405 = vrot.slane %v2392, %v2404
    %v2441 = vunpack.c.l.b16 %v2358
    %v2442 = vunpack.c.h.b16 %v2358
    %v2443 = vunpack.c.l.b16 %v2359
    %v2444 = vunpack.c.l.b16 %v2360
    %v2445 = vunpack.c.h.b16 %v2360
    %v2446 = vunpack.c.l.b16 %v2361
    %v2447 = vunpack.c.l.b16 %v2362
    %v2448 = vunpack.c.h.b16 %v2362
    %v2449 = vunpack.c.l.b16 %v2363
    %v2450 = vunpack.c.l.b16 %v2364
    %v2451 = vunpack.c.h.b16 %v2364
    %v2452 = vunpack.c.l.b16 %v2365
    %v2453 = vunpack.c.l.b16 %v2366
    %v2454 = vunpack.c.h.b16 %v2366
    %v2455 = vunpack.c.l.b16 %v2367
    %v2456 = vunpack.c.l.b16 %v2368
    %v2457 = vunpack.c.h.b16 %v2368
    %v2458 = vunpack.c.l.b16 %v2369
    %v2459 = vunpack.c.l.b16 %v2370
    %v2460 = vunpack.c.h.b16 %v2370
    %v2461 = vunpack.c.l.b16 %v2371
    %v2462 = vunpack.c.l.b16 %v2372
    %v2463 = vunpack.c.h.b16 %v2372
    %v2464 = vunpack.c.l.b16 %v2373
    %v2465 = vunpack.c.l.b16 %v2374
    %v2466 = vunpack.c.h.b16 %v2374
    %v2467 = vunpack.c.l.b16 %v2375
    %v2468 = vunpack.c.l.b16 %v2376
    %v2469 = vunpack.c.h.b16 %v2376
    %v2470 = vunpack.c.l.b16 %v2377
    %v2471 = vunpack.c.l.b16 %v2378
    %v2472 = vunpack.c.h.b16 %v2378
    %v2473 = vunpack.c.l.b16 %v2379
    %v2474 = vunpack.c.l.b16 %v2380
    %v2475 = vunpack.c.h.b16 %v2380
    %v2476 = vunpack.c.l.b16 %v2381
    %v2477 = vunpack.c.l.b16 %v2382
    %v2478 = vunpack.c.h.b16 %v2382
    %v2479 = vunpack.c.l.b16 %v2383
    %v2480 = vunpack.c.l.b16 %v2384
    %v2481 = vunpack.c.h.b16 %v2384
    %v2482 = vunpack.c.l.b16 %v2385
    %v2483 = vunpack.c.l.b16 %v2386
    %v2484 = vunpack.c.h.b16 %v2386
    %v2485 = vunpack.c.l.b16 %v2387
    %v2486 = vunpack.c.l.b16 %v2388
    %v2487 = vunpack.c.h.b16 %v2388
    %v2488 = vunpack.c.l.b16 %v2389
    %v2489 = vpack.c.b16 %v2444, %v2441
    %v2490 = vpack.c.b16 %v2445, %v2442
    %v2491 = vpack.c.b16 %v2446, %v2443
    %v2492 = vpack.c.b16 %v2450, %v2447
    %v2493 = vpack.c.b16 %v2451, %v2448
    %v2494 = vpack.c.b16 %v2452, %v2449
    %v2495 = vpack.c.b16 %v2456, %v2453
    %v2496 = vpack.c.b16 %v2457, %v2454
    %v2497 = vpack.c.b16 %v2458, %v2455
    %v2498 = vpack.c.b16 %v2462, %v2459
    %v2499 = vpack.c.b16 %v2463, %v2460
    %v2500 = vpack.c.b16 %v2464, %v2461
    %v2501 = vpack.c.b16 %v2468, %v2465
    %v2502 = vpack.c.b16 %v2469, %v2466
    %v2503 = vpack.c.b16 %v2470, %v2467
    %v2504 = vpack.c.b16 %v2474, %v2471
    %v2505 = vpack.c.b16 %v2475, %v2472
    %v2506 = vpack.c.b16 %v2476, %v2473
    %v2507 = vpack.c.b16 %v2480, %v2477
    %v2508 = vpack.c.b16 %v2481, %v2478
    %v2509 = vpack.c.b16 %v2482, %v2479
    %v2510 = vpack.c.b16 %v2486, %v2483
    %v2511 = vpack.c.b16 %v2487, %v2484
    %v2512 = vpack.c.b16 %v2488, %v2485
    %2537 = vmatprep.subr.bf16.mxu0 %v2490
    %2538 = vmatpush1.bf16.msra.mxu0 %v2489
    %2539 = vmatprep.subr.bf16.mxu0 %v2493
    %2540 = vmatpush1.bf16.msra.mxu0 %v2492
    %2541 = vmatprep.subr.bf16.mxu0 %v2496
    %2542 = vmatpush1.bf16.msra.mxu0 %v2495
    %2543 = vmatprep.subr.bf16.mxu0 %v2499
    %2544 = vmatpush1.bf16.msra.mxu0 %v2498
    %2545 = vmatprep.subr.bf16.mxu0 %v2502
    %2546 = vmatpush1.bf16.msra.mxu0 %v2501
    %2547 = vmatprep.subr.bf16.mxu0 %v2505
    %2548 = vmatpush1.bf16.msra.mxu0 %v2504
    %2549 = vmatprep.subr.bf16.mxu0 %v2508
    %2550 = vmatpush1.bf16.msra.mxu0 %v2507
    %2551 = vmatprep.subr.bf16.mxu0 %v2511
    %2552 = vmatpush1.bf16.msra.mxu0 %v2510
    %2553 = vmatprep.subr.bf16.mxu0 0
    %2554 = vmatpush1.bf16.msra.mxu0 0
    %2555 = vmatprep.subr.bf16.mxu0 0
    %2556 = vmatpush1.bf16.msra.mxu0 0
    %2557 = vmatprep.subr.bf16.mxu0 0
    %2558 = vmatpush1.bf16.msra.mxu0 0
    %2559 = vmatprep.subr.bf16.mxu0 0
    %2560 = vmatpush1.bf16.msra.mxu0 0
    %2561 = vmatprep.subr.bf16.mxu0 0
    %2562 = vmatpush1.bf16.msra.mxu0 0
    %2563 = vmatprep.subr.bf16.mxu0 0
    %2564 = vmatpush1.bf16.msra.mxu0 0
    %2565 = vmatprep.subr.bf16.mxu0 0
    %2566 = vmatpush1.bf16.msra.mxu0 0
    %2567 = vmatprep.subr.bf16.mxu0 0
    %2568 = vmatpush1.bf16.msra.mxu0 0
    %2569 = vmatprep.mubr.bf16.mxu0 0
    %2570 = vmatmul.mubr.bf16.gmra.mrb[0].mxu0 %v2390
    %v2571 = vpop.f32.mrb[0].mxu0
    %v2572 = vadd.f32 %v2397, %v2571
    %v2573 = vpop.f32.mrb[0].mxu0
    %v2574 = vadd.f32 %v2401, %v2573
    %v2575 = vpop.f32.mrb[0].mxu0
    %v2576 = vadd.f32 %v2397, %v2575
    %v2577 = vpop.f32.mrb[0].mxu0
    %v2578 = vadd.f32 %v2401, %v2577
    %2579 = vdwg.mxu0
    %2580 = vmatprep.subr.bf16.mxu0 0
    %2581 = vmatpush1.bf16.msra.mxu0 %v2491
    %2582 = vmatprep.subr.bf16.mxu0 0
    %2583 = vmatpush1.bf16.msra.mxu0 %v2494
    %2584 = vmatprep.subr.bf16.mxu0 0
    %2585 = vmatpush1.bf16.msra.mxu0 %v2497
    %2586 = vmatprep.subr.bf16.mxu0 0
    %2587 = vmatpush1.bf16.msra.mxu0 %v2500
    %2588 = vmatprep.subr.bf16.mxu0 0
    %2589 = vmatpush1.bf16.msra.mxu0 %v2503
    %2590 = vmatprep.subr.bf16.mxu0 0
    %2591 = vmatpush1.bf16.msra.mxu0 %v2506
    %2592 = vmatprep.subr.bf16.mxu0 0
    %2593 = vmatpush1.bf16.msra.mxu0 %v2509
    %2594 = vmatprep.subr.bf16.mxu0 0
    %2595 = vmatpush1.bf16.msra.mxu0 %v2512
    %2596 = vmatprep.subr.bf16.mxu0 0
    %2597 = vmatpush1.bf16.msra.mxu0 0
    %2598 = vmatprep.subr.bf16.mxu0 0
    %2599 = vmatpush1.bf16.msra.mxu0 0
    %2600 = vmatprep.subr.bf16.mxu0 0
    %2601 = vmatpush1.bf16.msra.mxu0 0
    %2602 = vmatprep.subr.bf16.mxu0 0
    %2603 = vmatpush1.bf16.msra.mxu0 0
    %2604 = vmatprep.subr.bf16.mxu0 0
    %2605 = vmatpush1.bf16.msra.mxu0 0
    %2606 = vmatprep.subr.bf16.mxu0 0
    %2607 = vmatpush1.bf16.msra.mxu0 0
    %2608 = vmatprep.subr.bf16.mxu0 0
    %2609 = vmatpush1.bf16.msra.mxu0 0
    %2610 = vmatprep.subr.bf16.mxu0 0
    %2611 = vmatpush1.bf16.msra.mxu0 0
    %2612 = vmatprep.mubr.bf16.mxu0 0
    %2613 = vmatmul.mubr.bf16.gmra.mrb[0].mxu0 %v2390
    %v2614 = vpop.f32.mrb[0].mxu0
    %v2615 = vadd.f32 %v2405, %v2614
    %v2616 = vpop.f32.mrb[0].mxu0
    %v2617 = vpop.f32.mrb[0].mxu0
    %v2618 = vadd.f32 %v2405, %v2617
    %v2619 = vpop.f32.mrb[0].mxu0
    %2620 = vdwg.mxu0
    %v2621 = vld [vmem:[%s1] sm:$0x1]
    %v2623 = vsel %vm418, %v2572, 0
    %v2626 = vsel %vm418, %v2574, 0
    %2628 = vmatprep.subr.mxu0 0.0
    %2629 = vmatpush1.xpose.msra.mxu0 %v2626
    %2630 = vmatprep.subr.mxu0 0.0
    %2631 = vmatpush1.xpose.msra.mxu0 0.0
    %2632 = vmatprep.subr.mxu0 0.0
    %2633 = vmatpush1.xpose.msra.mxu0 0.0
    %2634 = vmatprep.subr.mxu0 0.0
    %2635 = vmatpush1.xpose.msra.mxu0 0.0
    %2636 = vmatprep.subr.mxu0 0.0
    %2637 = vmatpush1.xpose.msra.mxu0 0.0
    %2638 = vmatprep.subr.mxu0 0.0
    %2639 = vmatpush1.xpose.msra.mxu0 0.0
    %2640 = vmatprep.subr.mxu0 0.0
    %2641 = vmatpush1.xpose.msra.mxu0 0.0
    %2642 = vmatprep.subr.mxu0 0.0
    %2643 = vmatpush1.xpose.msra.mxu0 0.0
    %2644 = vmatprep.subr.mxu0 0.0
    %2645 = vmatpush1.xpose.msra.mxu0 0.0
    %2646 = vmatprep.subr.mxu0 0.0
    %2647 = vmatpush1.xpose.msra.mxu0 0.0
    %2648 = vmatprep.subr.mxu0 0.0
    %2649 = vmatpush1.xpose.msra.mxu0 0.0
    %2650 = vmatprep.subr.mxu0 0.0
    %2651 = vmatpush1.xpose.msra.mxu0 0.0
    %2652 = vmatprep.subr.mxu0 0.0
    %2653 = vmatpush1.xpose.msra.mxu0 0.0
    %2654 = vmatprep.subr.mxu0 0.0
    %2655 = vmatpush1.xpose.msra.mxu0 0.0
    %2656 = vmatprep.subr.mxu0 0.0
    %2657 = vmatpush1.xpose.msra.mxu0 0.0
    %2658 = vmatprep.subr.mxu0 0.0
    %2659 = vmatpush1.xpose.msra.mxu0 0.0
    %2660 = vmatprep.subr.mxu0 0.0
    %2661 = vmatpush1.xpose.msra.mxu0 0.0
    %2662 = vmatprep.subr.mxu0 0.0
    %2663 = vmatpush1.xpose.msra.mxu0 0.0
    %2664 = vmatprep.subr.mxu0 0.0
    %2665 = vmatpush1.xpose.msra.mxu0 0.0
    %2666 = vmatprep.subr.mxu0 0.0
    %2667 = vmatpush1.xpose.msra.mxu0 0.0
    %2668 = vmatprep.subr.mxu0 0.0
    %2669 = vmatpush1.xpose.msra.mxu0 0.0
    %2670 = vmatprep.subr.mxu0 0.0
    %2671 = vmatpush1.xpose.msra.mxu0 0.0
    %2672 = vmatprep.subr.mxu0 0.0
    %2673 = vmatpush1.xpose.msra.mxu0 0.0
    %2674 = vmatprep.subr.mxu0 0.0
    %2675 = vmatpush1.xpose.msra.mxu0 0.0
    %2676 = vmatprep.subr.mxu0 0.0
    %2677 = vmatpush1.xpose.msra.mxu0 0.0
    %2678 = vmatprep.subr.mxu0 0.0
    %2679 = vmatpush1.xpose.msra.mxu0 0.0
    %2680 = vmatprep.subr.mxu0 0.0
    %2681 = vmatpush1.xpose.msra.mxu0 0.0
    %2682 = vmatprep.subr.mxu0 0.0
    %2683 = vmatpush1.xpose.msra.mxu0 0.0
    %2684 = vmatprep.subr.mxu0 0.0
    %2685 = vmatpush1.xpose.msra.mxu0 0.0
    %2686 = vmatprep.subr.mxu0 0.0
    %2687 = vmatpush1.xpose.msra.mxu0 0.0
    %2688 = vmatprep.subr.mxu0 0.0
    %2689 = vmatpush1.xpose.msra.mxu0 0.0
    %2690 = vmatprep.subr.mxu0 0.0
    %2691 = vmatpush1.xpose.msra.mxu0 0.0
    %2692 = vmatprep.mubr.f32.mxu0 0.0
    %2693 = vmatmul.mubr.f32.gmra.mrb[0].mxu0 %v2623
    %v2694 = vpop.f32.mrb[0].mxu0
    %v2695 = vadd.f32 0.0, %v2694
    %v2696 = vpop.f32.mrb[0].mxu0
    %2697 = vdwg.mxu0
    %v2698 = vmul.f32 %v2695, 0.17677669
    %v2699 = vlaneseq
    %v2700 = vshrl.u32 %v2699, 7
    %v2701 = vsub.s32 0, %v2700
    %v2702 = vrot.slane %v2621, %v2701
    %v2703 = vadd.f32 %v2698, %v2702
    %v2704 = vsel %vm501, %v2703, -inf
    %2705 = vmax.xlane.f32.xlu0 %v2704
    %v2706 = vpop.xlane.xlu0 %2705
    %v2707 = vsub.f32 %v2703, %v2706
    %v2708 = vmul.f32 %v2707, 1.442695
    %v2709 = vpow.pop %v2708
    %v2710 = vsel %vm501, %v2709, 0.0
    %2711 = vadd.xlane.f32.xlu0 %v2710
    %v2712 = vpop.xlane.xlu0 %2711
    %v2713 = vrcp.pop %v2712
    %v2714 = vmul.f32 %v2709, %v2713
    %v2716 = vsel %vm501, %v2714, 0
    %2718 = vmatprep.subr.mxu0 0.0
    %2719 = vmatpush1.msra.mxu0 %v2615
    %2720 = vmatprep.subr.mxu0 0.0
    %2721 = vmatpush1.msra.mxu0 0.0
    %2722 = vmatprep.subr.mxu0 0.0
    %2723 = vmatpush1.msra.mxu0 0.0
    %2724 = vmatprep.subr.mxu0 0.0
    %2725 = vmatpush1.msra.mxu0 0.0
    %2726 = vmatprep.subr.mxu0 0.0
    %2727 = vmatpush1.msra.mxu0 0.0
    %2728 = vmatprep.subr.mxu0 0.0
    %2729 = vmatpush1.msra.mxu0 0.0
    %2730 = vmatprep.subr.mxu0 0.0
    %2731 = vmatpush1.msra.mxu0 0.0
    %2732 = vmatprep.subr.mxu0 0.0
    %2733 = vmatpush1.msra.mxu0 0.0
    %2734 = vmatprep.subr.mxu0 0.0
    %2735 = vmatpush1.msra.mxu0 0.0
    %2736 = vmatprep.subr.mxu0 0.0
    %2737 = vmatpush1.msra.mxu0 0.0
    %2738 = vmatprep.subr.mxu0 0.0
    %2739 = vmatpush1.msra.mxu0 0.0
    %2740 = vmatprep.subr.mxu0 0.0
    %2741 = vmatpush1.msra.mxu0 0.0
    %2742 = vmatprep.subr.mxu0 0.0
    %2743 = vmatpush1.msra.mxu0 0.0
    %2744 = vmatprep.subr.mxu0 0.0
    %2745 = vmatpush1.msra.mxu0 0.0
    %2746 = vmatprep.subr.mxu0 0.0
    %2747 = vmatpush1.msra.mxu0 0.0
    %2748 = vmatprep.subr.mxu0 0.0
    %2749 = vmatpush1.msra.mxu0 0.0
    %2750 = vmatprep.subr.mxu0 0.0
    %2751 = vmatpush1.msra.mxu0 0.0
    %2752 = vmatprep.subr.mxu0 0.0
    %2753 = vmatpush1.msra.mxu0 0.0
    %2754 = vmatprep.subr.mxu0 0.0
    %2755 = vmatpush1.msra.mxu0 0.0
    %2756 = vmatprep.subr.mxu0 0.0
    %2757 = vmatpush1.msra.mxu0 0.0
    %2758 = vmatprep.subr.mxu0 0.0
    %2759 = vmatpush1.msra.mxu0 0.0
    %2760 = vmatprep.subr.mxu0 0.0
    %2761 = vmatpush1.msra.mxu0 0.0
    %2762 = vmatprep.subr.mxu0 0.0
    %2763 = vmatpush1.msra.mxu0 0.0
    %2764 = vmatprep.subr.mxu0 0.0
    %2765 = vmatpush1.msra.mxu0 0.0
    %2766 = vmatprep.subr.mxu0 0.0
    %2767 = vmatpush1.msra.mxu0 0.0
    %2768 = vmatprep.subr.mxu0 0.0
    %2769 = vmatpush1.msra.mxu0 0.0
    %2770 = vmatprep.subr.mxu0 0.0
    %2771 = vmatpush1.msra.mxu0 0.0
    %2772 = vmatprep.subr.mxu0 0.0
    %2773 = vmatpush1.msra.mxu0 0.0
    %2774 = vmatprep.subr.mxu0 0.0
    %2775 = vmatpush1.msra.mxu0 0.0
    %2776 = vmatprep.subr.mxu0 0.0
    %2777 = vmatpush1.msra.mxu0 0.0
    %2778 = vmatprep.subr.mxu0 0.0
    %2779 = vmatpush1.msra.mxu0 0.0
    %2780 = vmatprep.subr.mxu0 0.0
    %2781 = vmatpush1.msra.mxu0 0.0
    %2782 = vmatprep.mubr.f32.mxu0 0.0
    %2783 = vmatmul.mubr.f32.gmra.mrb[0].mxu0 %v2716
    %v2784 = vpop.f32.mrb[0].mxu0
    %v2785 = vadd.f32 0.0, %v2784
    %v2786 = vpop.f32.mrb[0].mxu0
    %2787 = vdwg.mxu0
    %2788 = vst.msk [vmem:[#allocation2] sm:$0xff] %vm418, %v2785
    %2789 = vrot.lane.b32.xlu0 %v2572, 96
    %v2790 = vpop.permute.xlu0 %2789
    %2791 = vrot.lane.b32.xlu0 %v2574, 96
    %v2792 = vpop.permute.xlu0 %2791
    %v2793 = vsel %vm418, %v2790, 0
    %v2795 = vsel %vm418, %v2792, 0
    %2797 = vmatprep.subr.mxu0 0.0
    %2798 = vmatpush1.xpose.msra.mxu0 %v2795
    %2799 = vmatprep.subr.mxu0 0.0
    %2800 = vmatpush1.xpose.msra.mxu0 0.0
    %2801 = vmatprep.subr.mxu0 0.0
    %2802 = vmatpush1.xpose.msra.mxu0 0.0
    %2803 = vmatprep.subr.mxu0 0.0
    %2804 = vmatpush1.xpose.msra.mxu0 0.0
    %2805 = vmatprep.subr.mxu0 0.0
    %2806 = vmatpush1.xpose.msra.mxu0 0.0
    %2807 = vmatprep.subr.mxu0 0.0
    %2808 = vmatpush1.xpose.msra.mxu0 0.0
    %2809 = vmatprep.subr.mxu0 0.0
    %2810 = vmatpush1.xpose.msra.mxu0 0.0
    %2811 = vmatprep.subr.mxu0 0.0
    %2812 = vmatpush1.xpose.msra.mxu0 0.0
    %2813 = vmatprep.subr.mxu0 0.0
    %2814 = vmatpush1.xpose.msra.mxu0 0.0
    %2815 = vmatprep.subr.mxu0 0.0
    %2816 = vmatpush1.xpose.msra.mxu0 0.0
    %2817 = vmatprep.subr.mxu0 0.0
    %2818 = vmatpush1.xpose.msra.mxu0 0.0
    %2819 = vmatprep.subr.mxu0 0.0
    %2820 = vmatpush1.xpose.msra.mxu0 0.0
    %2821 = vmatprep.subr.mxu0 0.0
    %2822 = vmatpush1.xpose.msra.mxu0 0.0
    %2823 = vmatprep.subr.mxu0 0.0
    %2824 = vmatpush1.xpose.msra.mxu0 0.0
    %2825 = vmatprep.subr.mxu0 0.0
    %2826 = vmatpush1.xpose.msra.mxu0 0.0
    %2827 = vmatprep.subr.mxu0 0.0
    %2828 = vmatpush1.xpose.msra.mxu0 0.0
    %2829 = vmatprep.subr.mxu0 0.0
    %2830 = vmatpush1.xpose.msra.mxu0 0.0
    %2831 = vmatprep.subr.mxu0 0.0
    %2832 = vmatpush1.xpose.msra.mxu0 0.0
    %2833 = vmatprep.subr.mxu0 0.0
    %2834 = vmatpush1.xpose.msra.mxu0 0.0
    %2835 = vmatprep.subr.mxu0 0.0
    %2836 = vmatpush1.xpose.msra.mxu0 0.0
    %2837 = vmatprep.subr.mxu0 0.0
    %2838 = vmatpush1.xpose.msra.mxu0 0.0
    %2839 = vmatprep.subr.mxu0 0.0
    %2840 = vmatpush1.xpose.msra.mxu0 0.0
    %2841 = vmatprep.subr.mxu0 0.0
    %2842 = vmatpush1.xpose.msra.mxu0 0.0
    %2843 = vmatprep.subr.mxu0 0.0
    %2844 = vmatpush1.xpose.msra.mxu0 0.0
    %2845 = vmatprep.subr.mxu0 0.0
    %2846 = vmatpush1.xpose.msra.mxu0 0.0
    %2847 = vmatprep.subr.mxu0 0.0
    %2848 = vmatpush1.xpose.msra.mxu0 0.0
    %2849 = vmatprep.subr.mxu0 0.0
    %2850 = vmatpush1.xpose.msra.mxu0 0.0
    %2851 = vmatprep.subr.mxu0 0.0
    %2852 = vmatpush1.xpose.msra.mxu0 0.0
    %2853 = vmatprep.subr.mxu0 0.0
    %2854 = vmatpush1.xpose.msra.mxu0 0.0
    %2855 = vmatprep.subr.mxu0 0.0
    %2856 = vmatpush1.xpose.msra.mxu0 0.0
    %2857 = vmatprep.subr.mxu0 0.0
    %2858 = vmatpush1.xpose.msra.mxu0 0.0
    %2859 = vmatprep.subr.mxu0 0.0
    %2860 = vmatpush1.xpose.msra.mxu0 0.0
    %2861 = vmatprep.mubr.f32.mxu0 0.0
    %2862 = vmatmul.mubr.f32.gmra.mrb[0].mxu0 %v2793
    %v2863 = vpop.f32.mrb[0].mxu0
    %v2864 = vadd.f32 0.0, %v2863
    %v2865 = vpop.f32.mrb[0].mxu0
    %2866 = vdwg.mxu0
    %v2867 = vmul.f32 %v2864, 0.17677669
    %v2868 = vadd.f32 %v2867, %v2702
    %v2869 = vsel %vm501, %v2868, -inf
    %2870 = vmax.xlane.f32.xlu0 %v2869
    %v2871 = vpop.xlane.xlu0 %2870
    %v2872 = vsub.f32 %v2868, %v2871
    %v2873 = vmul.f32 %v2872, 1.442695
    %v2874 = vpow.pop %v2873
    %v2875 = vsel %vm501, %v2874, 0.0
    %2876 = vadd.xlane.f32.xlu0 %v2875
    %v2877 = vpop.xlane.xlu0 %2876
    %v2878 = vrcp.pop %v2877
    %v2879 = vmul.f32 %v2874, %v2878
    %2881 = vrot.lane.b32.xlu0 %v2615, 96
    %v2882 = vpop.permute.xlu0 %2881
    %v2885 = vsel %vm501, %v2879, 0
    %2887 = vmatprep.subr.mxu0 0.0
    %2888 = vmatpush1.msra.mxu0 %v2882
    %2889 = vmatprep.subr.mxu0 0.0
    %2890 = vmatpush1.msra.mxu0 0.0
    %2891 = vmatprep.subr.mxu0 0.0
    %2892 = vmatpush1.msra.mxu0 0.0
    %2893 = vmatprep.subr.mxu0 0.0
    %2894 = vmatpush1.msra.mxu0 0.0
    %2895 = vmatprep.subr.mxu0 0.0
    %2896 = vmatpush1.msra.mxu0 0.0
    %2897 = vmatprep.subr.mxu0 0.0
    %2898 = vmatpush1.msra.mxu0 0.0
    %2899 = vmatprep.subr.mxu0 0.0
    %2900 = vmatpush1.msra.mxu0 0.0
    %2901 = vmatprep.subr.mxu0 0.0
    %2902 = vmatpush1.msra.mxu0 0.0
    %2903 = vmatprep.subr.mxu0 0.0
    %2904 = vmatpush1.msra.mxu0 0.0
    %2905 = vmatprep.subr.mxu0 0.0
    %2906 = vmatpush1.msra.mxu0 0.0
    %2907 = vmatprep.subr.mxu0 0.0
    %2908 = vmatpush1.msra.mxu0 0.0
    %2909 = vmatprep.subr.mxu0 0.0
    %2910 = vmatpush1.msra.mxu0 0.0
    %2911 = vmatprep.subr.mxu0 0.0
    %2912 = vmatpush1.msra.mxu0 0.0
    %2913 = vmatprep.subr.mxu0 0.0
    %2914 = vmatpush1.msra.mxu0 0.0
    %2915 = vmatprep.subr.mxu0 0.0
    %2916 = vmatpush1.msra.mxu0 0.0
    %2917 = vmatprep.subr.mxu0 0.0
    %2918 = vmatpush1.msra.mxu0 0.0
    %2919 = vmatprep.subr.mxu0 0.0
    %2920 = vmatpush1.msra.mxu0 0.0
    %2921 = vmatprep.subr.mxu0 0.0
    %2922 = vmatpush1.msra.mxu0 0.0
    %2923 = vmatprep.subr.mxu0 0.0
    %2924 = vmatpush1.msra.mxu0 0.0
    %2925 = vmatprep.subr.mxu0 0.0
    %2926 = vmatpush1.msra.mxu0 0.0
    %2927 = vmatprep.subr.mxu0 0.0
    %2928 = vmatpush1.msra.mxu0 0.0
    %2929 = vmatprep.subr.mxu0 0.0
    %2930 = vmatpush1.msra.mxu0 0.0
    %2931 = vmatprep.subr.mxu0 0.0
    %2932 = vmatpush1.msra.mxu0 0.0
    %2933 = vmatprep.subr.mxu0 0.0
    %2934 = vmatpush1.msra.mxu0 0.0
    %2935 = vmatprep.subr.mxu0 0.0
    %2936 = vmatpush1.msra.mxu0 0.0
    %2937 = vmatprep.subr.mxu0 0.0
    %2938 = vmatpush1.msra.mxu0 0.0
    %2939 = vmatprep.subr.mxu0 0.0
    %2940 = vmatpush1.msra.mxu0 0.0
    %2941 = vmatprep.subr.mxu0 0.0
    %2942 = vmatpush1.msra.mxu0 0.0
    %2943 = vmatprep.subr.mxu0 0.0
    %2944 = vmatpush1.msra.mxu0 0.0
    %2945 = vmatprep.subr.mxu0 0.0
    %2946 = vmatpush1.msra.mxu0 0.0
    %2947 = vmatprep.subr.mxu0 0.0
    %2948 = vmatpush1.msra.mxu0 0.0
    %2949 = vmatprep.subr.mxu0 0.0
    %2950 = vmatpush1.msra.mxu0 0.0
    %2951 = vmatprep.mubr.f32.mxu0 0.0
    %2952 = vmatmul.mubr.f32.gmra.mrb[0].mxu0 %v2885
    %v2953 = vpop.f32.mrb[0].mxu0
    %v2954 = vadd.f32 0.0, %v2953
    %v2955 = vpop.f32.mrb[0].mxu0
    %2956 = vdwg.mxu0
    %2958 = vrot.lane.b32.xlu0 %v2954, 32
    %v2959 = vpop.permute.xlu0 %2958
    %2961 = vst.msk [vmem:[#allocation2] sm:$0xff] %vm759, %v2959
    %2962 = vrot.lane.b32.xlu0 %v2572, 64
    %v2963 = vpop.permute.xlu0 %2962
    %2964 = vrot.lane.b32.xlu0 %v2574, 64
    %v2965 = vpop.permute.xlu0 %2964
    %v2966 = vsel %vm418, %v2963, 0
    %v2968 = vsel %vm418, %v2965, 0
    %2970 = vmatprep.subr.mxu0 0.0
    %2971 = vmatpush1.xpose.msra.mxu0 %v2968
    %2972 = vmatprep.subr.mxu0 0.0
    %2973 = vmatpush1.xpose.msra.mxu0 0.0
    %2974 = vmatprep.subr.mxu0 0.0
    %2975 = vmatpush1.xpose.msra.mxu0 0.0
    %2976 = vmatprep.subr.mxu0 0.0
    %2977 = vmatpush1.xpose.msra.mxu0 0.0
    %2978 = vmatprep.subr.mxu0 0.0
    %2979 = vmatpush1.xpose.msra.mxu0 0.0
    %2980 = vmatprep.subr.mxu0 0.0
    %2981 = vmatpush1.xpose.msra.mxu0 0.0
    %2982 = vmatprep.subr.mxu0 0.0
    %2983 = vmatpush1.xpose.msra.mxu0 0.0
    %2984 = vmatprep.subr.mxu0 0.0
    %2985 = vmatpush1.xpose.msra.mxu0 0.0
    %2986 = vmatprep.subr.mxu0 0.0
    %2987 = vmatpush1.xpose.msra.mxu0 0.0
    %2988 = vmatprep.subr.mxu0 0.0
    %2989 = vmatpush1.xpose.msra.mxu0 0.0
    %2990 = vmatprep.subr.mxu0 0.0
    %2991 = vmatpush1.xpose.msra.mxu0 0.0
    %2992 = vmatprep.subr.mxu0 0.0
    %2993 = vmatpush1.xpose.msra.mxu0 0.0
    %2994 = vmatprep.subr.mxu0 0.0
    %2995 = vmatpush1.xpose.msra.mxu0 0.0
    %2996 = vmatprep.subr.mxu0 0.0
    %2997 = vmatpush1.xpose.msra.mxu0 0.0
    %2998 = vmatprep.subr.mxu0 0.0
    %2999 = vmatpush1.xpose.msra.mxu0 0.0
    %3000 = vmatprep.subr.mxu0 0.0
    %3001 = vmatpush1.xpose.msra.mxu0 0.0
    %3002 = vmatprep.subr.mxu0 0.0
    %3003 = vmatpush1.xpose.msra.mxu0 0.0
    %3004 = vmatprep.subr.mxu0 0.0
    %3005 = vmatpush1.xpose.msra.mxu0 0.0
    %3006 = vmatprep.subr.mxu0 0.0
    %3007 = vmatpush1.xpose.msra.mxu0 0.0
    %3008 = vmatprep.subr.mxu0 0.0
    %3009 = vmatpush1.xpose.msra.mxu0 0.0
    %3010 = vmatprep.subr.mxu0 0.0
    %3011 = vmatpush1.xpose.msra.mxu0 0.0
    %3012 = vmatprep.subr.mxu0 0.0
    %3013 = vmatpush1.xpose.msra.mxu0 0.0
    %3014 = vmatprep.subr.mxu0 0.0
    %3015 = vmatpush1.xpose.msra.mxu0 0.0
    %3016 = vmatprep.subr.mxu0 0.0
    %3017 = vmatpush1.xpose.msra.mxu0 0.0
    %3018 = vmatprep.subr.mxu0 0.0
    %3019 = vmatpush1.xpose.msra.mxu0 0.0
    %3020 = vmatprep.subr.mxu0 0.0
    %3021 = vmatpush1.xpose.msra.mxu0 0.0
    %3022 = vmatprep.subr.mxu0 0.0
    %3023 = vmatpush1.xpose.msra.mxu0 0.0
    %3024 = vmatprep.subr.mxu0 0.0
    %3025 = vmatpush1.xpose.msra.mxu0 0.0
    %3026 = vmatprep.subr.mxu0 0.0
    %3027 = vmatpush1.xpose.msra.mxu0 0.0
    %3028 = vmatprep.subr.mxu0 0.0
    %3029 = vmatpush1.xpose.msra.mxu0 0.0
    %3030 = vmatprep.subr.mxu0 0.0
    %3031 = vmatpush1.xpose.msra.mxu0 0.0
    %3032 = vmatprep.subr.mxu0 0.0
    %3033 = vmatpush1.xpose.msra.mxu0 0.0
    %3034 = vmatprep.mubr.f32.mxu0 0.0
    %3035 = vmatmul.mubr.f32.gmra.mrb[0].mxu0 %v2966
    %v3036 = vpop.f32.mrb[0].mxu0
    %v3037 = vadd.f32 0.0, %v3036
    %v3038 = vpop.f32.mrb[0].mxu0
    %3039 = vdwg.mxu0
    %v3040 = vmul.f32 %v3037, 0.17677669
    %v3041 = vadd.f32 %v3040, %v2702
    %v3042 = vsel %vm501, %v3041, -inf
    %3043 = vmax.xlane.f32.xlu0 %v3042
    %v3044 = vpop.xlane.xlu0 %3043
    %v3045 = vsub.f32 %v3041, %v3044
    %v3046 = vmul.f32 %v3045, 1.442695
    %v3047 = vpow.pop %v3046
    %v3048 = vsel %vm501, %v3047, 0.0
    %3049 = vadd.xlane.f32.xlu0 %v3048
    %v3050 = vpop.xlane.xlu0 %3049
    %v3051 = vrcp.pop %v3050
    %v3052 = vmul.f32 %v3047, %v3051
    %3053 = vrot.lane.b32.xlu0 %v2615, 64
    %v3054 = vpop.permute.xlu0 %3053
    %v3057 = vsel %vm501, %v3052, 0
    %3059 = vmatprep.subr.mxu0 0.0
    %3060 = vmatpush1.msra.mxu0 %v3054
    %3061 = vmatprep.subr.mxu0 0.0
    %3062 = vmatpush1.msra.mxu0 0.0
    %3063 = vmatprep.subr.mxu0 0.0
    %3064 = vmatpush1.msra.mxu0 0.0
    %3065 = vmatprep.subr.mxu0 0.0
    %3066 = vmatpush1.msra.mxu0 0.0
    %3067 = vmatprep.subr.mxu0 0.0
    %3068 = vmatpush1.msra.mxu0 0.0
    %3069 = vmatprep.subr.mxu0 0.0
    %3070 = vmatpush1.msra.mxu0 0.0
    %3071 = vmatprep.subr.mxu0 0.0
    %3072 = vmatpush1.msra.mxu0 0.0
    %3073 = vmatprep.subr.mxu0 0.0
    %3074 = vmatpush1.msra.mxu0 0.0
    %3075 = vmatprep.subr.mxu0 0.0
    %3076 = vmatpush1.msra.mxu0 0.0
    %3077 = vmatprep.subr.mxu0 0.0
    %3078 = vmatpush1.msra.mxu0 0.0
    %3079 = vmatprep.subr.mxu0 0.0
    %3080 = vmatpush1.msra.mxu0 0.0
    %3081 = vmatprep.subr.mxu0 0.0
    %3082 = vmatpush1.msra.mxu0 0.0
    %3083 = vmatprep.subr.mxu0 0.0
    %3084 = vmatpush1.msra.mxu0 0.0
    %3085 = vmatprep.subr.mxu0 0.0
    %3086 = vmatpush1.msra.mxu0 0.0
    %3087 = vmatprep.subr.mxu0 0.0
    %3088 = vmatpush1.msra.mxu0 0.0
    %3089 = vmatprep.subr.mxu0 0.0
    %3090 = vmatpush1.msra.mxu0 0.0
    %3091 = vmatprep.subr.mxu0 0.0
    %3092 = vmatpush1.msra.mxu0 0.0
    %3093 = vmatprep.subr.mxu0 0.0
    %3094 = vmatpush1.msra.mxu0 0.0
    %3095 = vmatprep.subr.mxu0 0.0
    %3096 = vmatpush1.msra.mxu0 0.0
    %3097 = vmatprep.subr.mxu0 0.0
    %3098 = vmatpush1.msra.mxu0 0.0
    %3099 = vmatprep.subr.mxu0 0.0
    %3100 = vmatpush1.msra.mxu0 0.0
    %3101 = vmatprep.subr.mxu0 0.0
    %3102 = vmatpush1.msra.mxu0 0.0
    %3103 = vmatprep.subr.mxu0 0.0
    %3104 = vmatpush1.msra.mxu0 0.0
    %3105 = vmatprep.subr.mxu0 0.0
    %3106 = vmatpush1.msra.mxu0 0.0
    %3107 = vmatprep.subr.mxu0 0.0
    %3108 = vmatpush1.msra.mxu0 0.0
    %3109 = vmatprep.subr.mxu0 0.0
    %3110 = vmatpush1.msra.mxu0 0.0
    %3111 = vmatprep.subr.mxu0 0.0
    %3112 = vmatpush1.msra.mxu0 0.0
    %3113 = vmatprep.subr.mxu0 0.0
    %3114 = vmatpush1.msra.mxu0 0.0
    %3115 = vmatprep.subr.mxu0 0.0
    %3116 = vmatpush1.msra.mxu0 0.0
    %3117 = vmatprep.subr.mxu0 0.0
    %3118 = vmatpush1.msra.mxu0 0.0
    %3119 = vmatprep.subr.mxu0 0.0
    %3120 = vmatpush1.msra.mxu0 0.0
    %3121 = vmatprep.subr.mxu0 0.0
    %3122 = vmatpush1.msra.mxu0 0.0
    %3123 = vmatprep.mubr.f32.mxu0 0.0
    %3124 = vmatmul.mubr.f32.gmra.mrb[0].mxu0 %v3057
    %v3125 = vpop.f32.mrb[0].mxu0
    %v3126 = vadd.f32 0.0, %v3125
    %v3127 = vpop.f32.mrb[0].mxu0
    %3128 = vdwg.mxu0
    %3130 = vrot.lane.b32.xlu0 %v3126, 64
    %v3131 = vpop.permute.xlu0 %3130
    %3133 = vst.msk [vmem:[#allocation2] sm:$0xff] %vm932, %v3131
    %3134 = vrot.lane.b32.xlu0 %v2572, 32
    %v3135 = vpop.permute.xlu0 %3134
    %3136 = vrot.lane.b32.xlu0 %v2574, 32
    %v3137 = vpop.permute.xlu0 %3136
    %v3138 = vsel %vm418, %v3135, 0
    %v3140 = vsel %vm418, %v3137, 0
    %3142 = vmatprep.subr.mxu0 0.0
    %3143 = vmatpush1.xpose.msra.mxu0 %v3140
    %3144 = vmatprep.subr.mxu0 0.0
    %3145 = vmatpush1.xpose.msra.mxu0 0.0
    %3146 = vmatprep.subr.mxu0 0.0
    %3147 = vmatpush1.xpose.msra.mxu0 0.0
    %3148 = vmatprep.subr.mxu0 0.0
    %3149 = vmatpush1.xpose.msra.mxu0 0.0
    %3150 = vmatprep.subr.mxu0 0.0
    %3151 = vmatpush1.xpose.msra.mxu0 0.0
    %3152 = vmatprep.subr.mxu0 0.0
    %3153 = vmatpush1.xpose.msra.mxu0 0.0
    %3154 = vmatprep.subr.mxu0 0.0
    %3155 = vmatpush1.xpose.msra.mxu0 0.0
    %3156 = vmatprep.subr.mxu0 0.0
    %3157 = vmatpush1.xpose.msra.mxu0 0.0
    %3158 = vmatprep.subr.mxu0 0.0
    %3159 = vmatpush1.xpose.msra.mxu0 0.0
    %3160 = vmatprep.subr.mxu0 0.0
    %3161 = vmatpush1.xpose.msra.mxu0 0.0
    %3162 = vmatprep.subr.mxu0 0.0
    %3163 = vmatpush1.xpose.msra.mxu0 0.0
    %3164 = vmatprep.subr.mxu0 0.0
    %3165 = vmatpush1.xpose.msra.mxu0 0.0
    %3166 = vmatprep.subr.mxu0 0.0
    %3167 = vmatpush1.xpose.msra.mxu0 0.0
    %3168 = vmatprep.subr.mxu0 0.0
    %3169 = vmatpush1.xpose.msra.mxu0 0.0
    %3170 = vmatprep.subr.mxu0 0.0
    %3171 = vmatpush1.xpose.msra.mxu0 0.0
    %3172 = vmatprep.subr.mxu0 0.0
    %3173 = vmatpush1.xpose.msra.mxu0 0.0
    %3174 = vmatprep.subr.mxu0 0.0
    %3175 = vmatpush1.xpose.msra.mxu0 0.0
    %3176 = vmatprep.subr.mxu0 0.0
    %3177 = vmatpush1.xpose.msra.mxu0 0.0
    %3178 = vmatprep.subr.mxu0 0.0
    %3179 = vmatpush1.xpose.msra.mxu0 0.0
    %3180 = vmatprep.subr.mxu0 0.0
    %3181 = vmatpush1.xpose.msra.mxu0 0.0
    %3182 = vmatprep.subr.mxu0 0.0
    %3183 = vmatpush1.xpose.msra.mxu0 0.0
    %3184 = vmatprep.subr.mxu0 0.0
    %3185 = vmatpush1.xpose.msra.mxu0 0.0
    %3186 = vmatprep.subr.mxu0 0.0
    %3187 = vmatpush1.xpose.msra.mxu0 0.0
    %3188 = vmatprep.subr.mxu0 0.0
    %3189 = vmatpush1.xpose.msra.mxu0 0.0
    %3190 = vmatprep.subr.mxu0 0.0
    %3191 = vmatpush1.xpose.msra.mxu0 0.0
    %3192 = vmatprep.subr.mxu0 0.0
    %3193 = vmatpush1.xpose.msra.mxu0 0.0
    %3194 = vmatprep.subr.mxu0 0.0
    %3195 = vmatpush1.xpose.msra.mxu0 0.0
    %3196 = vmatprep.subr.mxu0 0.0
    %3197 = vmatpush1.xpose.msra.mxu0 0.0
    %3198 = vmatprep.subr.mxu0 0.0
    %3199 = vmatpush1.xpose.msra.mxu0 0.0
    %3200 = vmatprep.subr.mxu0 0.0
    %3201 = vmatpush1.xpose.msra.mxu0 0.0
    %3202 = vmatprep.subr.mxu0 0.0
    %3203 = vmatpush1.xpose.msra.mxu0 0.0
    %3204 = vmatprep.subr.mxu0 0.0
    %3205 = vmatpush1.xpose.msra.mxu0 0.0
    %3206 = vmatprep.mubr.f32.mxu0 0.0
    %3207 = vmatmul.mubr.f32.gmra.mrb[0].mxu0 %v3138
    %v3208 = vpop.f32.mrb[0].mxu0
    %v3209 = vadd.f32 0.0, %v3208
    %v3210 = vpop.f32.mrb[0].mxu0
    %3211 = vdwg.mxu0
    %v3212 = vmul.f32 %v3209, 0.17677669
    %v3213 = vadd.f32 %v3212, %v2702
    %v3214 = vsel %vm501, %v3213, -inf
    %3215 = vmax.xlane.f32.xlu0 %v3214
    %v3216 = vpop.xlane.xlu0 %3215
    %v3217 = vsub.f32 %v3213, %v3216
    %v3218 = vmul.f32 %v3217, 1.442695
    %v3219 = vpow.pop %v3218
    %v3220 = vsel %vm501, %v3219, 0.0
    %3221 = vadd.xlane.f32.xlu0 %v3220
    %v3222 = vpop.xlane.xlu0 %3221
    %v3223 = vrcp.pop %v3222
    %v3224 = vmul.f32 %v3219, %v3223
    %3225 = vrot.lane.b32.xlu0 %v2615, 32
    %v3226 = vpop.permute.xlu0 %3225
    %v3229 = vsel %vm501, %v3224, 0
    %3231 = vmatprep.subr.mxu0 0.0
    %3232 = vmatpush1.msra.mxu0 %v3226
    %3233 = vmatprep.subr.mxu0 0.0
    %3234 = vmatpush1.msra.mxu0 0.0
    %3235 = vmatprep.subr.mxu0 0.0
    %3236 = vmatpush1.msra.mxu0 0.0
    %3237 = vmatprep.subr.mxu0 0.0
    %3238 = vmatpush1.msra.mxu0 0.0
    %3239 = vmatprep.subr.mxu0 0.0
    %3240 = vmatpush1.msra.mxu0 0.0
    %3241 = vmatprep.subr.mxu0 0.0
    %3242 = vmatpush1.msra.mxu0 0.0
    %3243 = vmatprep.subr.mxu0 0.0
    %3244 = vmatpush1.msra.mxu0 0.0
    %3245 = vmatprep.subr.mxu0 0.0
    %3246 = vmatpush1.msra.mxu0 0.0
    %3247 = vmatprep.subr.mxu0 0.0
    %3248 = vmatpush1.msra.mxu0 0.0
    %3249 = vmatprep.subr.mxu0 0.0
    %3250 = vmatpush1.msra.mxu0 0.0
    %3251 = vmatprep.subr.mxu0 0.0
    %3252 = vmatpush1.msra.mxu0 0.0
    %3253 = vmatprep.subr.mxu0 0.0
    %3254 = vmatpush1.msra.mxu0 0.0
    %3255 = vmatprep.subr.mxu0 0.0
    %3256 = vmatpush1.msra.mxu0 0.0
    %3257 = vmatprep.subr.mxu0 0.0
    %3258 = vmatpush1.msra.mxu0 0.0
    %3259 = vmatprep.subr.mxu0 0.0
    %3260 = vmatpush1.msra.mxu0 0.0
    %3261 = vmatprep.subr.mxu0 0.0
    %3262 = vmatpush1.msra.mxu0 0.0
    %3263 = vmatprep.subr.mxu0 0.0
    %3264 = vmatpush1.msra.mxu0 0.0
    %3265 = vmatprep.subr.mxu0 0.0
    %3266 = vmatpush1.msra.mxu0 0.0
    %3267 = vmatprep.subr.mxu0 0.0
    %3268 = vmatpush1.msra.mxu0 0.0
    %3269 = vmatprep.subr.mxu0 0.0
    %3270 = vmatpush1.msra.mxu0 0.0
    %3271 = vmatprep.subr.mxu0 0.0
    %3272 = vmatpush1.msra.mxu0 0.0
    %3273 = vmatprep.subr.mxu0 0.0
    %3274 = vmatpush1.msra.mxu0 0.0
    %3275 = vmatprep.subr.mxu0 0.0
    %3276 = vmatpush1.msra.mxu0 0.0
    %3277 = vmatprep.subr.mxu0 0.0
    %3278 = vmatpush1.msra.mxu0 0.0
    %3279 = vmatprep.subr.mxu0 0.0
    %3280 = vmatpush1.msra.mxu0 0.0
    %3281 = vmatprep.subr.mxu0 0.0
    %3282 = vmatpush1.msra.mxu0 0.0
    %3283 = vmatprep.subr.mxu0 0.0
    %3284 = vmatpush1.msra.mxu0 0.0
    %3285 = vmatprep.subr.mxu0 0.0
    %3286 = vmatpush1.msra.mxu0 0.0
    %3287 = vmatprep.subr.mxu0 0.0
    %3288 = vmatpush1.msra.mxu0 0.0
    %3289 = vmatprep.subr.mxu0 0.0
    %3290 = vmatpush1.msra.mxu0 0.0
    %3291 = vmatprep.subr.mxu0 0.0
    %3292 = vmatpush1.msra.mxu0 0.0
    %3293 = vmatprep.subr.mxu0 0.0
    %3294 = vmatpush1.msra.mxu0 0.0
    %3295 = vmatprep.mubr.f32.mxu0 0.0
    %3296 = vmatmul.mubr.f32.gmra.mrb[0].mxu0 %v3229
    %v3297 = vpop.f32.mrb[0].mxu0
    %v3298 = vadd.f32 0.0, %v3297
    %v3299 = vpop.f32.mrb[0].mxu0
    %3300 = vdwg.mxu0
    %3302 = vrot.lane.b32.xlu0 %v3298, 96
    %v3303 = vpop.permute.xlu0 %3302
    %3305 = vst.msk [vmem:[#allocation2] sm:$0xff] %vm1105, %v3303
    %v3306 = vld [vmem:[%s1 + $0x1] sm:$0x1]
    %v3308 = vsel %vm418, %v2576, 0
    %v3311 = vsel %vm418, %v2578, 0
    %3313 = vmatprep.subr.mxu0 0.0
    %3314 = vmatpush1.xpose.msra.mxu0 %v3311
    %3315 = vmatprep.subr.mxu0 0.0
    %3316 = vmatpush1.xpose.msra.mxu0 0.0
    %3317 = vmatprep.subr.mxu0 0.0
    %3318 = vmatpush1.xpose.msra.mxu0 0.0
    %3319 = vmatprep.subr.mxu0 0.0
    %3320 = vmatpush1.xpose.msra.mxu0 0.0
    %3321 = vmatprep.subr.mxu0 0.0
    %3322 = vmatpush1.xpose.msra.mxu0 0.0
    %3323 = vmatprep.subr.mxu0 0.0
    %3324 = vmatpush1.xpose.msra.mxu0 0.0
    %3325 = vmatprep.subr.mxu0 0.0
    %3326 = vmatpush1.xpose.msra.mxu0 0.0
    %3327 = vmatprep.subr.mxu0 0.0
    %3328 = vmatpush1.xpose.msra.mxu0 0.0
    %3329 = vmatprep.subr.mxu0 0.0
    %3330 = vmatpush1.xpose.msra.mxu0 0.0
    %3331 = vmatprep.subr.mxu0 0.0
    %3332 = vmatpush1.xpose.msra.mxu0 0.0
    %3333 = vmatprep.subr.mxu0 0.0
    %3334 = vmatpush1.xpose.msra.mxu0 0.0
    %3335 = vmatprep.subr.mxu0 0.0
    %3336 = vmatpush1.xpose.msra.mxu0 0.0
    %3337 = vmatprep.subr.mxu0 0.0
    %3338 = vmatpush1.xpose.msra.mxu0 0.0
    %3339 = vmatprep.subr.mxu0 0.0
    %3340 = vmatpush1.xpose.msra.mxu0 0.0
    %3341 = vmatprep.subr.mxu0 0.0
    %3342 = vmatpush1.xpose.msra.mxu0 0.0
    %3343 = vmatprep.subr.mxu0 0.0
    %3344 = vmatpush1.xpose.msra.mxu0 0.0
    %3345 = vmatprep.subr.mxu0 0.0
    %3346 = vmatpush1.xpose.msra.mxu0 0.0
    %3347 = vmatprep.subr.mxu0 0.0
    %3348 = vmatpush1.xpose.msra.mxu0 0.0
    %3349 = vmatprep.subr.mxu0 0.0
    %3350 = vmatpush1.xpose.msra.mxu0 0.0
    %3351 = vmatprep.subr.mxu0 0.0
    %3352 = vmatpush1.xpose.msra.mxu0 0.0
    %3353 = vmatprep.subr.mxu0 0.0
    %3354 = vmatpush1.xpose.msra.mxu0 0.0
    %3355 = vmatprep.subr.mxu0 0.0
    %3356 = vmatpush1.xpose.msra.mxu0 0.0
    %3357 = vmatprep.subr.mxu0 0.0
    %3358 = vmatpush1.xpose.msra.mxu0 0.0
    %3359 = vmatprep.subr.mxu0 0.0
    %3360 = vmatpush1.xpose.msra.mxu0 0.0
    %3361 = vmatprep.subr.mxu0 0.0
    %3362 = vmatpush1.xpose.msra.mxu0 0.0
    %3363 = vmatprep.subr.mxu0 0.0
    %3364 = vmatpush1.xpose.msra.mxu0 0.0
    %3365 = vmatprep.subr.mxu0 0.0
    %3366 = vmatpush1.xpose.msra.mxu0 0.0
    %3367 = vmatprep.subr.mxu0 0.0
    %3368 = vmatpush1.xpose.msra.mxu0 0.0
    %3369 = vmatprep.subr.mxu0 0.0
    %3370 = vmatpush1.xpose.msra.mxu0 0.0
    %3371 = vmatprep.subr.mxu0 0.0
    %3372 = vmatpush1.xpose.msra.mxu0 0.0
    %3373 = vmatprep.subr.mxu0 0.0
    %3374 = vmatpush1.xpose.msra.mxu0 0.0
    %3375 = vmatprep.subr.mxu0 0.0
    %3376 = vmatpush1.xpose.msra.mxu0 0.0
    %3377 = vmatprep.mubr.f32.mxu0 0.0
    %3378 = vmatmul.mubr.f32.gmra.mrb[0].mxu0 %v3308
    %v3379 = vpop.f32.mrb[0].mxu0
    %v3380 = vadd.f32 0.0, %v3379
    %v3381 = vpop.f32.mrb[0].mxu0
    %3382 = vdwg.mxu0
    %v3383 = vmul.f32 %v3380, 0.17677669
    %v3384 = vlaneseq
    %v3385 = vshrl.u32 %v3384, 7
    %v3386 = vsub.s32 0, %v3385
    %v3387 = vrot.slane %v3306, %v3386
    %v3388 = vadd.f32 %v3383, %v3387
    %v3389 = vsel %vm501, %v3388, -inf
    %3390 = vmax.xlane.f32.xlu0 %v3389
    %v3391 = vpop.xlane.xlu0 %3390
    %v3392 = vsub.f32 %v3388, %v3391
    %v3393 = vmul.f32 %v3392, 1.442695
    %v3394 = vpow.pop %v3393
    %v3395 = vsel %vm501, %v3394, 0.0
    %3396 = vadd.xlane.f32.xlu0 %v3395
    %v3397 = vpop.xlane.xlu0 %3396
    %v3398 = vrcp.pop %v3397
    %v3399 = vmul.f32 %v3394, %v3398
    %v3401 = vsel %vm501, %v3399, 0
    %3403 = vmatprep.subr.mxu0 0.0
    %3404 = vmatpush1.msra.mxu0 %v2618
    %3405 = vmatprep.subr.mxu0 0.0
    %3406 = vmatpush1.msra.mxu0 0.0
    %3407 = vmatprep.subr.mxu0 0.0
    %3408 = vmatpush1.msra.mxu0 0.0
    %3409 = vmatprep.subr.mxu0 0.0
    %3410 = vmatpush1.msra.mxu0 0.0
    %3411 = vmatprep.subr.mxu0 0.0
    %3412 = vmatpush1.msra.mxu0 0.0
    %3413 = vmatprep.subr.mxu0 0.0
    %3414 = vmatpush1.msra.mxu0 0.0
    %3415 = vmatprep.subr.mxu0 0.0
    %3416 = vmatpush1.msra.mxu0 0.0
    %3417 = vmatprep.subr.mxu0 0.0
    %3418 = vmatpush1.msra.mxu0 0.0
    %3419 = vmatprep.subr.mxu0 0.0
    %3420 = vmatpush1.msra.mxu0 0.0
    %3421 = vmatprep.subr.mxu0 0.0
    %3422 = vmatpush1.msra.mxu0 0.0
    %3423 = vmatprep.subr.mxu0 0.0
    %3424 = vmatpush1.msra.mxu0 0.0
    %3425 = vmatprep.subr.mxu0 0.0
    %3426 = vmatpush1.msra.mxu0 0.0
    %3427 = vmatprep.subr.mxu0 0.0
    %3428 = vmatpush1.msra.mxu0 0.0
    %3429 = vmatprep.subr.mxu0 0.0
    %3430 = vmatpush1.msra.mxu0 0.0
    %3431 = vmatprep.subr.mxu0 0.0
    %3432 = vmatpush1.msra.mxu0 0.0
    %3433 = vmatprep.subr.mxu0 0.0
    %3434 = vmatpush1.msra.mxu0 0.0
    %3435 = vmatprep.subr.mxu0 0.0
    %3436 = vmatpush1.msra.mxu0 0.0
    %3437 = vmatprep.subr.mxu0 0.0
    %3438 = vmatpush1.msra.mxu0 0.0
    %3439 = vmatprep.subr.mxu0 0.0
    %3440 = vmatpush1.msra.mxu0 0.0
    %3441 = vmatprep.subr.mxu0 0.0
    %3442 = vmatpush1.msra.mxu0 0.0
    %3443 = vmatprep.subr.mxu0 0.0
    %3444 = vmatpush1.msra.mxu0 0.0
    %3445 = vmatprep.subr.mxu0 0.0
    %3446 = vmatpush1.msra.mxu0 0.0
    %3447 = vmatprep.subr.mxu0 0.0
    %3448 = vmatpush1.msra.mxu0 0.0
    %3449 = vmatprep.subr.mxu0 0.0
    %3450 = vmatpush1.msra.mxu0 0.0
    %3451 = vmatprep.subr.mxu0 0.0
    %3452 = vmatpush1.msra.mxu0 0.0
    %3453 = vmatprep.subr.mxu0 0.0
    %3454 = vmatpush1.msra.mxu0 0.0
    %3455 = vmatprep.subr.mxu0 0.0
    %3456 = vmatpush1.msra.mxu0 0.0
    %3457 = vmatprep.subr.mxu0 0.0
    %3458 = vmatpush1.msra.mxu0 0.0
    %3459 = vmatprep.subr.mxu0 0.0
    %3460 = vmatpush1.msra.mxu0 0.0
    %3461 = vmatprep.subr.mxu0 0.0
    %3462 = vmatpush1.msra.mxu0 0.0
    %3463 = vmatprep.subr.mxu0 0.0
    %3464 = vmatpush1.msra.mxu0 0.0
    %3465 = vmatprep.subr.mxu0 0.0
    %3466 = vmatpush1.msra.mxu0 0.0
    %3467 = vmatprep.mubr.f32.mxu0 0.0
    %3468 = vmatmul.mubr.f32.gmra.mrb[0].mxu0 %v3401
    %v3469 = vpop.f32.mrb[0].mxu0
    %v3470 = vadd.f32 0.0, %v3469
    %v3471 = vpop.f32.mrb[0].mxu0
    %3472 = vdwg.mxu0
    %3473 = vst.msk [vmem:[#allocation2 + $0x8] sm:$0xff] %vm418, %v3470
    %3474 = vrot.lane.b32.xlu0 %v2576, 96
    %v3475 = vpop.permute.xlu0 %3474
    %3476 = vrot.lane.b32.xlu0 %v2578, 96
    %v3477 = vpop.permute.xlu0 %3476
    %v3478 = vsel %vm418, %v3475, 0
    %v3480 = vsel %vm418, %v3477, 0
    %3482 = vmatprep.subr.mxu0 0.0
    %3483 = vmatpush1.xpose.msra.mxu0 %v3480
    %3484 = vmatprep.subr.mxu0 0.0
    %3485 = vmatpush1.xpose.msra.mxu0 0.0
    %3486 = vmatprep.subr.mxu0 0.0
    %3487 = vmatpush1.xpose.msra.mxu0 0.0
    %3488 = vmatprep.subr.mxu0 0.0
    %3489 = vmatpush1.xpose.msra.mxu0 0.0
    %3490 = vmatprep.subr.mxu0 0.0
    %3491 = vmatpush1.xpose.msra.mxu0 0.0
    %3492 = vmatprep.subr.mxu0 0.0
    %3493 = vmatpush1.xpose.msra.mxu0 0.0
    %3494 = vmatprep.subr.mxu0 0.0
    %3495 = vmatpush1.xpose.msra.mxu0 0.0
    %3496 = vmatprep.subr.mxu0 0.0
    %3497 = vmatpush1.xpose.msra.mxu0 0.0
    %3498 = vmatprep.subr.mxu0 0.0
    %3499 = vmatpush1.xpose.msra.mxu0 0.0
    %3500 = vmatprep.subr.mxu0 0.0
    %3501 = vmatpush1.xpose.msra.mxu0 0.0
    %3502 = vmatprep.subr.mxu0 0.0
    %3503 = vmatpush1.xpose.msra.mxu0 0.0
    %3504 = vmatprep.subr.mxu0 0.0
    %3505 = vmatpush1.xpose.msra.mxu0 0.0
    %3506 = vmatprep.subr.mxu0 0.0
    %3507 = vmatpush1.xpose.msra.mxu0 0.0
    %3508 = vmatprep.subr.mxu0 0.0
    %3509 = vmatpush1.xpose.msra.mxu0 0.0
    %3510 = vmatprep.subr.mxu0 0.0
    %3511 = vmatpush1.xpose.msra.mxu0 0.0
    %3512 = vmatprep.subr.mxu0 0.0
    %3513 = vmatpush1.xpose.msra.mxu0 0.0
    %3514 = vmatprep.subr.mxu0 0.0
    %3515 = vmatpush1.xpose.msra.mxu0 0.0
    %3516 = vmatprep.subr.mxu0 0.0
    %3517 = vmatpush1.xpose.msra.mxu0 0.0
    %3518 = vmatprep.subr.mxu0 0.0
    %3519 = vmatpush1.xpose.msra.mxu0 0.0
    %3520 = vmatprep.subr.mxu0 0.0
    %3521 = vmatpush1.xpose.msra.mxu0 0.0
    %3522 = vmatprep.subr.mxu0 0.0
    %3523 = vmatpush1.xpose.msra.mxu0 0.0
    %3524 = vmatprep.subr.mxu0 0.0
    %3525 = vmatpush1.xpose.msra.mxu0 0.0
    %3526 = vmatprep.subr.mxu0 0.0
    %3527 = vmatpush1.xpose.msra.mxu0 0.0
    %3528 = vmatprep.subr.mxu0 0.0
    %3529 = vmatpush1.xpose.msra.mxu0 0.0
    %3530 = vmatprep.subr.mxu0 0.0
    %3531 = vmatpush1.xpose.msra.mxu0 0.0
    %3532 = vmatprep.subr.mxu0 0.0
    %3533 = vmatpush1.xpose.msra.mxu0 0.0
    %3534 = vmatprep.subr.mxu0 0.0
    %3535 = vmatpush1.xpose.msra.mxu0 0.0
    %3536 = vmatprep.subr.mxu0 0.0
    %3537 = vmatpush1.xpose.msra.mxu0 0.0
    %3538 = vmatprep.subr.mxu0 0.0
    %3539 = vmatpush1.xpose.msra.mxu0 0.0
    %3540 = vmatprep.subr.mxu0 0.0
    %3541 = vmatpush1.xpose.msra.mxu0 0.0
    %3542 = vmatprep.subr.mxu0 0.0
    %3543 = vmatpush1.xpose.msra.mxu0 0.0
    %3544 = vmatprep.subr.mxu0 0.0
    %3545 = vmatpush1.xpose.msra.mxu0 0.0
    %3546 = vmatprep.mubr.f32.mxu0 0.0
    %3547 = vmatmul.mubr.f32.gmra.mrb[0].mxu0 %v3478
    %v3548 = vpop.f32.mrb[0].mxu0
    %v3549 = vadd.f32 0.0, %v3548
    %v3550 = vpop.f32.mrb[0].mxu0
    %3551 = vdwg.mxu0
    %v3552 = vmul.f32 %v3549, 0.17677669
    %v3553 = vadd.f32 %v3552, %v3387
    %v3554 = vsel %vm501, %v3553, -inf
    %3555 = vmax.xlane.f32.xlu0 %v3554
    %v3556 = vpop.xlane.xlu0 %3555
    %v3557 = vsub.f32 %v3553, %v3556
    %v3558 = vmul.f32 %v3557, 1.442695
    %v3559 = vpow.pop %v3558
    %v3560 = vsel %vm501, %v3559, 0.0
    %3561 = vadd.xlane.f32.xlu0 %v3560
    %v3562 = vpop.xlane.xlu0 %3561
    %v3563 = vrcp.pop %v3562
    %v3564 = vmul.f32 %v3559, %v3563
    %3566 = vrot.lane.b32.xlu0 %v2618, 96
    %v3567 = vpop.permute.xlu0 %3566
    %v3570 = vsel %vm501, %v3564, 0
    %3572 = vmatprep.subr.mxu0 0.0
    %3573 = vmatpush1.msra.mxu0 %v3567
    %3574 = vmatprep.subr.mxu0 0.0
    %3575 = vmatpush1.msra.mxu0 0.0
    %3576 = vmatprep.subr.mxu0 0.0
    %3577 = vmatpush1.msra.mxu0 0.0
    %3578 = vmatprep.subr.mxu0 0.0
    %3579 = vmatpush1.msra.mxu0 0.0
    %3580 = vmatprep.subr.mxu0 0.0
    %3581 = vmatpush1.msra.mxu0 0.0
    %3582 = vmatprep.subr.mxu0 0.0
    %3583 = vmatpush1.msra.mxu0 0.0
    %3584 = vmatprep.subr.mxu0 0.0
    %3585 = vmatpush1.msra.mxu0 0.0
    %3586 = vmatprep.subr.mxu0 0.0
    %3587 = vmatpush1.msra.mxu0 0.0
    %3588 = vmatprep.subr.mxu0 0.0
    %3589 = vmatpush1.msra.mxu0 0.0
    %3590 = vmatprep.subr.mxu0 0.0
    %3591 = vmatpush1.msra.mxu0 0.0
    %3592 = vmatprep.subr.mxu0 0.0
    %3593 = vmatpush1.msra.mxu0 0.0
    %3594 = vmatprep.subr.mxu0 0.0
    %3595 = vmatpush1.msra.mxu0 0.0
    %3596 = vmatprep.subr.mxu0 0.0
    %3597 = vmatpush1.msra.mxu0 0.0
    %3598 = vmatprep.subr.mxu0 0.0
    %3599 = vmatpush1.msra.mxu0 0.0
    %3600 = vmatprep.subr.mxu0 0.0
    %3601 = vmatpush1.msra.mxu0 0.0
    %3602 = vmatprep.subr.mxu0 0.0
    %3603 = vmatpush1.msra.mxu0 0.0
    %3604 = vmatprep.subr.mxu0 0.0
    %3605 = vmatpush1.msra.mxu0 0.0
    %3606 = vmatprep.subr.mxu0 0.0
    %3607 = vmatpush1.msra.mxu0 0.0
    %3608 = vmatprep.subr.mxu0 0.0
    %3609 = vmatpush1.msra.mxu0 0.0
    %3610 = vmatprep.subr.mxu0 0.0
    %3611 = vmatpush1.msra.mxu0 0.0
    %3612 = vmatprep.subr.mxu0 0.0
    %3613 = vmatpush1.msra.mxu0 0.0
    %3614 = vmatprep.subr.mxu0 0.0
    %3615 = vmatpush1.msra.mxu0 0.0
    %3616 = vmatprep.subr.mxu0 0.0
    %3617 = vmatpush1.msra.mxu0 0.0
    %3618 = vmatprep.subr.mxu0 0.0
    %3619 = vmatpush1.msra.mxu0 0.0
    %3620 = vmatprep.subr.mxu0 0.0
    %3621 = vmatpush1.msra.mxu0 0.0
    %3622 = vmatprep.subr.mxu0 0.0
    %3623 = vmatpush1.msra.mxu0 0.0
    %3624 = vmatprep.subr.mxu0 0.0
    %3625 = vmatpush1.msra.mxu0 0.0
    %3626 = vmatprep.subr.mxu0 0.0
    %3627 = vmatpush1.msra.mxu0 0.0
    %3628 = vmatprep.subr.mxu0 0.0
    %3629 = vmatpush1.msra.mxu0 0.0
    %3630 = vmatprep.subr.mxu0 0.0
    %3631 = vmatpush1.msra.mxu0 0.0
    %3632 = vmatprep.subr.mxu0 0.0
    %3633 = vmatpush1.msra.mxu0 0.0
    %3634 = vmatprep.subr.mxu0 0.0
    %3635 = vmatpush1.msra.mxu0 0.0
    %3636 = vmatprep.mubr.f32.mxu0 0.0
    %3637 = vmatmul.mubr.f32.gmra.mrb[0].mxu0 %v3570
    %v3638 = vpop.f32.mrb[0].mxu0
    %v3639 = vadd.f32 0.0, %v3638
    %v3640 = vpop.f32.mrb[0].mxu0
    %3641 = vdwg.mxu0
    %3643 = vrot.lane.b32.xlu0 %v3639, 32
    %v3644 = vpop.permute.xlu0 %3643
    %3646 = vst.msk [vmem:[#allocation2 + $0x8] sm:$0xff] %vm759, %v3644
    %3647 = vrot.lane.b32.xlu0 %v2576, 64
    %v3648 = vpop.permute.xlu0 %3647
    %3649 = vrot.lane.b32.xlu0 %v2578, 64
    %v3650 = vpop.permute.xlu0 %3649
    %v3651 = vsel %vm418, %v3648, 0
    %v3653 = vsel %vm418, %v3650, 0
    %3655 = vmatprep.subr.mxu0 0.0
    %3656 = vmatpush1.xpose.msra.mxu0 %v3653
    %3657 = vmatprep.subr.mxu0 0.0
    %3658 = vmatpush1.xpose.msra.mxu0 0.0
    %3659 = vmatprep.subr.mxu0 0.0
    %3660 = vmatpush1.xpose.msra.mxu0 0.0
    %3661 = vmatprep.subr.mxu0 0.0
    %3662 = vmatpush1.xpose.msra.mxu0 0.0
    %3663 = vmatprep.subr.mxu0 0.0
    %3664 = vmatpush1.xpose.msra.mxu0 0.0
    %3665 = vmatprep.subr.mxu0 0.0
    %3666 = vmatpush1.xpose.msra.mxu0 0.0
    %3667 = vmatprep.subr.mxu0 0.0
    %3668 = vmatpush1.xpose.msra.mxu0 0.0
    %3669 = vmatprep.subr.mxu0 0.0
    %3670 = vmatpush1.xpose.msra.mxu0 0.0
    %3671 = vmatprep.subr.mxu0 0.0
    %3672 = vmatpush1.xpose.msra.mxu0 0.0
    %3673 = vmatprep.subr.mxu0 0.0
    %3674 = vmatpush1.xpose.msra.mxu0 0.0
    %3675 = vmatprep.subr.mxu0 0.0
    %3676 = vmatpush1.xpose.msra.mxu0 0.0
    %3677 = vmatprep.subr.mxu0 0.0
    %3678 = vmatpush1.xpose.msra.mxu0 0.0
    %3679 = vmatprep.subr.mxu0 0.0
    %3680 = vmatpush1.xpose.msra.mxu0 0.0
    %3681 = vmatprep.subr.mxu0 0.0
    %3682 = vmatpush1.xpose.msra.mxu0 0.0
    %3683 = vmatprep.subr.mxu0 0.0
    %3684 = vmatpush1.xpose.msra.mxu0 0.0
    %3685 = vmatprep.subr.mxu0 0.0
    %3686 = vmatpush1.xpose.msra.mxu0 0.0
    %3687 = vmatprep.subr.mxu0 0.0
    %3688 = vmatpush1.xpose.msra.mxu0 0.0
    %3689 = vmatprep.subr.mxu0 0.0
    %3690 = vmatpush1.xpose.msra.mxu0 0.0
    %3691 = vmatprep.subr.mxu0 0.0
    %3692 = vmatpush1.xpose.msra.mxu0 0.0
    %3693 = vmatprep.subr.mxu0 0.0
    %3694 = vmatpush1.xpose.msra.mxu0 0.0
    %3695 = vmatprep.subr.mxu0 0.0
    %3696 = vmatpush1.xpose.msra.mxu0 0.0
    %3697 = vmatprep.subr.mxu0 0.0
    %3698 = vmatpush1.xpose.msra.mxu0 0.0
    %3699 = vmatprep.subr.mxu0 0.0
    %3700 = vmatpush1.xpose.msra.mxu0 0.0
    %3701 = vmatprep.subr.mxu0 0.0
    %3702 = vmatpush1.xpose.msra.mxu0 0.0
    %3703 = vmatprep.subr.mxu0 0.0
    %3704 = vmatpush1.xpose.msra.mxu0 0.0
    %3705 = vmatprep.subr.mxu0 0.0
    %3706 = vmatpush1.xpose.msra.mxu0 0.0
    %3707 = vmatprep.subr.mxu0 0.0
    %3708 = vmatpush1.xpose.msra.mxu0 0.0
    %3709 = vmatprep.subr.mxu0 0.0
    %3710 = vmatpush1.xpose.msra.mxu0 0.0
    %3711 = vmatprep.subr.mxu0 0.0
    %3712 = vmatpush1.xpose.msra.mxu0 0.0
    %3713 = vmatprep.subr.mxu0 0.0
    %3714 = vmatpush1.xpose.msra.mxu0 0.0
    %3715 = vmatprep.subr.mxu0 0.0
    %3716 = vmatpush1.xpose.msra.mxu0 0.0
    %3717 = vmatprep.subr.mxu0 0.0
    %3718 = vmatpush1.xpose.msra.mxu0 0.0
    %3719 = vmatprep.mubr.f32.mxu0 0.0
    %3720 = vmatmul.mubr.f32.gmra.mrb[0].mxu0 %v3651
    %v3721 = vpop.f32.mrb[0].mxu0
    %v3722 = vadd.f32 0.0, %v3721
    %v3723 = vpop.f32.mrb[0].mxu0
    %3724 = vdwg.mxu0
    %v3725 = vmul.f32 %v3722, 0.17677669
    %v3726 = vadd.f32 %v3725, %v3387
    %v3727 = vsel %vm501, %v3726, -inf
    %3728 = vmax.xlane.f32.xlu0 %v3727
    %v3729 = vpop.xlane.xlu0 %3728
    %v3730 = vsub.f32 %v3726, %v3729
    %v3731 = vmul.f32 %v3730, 1.442695
    %v3732 = vpow.pop %v3731
    %v3733 = vsel %vm501, %v3732, 0.0
    %3734 = vadd.xlane.f32.xlu0 %v3733
    %v3735 = vpop.xlane.xlu0 %3734
    %v3736 = vrcp.pop %v3735
    %v3737 = vmul.f32 %v3732, %v3736
    %3738 = vrot.lane.b32.xlu0 %v2618, 64
    %v3739 = vpop.permute.xlu0 %3738
    %v3742 = vsel %vm501, %v3737, 0
    %3744 = vmatprep.subr.mxu0 0.0
    %3745 = vmatpush1.msra.mxu0 %v3739
    %3746 = vmatprep.subr.mxu0 0.0
    %3747 = vmatpush1.msra.mxu0 0.0
    %3748 = vmatprep.subr.mxu0 0.0
    %3749 = vmatpush1.msra.mxu0 0.0
    %3750 = vmatprep.subr.mxu0 0.0
    %3751 = vmatpush1.msra.mxu0 0.0
    %3752 = vmatprep.subr.mxu0 0.0
    %3753 = vmatpush1.msra.mxu0 0.0
    %3754 = vmatprep.subr.mxu0 0.0
    %3755 = vmatpush1.msra.mxu0 0.0
    %3756 = vmatprep.subr.mxu0 0.0
    %3757 = vmatpush1.msra.mxu0 0.0
    %3758 = vmatprep.subr.mxu0 0.0
    %3759 = vmatpush1.msra.mxu0 0.0
    %3760 = vmatprep.subr.mxu0 0.0
    %3761 = vmatpush1.msra.mxu0 0.0
    %3762 = vmatprep.subr.mxu0 0.0
    %3763 = vmatpush1.msra.mxu0 0.0
    %3764 = vmatprep.subr.mxu0 0.0
    %3765 = vmatpush1.msra.mxu0 0.0
    %3766 = vmatprep.subr.mxu0 0.0
    %3767 = vmatpush1.msra.mxu0 0.0
    %3768 = vmatprep.subr.mxu0 0.0
    %3769 = vmatpush1.msra.mxu0 0.0
    %3770 = vmatprep.subr.mxu0 0.0
    %3771 = vmatpush1.msra.mxu0 0.0
    %3772 = vmatprep.subr.mxu0 0.0
    %3773 = vmatpush1.msra.mxu0 0.0
    %3774 = vmatprep.subr.mxu0 0.0
    %3775 = vmatpush1.msra.mxu0 0.0
    %3776 = vmatprep.subr.mxu0 0.0
    %3777 = vmatpush1.msra.mxu0 0.0
    %3778 = vmatprep.subr.mxu0 0.0
    %3779 = vmatpush1.msra.mxu0 0.0
    %3780 = vmatprep.subr.mxu0 0.0
    %3781 = vmatpush1.msra.mxu0 0.0
    %3782 = vmatprep.subr.mxu0 0.0
    %3783 = vmatpush1.msra.mxu0 0.0
    %3784 = vmatprep.subr.mxu0 0.0
    %3785 = vmatpush1.msra.mxu0 0.0
    %3786 = vmatprep.subr.mxu0 0.0
    %3787 = vmatpush1.msra.mxu0 0.0
    %3788 = vmatprep.subr.mxu0 0.0
    %3789 = vmatpush1.msra.mxu0 0.0
    %3790 = vmatprep.subr.mxu0 0.0
    %3791 = vmatpush1.msra.mxu0 0.0
    %3792 = vmatprep.subr.mxu0 0.0
    %3793 = vmatpush1.msra.mxu0 0.0
    %3794 = vmatprep.subr.mxu0 0.0
    %3795 = vmatpush1.msra.mxu0 0.0
    %3796 = vmatprep.subr.mxu0 0.0
    %3797 = vmatpush1.msra.mxu0 0.0
    %3798 = vmatprep.subr.mxu0 0.0
    %3799 = vmatpush1.msra.mxu0 0.0
    %3800 = vmatprep.subr.mxu0 0.0
    %3801 = vmatpush1.msra.mxu0 0.0
    %3802 = vmatprep.subr.mxu0 0.0
    %3803 = vmatpush1.msra.mxu0 0.0
    %3804 = vmatprep.subr.mxu0 0.0
    %3805 = vmatpush1.msra.mxu0 0.0
    %3806 = vmatprep.subr.mxu0 0.0
    %3807 = vmatpush1.msra.mxu0 0.0
    %3808 = vmatprep.mubr.f32.mxu0 0.0
    %3809 = vmatmul.mubr.f32.gmra.mrb[0].mxu0 %v3742
    %v3810 = vpop.f32.mrb[0].mxu0
    %v3811 = vadd.f32 0.0, %v3810
    %v3812 = vpop.f32.mrb[0].mxu0
    %3813 = vdwg.mxu0
    %3815 = vrot.lane.b32.xlu0 %v3811, 64
    %v3816 = vpop.permute.xlu0 %3815
    %3818 = vst.msk [vmem:[#allocation2 + $0x8] sm:$0xff] %vm932, %v3816
    %3819 = vrot.lane.b32.xlu0 %v2576, 32
    %v3820 = vpop.permute.xlu0 %3819
    %3821 = vrot.lane.b32.xlu0 %v2578, 32
    %v3822 = vpop.permute.xlu0 %3821
    %v3823 = vsel %vm418, %v3820, 0
    %v3825 = vsel %vm418, %v3822, 0
    %3827 = vmatprep.subr.mxu0 0.0
    %3828 = vmatpush1.xpose.msra.mxu0 %v3825
    %3829 = vmatprep.subr.mxu0 0.0
    %3830 = vmatpush1.xpose.msra.mxu0 0.0
    %3831 = vmatprep.subr.mxu0 0.0
    %3832 = vmatpush1.xpose.msra.mxu0 0.0
    %3833 = vmatprep.subr.mxu0 0.0
    %3834 = vmatpush1.xpose.msra.mxu0 0.0
    %3835 = vmatprep.subr.mxu0 0.0
    %3836 = vmatpush1.xpose.msra.mxu0 0.0
    %3837 = vmatprep.subr.mxu0 0.0
    %3838 = vmatpush1.xpose.msra.mxu0 0.0
    %3839 = vmatprep.subr.mxu0 0.0
    %3840 = vmatpush1.xpose.msra.mxu0 0.0
    %3841 = vmatprep.subr.mxu0 0.0
    %3842 = vmatpush1.xpose.msra.mxu0 0.0
    %3843 = vmatprep.subr.mxu0 0.0
    %3844 = vmatpush1.xpose.msra.mxu0 0.0
    %3845 = vmatprep.subr.mxu0 0.0
    %3846 = vmatpush1.xpose.msra.mxu0 0.0
    %3847 = vmatprep.subr.mxu0 0.0
    %3848 = vmatpush1.xpose.msra.mxu0 0.0
    %3849 = vmatprep.subr.mxu0 0.0
    %3850 = vmatpush1.xpose.msra.mxu0 0.0
    %3851 = vmatprep.subr.mxu0 0.0
    %3852 = vmatpush1.xpose.msra.mxu0 0.0
    %3853 = vmatprep.subr.mxu0 0.0
    %3854 = vmatpush1.xpose.msra.mxu0 0.0
    %3855 = vmatprep.subr.mxu0 0.0
    %3856 = vmatpush1.xpose.msra.mxu0 0.0
    %3857 = vmatprep.subr.mxu0 0.0
    %3858 = vmatpush1.xpose.msra.mxu0 0.0
    %3859 = vmatprep.subr.mxu0 0.0
    %3860 = vmatpush1.xpose.msra.mxu0 0.0
    %3861 = vmatprep.subr.mxu0 0.0
    %3862 = vmatpush1.xpose.msra.mxu0 0.0
    %3863 = vmatprep.subr.mxu0 0.0
    %3864 = vmatpush1.xpose.msra.mxu0 0.0
    %3865 = vmatprep.subr.mxu0 0.0
    %3866 = vmatpush1.xpose.msra.mxu0 0.0
    %3867 = vmatprep.subr.mxu0 0.0
    %3868 = vmatpush1.xpose.msra.mxu0 0.0
    %3869 = vmatprep.subr.mxu0 0.0
    %3870 = vmatpush1.xpose.msra.mxu0 0.0
    %3871 = vmatprep.subr.mxu0 0.0
    %3872 = vmatpush1.xpose.msra.mxu0 0.0
    %3873 = vmatprep.subr.mxu0 0.0
    %3874 = vmatpush1.xpose.msra.mxu0 0.0
    %3875 = vmatprep.subr.mxu0 0.0
    %3876 = vmatpush1.xpose.msra.mxu0 0.0
    %3877 = vmatprep.subr.mxu0 0.0
    %3878 = vmatpush1.xpose.msra.mxu0 0.0
    %3879 = vmatprep.subr.mxu0 0.0
    %3880 = vmatpush1.xpose.msra.mxu0 0.0
    %3881 = vmatprep.subr.mxu0 0.0
    %3882 = vmatpush1.xpose.msra.mxu0 0.0
    %3883 = vmatprep.subr.mxu0 0.0
    %3884 = vmatpush1.xpose.msra.mxu0 0.0
    %3885 = vmatprep.subr.mxu0 0.0
    %3886 = vmatpush1.xpose.msra.mxu0 0.0
    %3887 = vmatprep.subr.mxu0 0.0
    %3888 = vmatpush1.xpose.msra.mxu0 0.0
    %3889 = vmatprep.subr.mxu0 0.0
    %3890 = vmatpush1.xpose.msra.mxu0 0.0
    %3891 = vmatprep.mubr.f32.mxu0 0.0
    %3892 = vmatmul.mubr.f32.gmra.mrb[0].mxu0 %v3823
    %v3893 = vpop.f32.mrb[0].mxu0
    %v3894 = vadd.f32 0.0, %v3893
    %v3895 = vpop.f32.mrb[0].mxu0
    %3896 = vdwg.mxu0
    %v3897 = vmul.f32 %v3894, 0.17677669
    %v3898 = vadd.f32 %v3897, %v3387
    %v3899 = vsel %vm501, %v3898, -inf
    %3900 = vmax.xlane.f32.xlu0 %v3899
    %v3901 = vpop.xlane.xlu0 %3900
    %v3902 = vsub.f32 %v3898, %v3901
    %v3903 = vmul.f32 %v3902, 1.442695
    %v3904 = vpow.pop %v3903
    %v3905 = vsel %vm501, %v3904, 0.0
    %3906 = vadd.xlane.f32.xlu0 %v3905
    %v3907 = vpop.xlane.xlu0 %3906
    %v3908 = vrcp.pop %v3907
    %v3909 = vmul.f32 %v3904, %v3908
    %3910 = vrot.lane.b32.xlu0 %v2618, 32
    %v3911 = vpop.permute.xlu0 %3910
    %v3914 = vsel %vm501, %v3909, 0
    %3916 = vmatprep.subr.mxu0 0.0
    %3917 = vmatpush1.msra.mxu0 %v3911
    %3918 = vmatprep.subr.mxu0 0.0
    %3919 = vmatpush1.msra.mxu0 0.0
    %3920 = vmatprep.subr.mxu0 0.0
    %3921 = vmatpush1.msra.mxu0 0.0
    %3922 = vmatprep.subr.mxu0 0.0
    %3923 = vmatpush1.msra.mxu0 0.0
    %3924 = vmatprep.subr.mxu0 0.0
    %3925 = vmatpush1.msra.mxu0 0.0
    %3926 = vmatprep.subr.mxu0 0.0
    %3927 = vmatpush1.msra.mxu0 0.0
    %3928 = vmatprep.subr.mxu0 0.0
    %3929 = vmatpush1.msra.mxu0 0.0
    %3930 = vmatprep.subr.mxu0 0.0
    %3931 = vmatpush1.msra.mxu0 0.0
    %3932 = vmatprep.subr.mxu0 0.0
    %3933 = vmatpush1.msra.mxu0 0.0
    %3934 = vmatprep.subr.mxu0 0.0
    %3935 = vmatpush1.msra.mxu0 0.0
    %3936 = vmatprep.subr.mxu0 0.0
    %3937 = vmatpush1.msra.mxu0 0.0
    %3938 = vmatprep.subr.mxu0 0.0
    %3939 = vmatpush1.msra.mxu0 0.0
    %3940 = vmatprep.subr.mxu0 0.0
    %3941 = vmatpush1.msra.mxu0 0.0
    %3942 = vmatprep.subr.mxu0 0.0
    %3943 = vmatpush1.msra.mxu0 0.0
    %3944 = vmatprep.subr.mxu0 0.0
    %3945 = vmatpush1.msra.mxu0 0.0
    %3946 = vmatprep.subr.mxu0 0.0
    %3947 = vmatpush1.msra.mxu0 0.0
    %3948 = vmatprep.subr.mxu0 0.0
    %3949 = vmatpush1.msra.mxu0 0.0
    %3950 = vmatprep.subr.mxu0 0.0
    %3951 = vmatpush1.msra.mxu0 0.0
    %3952 = vmatprep.subr.mxu0 0.0
    %3953 = vmatpush1.msra.mxu0 0.0
    %3954 = vmatprep.subr.mxu0 0.0
    %3955 = vmatpush1.msra.mxu0 0.0
    %3956 = vmatprep.subr.mxu0 0.0
    %3957 = vmatpush1.msra.mxu0 0.0
    %3958 = vmatprep.subr.mxu0 0.0
    %3959 = vmatpush1.msra.mxu0 0.0
    %3960 = vmatprep.subr.mxu0 0.0
    %3961 = vmatpush1.msra.mxu0 0.0
    %3962 = vmatprep.subr.mxu0 0.0
    %3963 = vmatpush1.msra.mxu0 0.0
    %3964 = vmatprep.subr.mxu0 0.0
    %3965 = vmatpush1.msra.mxu0 0.0
    %3966 = vmatprep.subr.mxu0 0.0
    %3967 = vmatpush1.msra.mxu0 0.0
    %3968 = vmatprep.subr.mxu0 0.0
    %3969 = vmatpush1.msra.mxu0 0.0
    %3970 = vmatprep.subr.mxu0 0.0
    %3971 = vmatpush1.msra.mxu0 0.0
    %3972 = vmatprep.subr.mxu0 0.0
    %3973 = vmatpush1.msra.mxu0 0.0
    %3974 = vmatprep.subr.mxu0 0.0
    %3975 = vmatpush1.msra.mxu0 0.0
    %3976 = vmatprep.subr.mxu0 0.0
    %3977 = vmatpush1.msra.mxu0 0.0
    %3978 = vmatprep.subr.mxu0 0.0
    %3979 = vmatpush1.msra.mxu0 0.0
    %3980 = vmatprep.mubr.f32.mxu0 0.0
    %3981 = vmatmul.mubr.f32.gmra.mrb[0].mxu0 %v3914
    %v3982 = vpop.f32.mrb[0].mxu0
    %v3983 = vadd.f32 0.0, %v3982
    %v3984 = vpop.f32.mrb[0].mxu0
    %3985 = vdwg.mxu0
    %3987 = vrot.lane.b32.xlu0 %v3983, 96
    %v3988 = vpop.permute.xlu0 %3987
    %3990 = vst.msk [vmem:[#allocation2 + $0x8] sm:$0xff] %vm1105, %v3988
    %v3991 = vld [vmem:[#allocation2] sm:$0xff]
    %v3992 = vld [vmem:[#allocation2 + $0x8] sm:$0xff]
    %s3993 = scalar_lea.vmem %s6, 64
    %v3994 = vld [vmem:[%s3993] sm:$0xf]
    %v3995 = vld [vmem:[%s3993 + $0x4] sm:$0xf]
    %v3996 = vld [vmem:[%s3993 + $0x8] sm:$0xf]
    %v3997 = vld [vmem:[%s3993 + $0xc] sm:$0xf]
    %v3998 = vld [vmem:[%s3993 + $0x10] sm:$0xf]
    %v3999 = vld [vmem:[%s3993 + $0x14] sm:$0xf]
    %v4000 = vld [vmem:[%s3993 + $0x18] sm:$0xf]
    %v4001 = vld [vmem:[%s3993 + $0x1c] sm:$0xf]
    %v4002 = vld [vmem:[%s3993 + $0x20] sm:$0xf]
    %v4003 = vld [vmem:[%s3993 + $0x24] sm:$0xf]
    %v4004 = vld [vmem:[%s3993 + $0x28] sm:$0xf]
    %v4005 = vld [vmem:[%s3993 + $0x2c] sm:$0xf]
    %v4006 = vld [vmem:[%s3993 + $0x30] sm:$0xf]
    %v4007 = vld [vmem:[%s3993 + $0x34] sm:$0xf]
    %v4008 = vld [vmem:[%s3993 + $0x38] sm:$0xf]
    %v4009 = vld [vmem:[%s3993 + $0x3c] sm:$0xf]
    %v4010 = vpack.c.bf16 %v3992, %v3991
    %s4011 = scalar_lea.vmem %s7, 1
    %v4012 = vld [vmem:[%s4011] sm:$0x1]
    %v4014 = vlaneseq
    %v4015 = vshrl.u32 %v4014, 7
    %v4016 = vsub.s32 0, %v4015
    %v4017 = vrot.slane %v4012, %v4016
    %v4035 = vunpack.c.l.b16 %v3994
    %v4036 = vunpack.c.l.b16 %v3995
    %v4037 = vunpack.c.l.b16 %v3996
    %v4038 = vunpack.c.l.b16 %v3997
    %v4039 = vunpack.c.l.b16 %v3998
    %v4040 = vunpack.c.l.b16 %v3999
    %v4041 = vunpack.c.l.b16 %v4000
    %v4042 = vunpack.c.l.b16 %v4001
    %v4043 = vunpack.c.l.b16 %v4002
    %v4044 = vunpack.c.l.b16 %v4003
    %v4045 = vunpack.c.l.b16 %v4004
    %v4046 = vunpack.c.l.b16 %v4005
    %v4047 = vunpack.c.l.b16 %v4006
    %v4048 = vunpack.c.l.b16 %v4007
    %v4049 = vunpack.c.l.b16 %v4008
    %v4050 = vunpack.c.l.b16 %v4009
    %v4051 = vpack.c.b16 %v4036, %v4035
    %v4052 = vpack.c.b16 %v4038, %v4037
    %v4053 = vpack.c.b16 %v4040, %v4039
    %v4054 = vpack.c.b16 %v4042, %v4041
    %v4055 = vpack.c.b16 %v4044, %v4043
    %v4056 = vpack.c.b16 %v4046, %v4045
    %v4057 = vpack.c.b16 %v4048, %v4047
    %v4058 = vpack.c.b16 %v4050, %v4049
    %4067 = vmatprep.subr.bf16.mxu0 0
    %4068 = vmatpush1.bf16.msra.mxu0 %v4051
    %4069 = vmatprep.subr.bf16.mxu0 0
    %4070 = vmatpush1.bf16.msra.mxu0 %v4052
    %4071 = vmatprep.subr.bf16.mxu0 0
    %4072 = vmatpush1.bf16.msra.mxu0 %v4053
    %4073 = vmatprep.subr.bf16.mxu0 0
    %4074 = vmatpush1.bf16.msra.mxu0 %v4054
    %4075 = vmatprep.subr.bf16.mxu0 0
    %4076 = vmatpush1.bf16.msra.mxu0 %v4055
    %4077 = vmatprep.subr.bf16.mxu0 0
    %4078 = vmatpush1.bf16.msra.mxu0 %v4056
    %4079 = vmatprep.subr.bf16.mxu0 0
    %4080 = vmatpush1.bf16.msra.mxu0 %v4057
    %4081 = vmatprep.subr.bf16.mxu0 0
    %4082 = vmatpush1.bf16.msra.mxu0 %v4058
    %4083 = vmatprep.subr.bf16.mxu0 0
    %4084 = vmatpush1.bf16.msra.mxu0 0
    %4085 = vmatprep.subr.bf16.mxu0 0
    %4086 = vmatpush1.bf16.msra.mxu0 0
    %4087 = vmatprep.subr.bf16.mxu0 0
    %4088 = vmatpush1.bf16.msra.mxu0 0
    %4089 = vmatprep.subr.bf16.mxu0 0
    %4090 = vmatpush1.bf16.msra.mxu0 0
    %4091 = vmatprep.subr.bf16.mxu0 0
    %4092 = vmatpush1.bf16.msra.mxu0 0
    %4093 = vmatprep.subr.bf16.mxu0 0
    %4094 = vmatpush1.bf16.msra.mxu0 0
    %4095 = vmatprep.subr.bf16.mxu0 0
    %4096 = vmatpush1.bf16.msra.mxu0 0
    %4097 = vmatprep.subr.bf16.mxu0 0
    %4098 = vmatpush1.bf16.msra.mxu0 0
    %4099 = vmatprep.mubr.bf16.mxu0 0
    %4100 = vmatmul.mubr.bf16.gmra.mrb[0].mxu0 %v4010
    %v4101 = vpop.f32.mrb[0].mxu0
    %v4102 = vadd.f32 %v4017, %v4101
    %v4103 = vpop.f32.mrb[0].mxu0
    %v4104 = vpop.f32.mrb[0].mxu0
    %v4105 = vadd.f32 %v4017, %v4104
    %v4106 = vpop.f32.mrb[0].mxu0
    %4107 = vdwg.mxu0
    %v4108 = vadd.f32 %v4102, %v2355
    %v4109 = vadd.f32 %v4105, %v2356
    %s4110 = scalar_lea.vmem %s8, 1
    %v4111 = vld [vmem:[%s4110] sm:$0x1]
    %s4112 = scalar_lea.vmem %s9, 1
    %v4113 = vld [vmem:[%s4112] sm:$0x1]
    %4114 = vadd.xlane.f32.xlu0 %v4108
    %v4115 = vpop.xlane.xlu0 %4114
    %4116 = vadd.xlane.f32.xlu0 %v4109
    %v4117 = vpop.xlane.xlu0 %4116
    %v4118 = vmul.f32 %v4115, %v120
    %v4119 = vmul.f32 %v4117, %v120
    %v4120 = vsub.f32 %v4108, %v4118
    %v4121 = vsub.f32 %v4109, %v4119
    %v4122 = vmul.f32 %v4120, %v4120
    %v4123 = vmul.f32 %v4121, %v4121
    %4124 = vadd.xlane.f32.xlu0 %v4122
    %v4125 = vpop.xlane.xlu0 %4124
    %4126 = vadd.xlane.f32.xlu0 %v4123
    %v4127 = vpop.xlane.xlu0 %4126
    %v4128 = vmul.f32 %v4125, %v120
    %v4129 = vmul.f32 %v4127, %v120
    %v4130 = vadd.f32 %v4128, 1e-12
    %v4131 = vadd.f32 %v4129, 1e-12
    %v4132 = vrsqrt.pop %v4130
    %v4133 = vrsqrt.pop %v4131
    %v4134 = vmul.f32 %v4120, %v4132
    %v4135 = vmul.f32 %v4121, %v4133
    %v4137 = vlaneseq
    %v4138 = vshrl.u32 %v4137, 7
    %v4139 = vsub.s32 0, %v4138
    %v4140 = vrot.slane %v4111, %v4139
    %v4142 = vmul.f32 %v4134, %v4140
    %v4143 = vmul.f32 %v4135, %v4140
    %v4145 = vlaneseq
    %v4146 = vshrl.u32 %v4145, 7
    %v4147 = vsub.s32 0, %v4146
    %v4148 = vrot.slane %v4113, %v4147
    %v4150 = vadd.f32 %v4142, %v4148
    %v4151 = vadd.f32 %v4143, %v4148
    %s4152 = scalar_lea.vmem %s10, 128
    %v4153 = vld [vmem:[%s4152] sm:$0xff]
    %v4154 = vld [vmem:[%s4152 + $0x8] sm:$0xff]
    %v4155 = vld [vmem:[%s4152 + $0x10] sm:$0xff]
    %v4156 = vld [vmem:[%s4152 + $0x18] sm:$0xff]
    %v4157 = vld [vmem:[%s4152 + $0x20] sm:$0xff]
    %v4158 = vld [vmem:[%s4152 + $0x28] sm:$0xff]
    %v4159 = vld [vmem:[%s4152 + $0x30] sm:$0xff]
    %v4160 = vld [vmem:[%s4152 + $0x38] sm:$0xff]
    %v4161 = vld [vmem:[%s4152 + $0x40] sm:$0xff]
    %v4162 = vld [vmem:[%s4152 + $0x48] sm:$0xff]
    %v4163 = vld [vmem:[%s4152 + $0x50] sm:$0xff]
    %v4164 = vld [vmem:[%s4152 + $0x58] sm:$0xff]
    %v4165 = vld [vmem:[%s4152 + $0x60] sm:$0xff]
    %v4166 = vld [vmem:[%s4152 + $0x68] sm:$0xff]
    %v4167 = vld [vmem:[%s4152 + $0x70] sm:$0xff]
    %v4168 = vld [vmem:[%s4152 + $0x78] sm:$0xff]
    %v4169 = vpack.c.bf16 %v4151, %v4150
    %s4170 = scalar_lea.vmem %s11, 2
    %v4171 = vld [vmem:[%s4170] sm:$0x3]
    %v4173 = vlaneseq
    %v4174 = vshrl.u32 %v4173, 7
    %v4175 = vsub.s32 0, %v4174
    %v4176 = vrot.slane %v4171, %v4175
    %v4177 = vlaneseq
    %v4178 = vshrl.u32 %v4177, 7
    %v4179 = vsub.s32 1, %v4178
    %v4180 = vrot.slane %v4171, %v4179
    %v4199 = vunpack.c.l.b16 %v4153
    %v4200 = vunpack.c.h.b16 %v4153
    %v4201 = vunpack.c.l.b16 %v4154
    %v4202 = vunpack.c.h.b16 %v4154
    %v4203 = vunpack.c.l.b16 %v4155
    %v4204 = vunpack.c.h.b16 %v4155
    %v4205 = vunpack.c.l.b16 %v4156
    %v4206 = vunpack.c.h.b16 %v4156
    %v4207 = vunpack.c.l.b16 %v4157
    %v4208 = vunpack.c.h.b16 %v4157
    %v4209 = vunpack.c.l.b16 %v4158
    %v4210 = vunpack.c.h.b16 %v4158
    %v4211 = vunpack.c.l.b16 %v4159
    %v4212 = vunpack.c.h.b16 %v4159
    %v4213 = vunpack.c.l.b16 %v4160
    %v4214 = vunpack.c.h.b16 %v4160
    %v4215 = vunpack.c.l.b16 %v4161
    %v4216 = vunpack.c.h.b16 %v4161
    %v4217 = vunpack.c.l.b16 %v4162
    %v4218 = vunpack.c.h.b16 %v4162
    %v4219 = vunpack.c.l.b16 %v4163
    %v4220 = vunpack.c.h.b16 %v4163
    %v4221 = vunpack.c.l.b16 %v4164
    %v4222 = vunpack.c.h.b16 %v4164
    %v4223 = vunpack.c.l.b16 %v4165
    %v4224 = vunpack.c.h.b16 %v4165
    %v4225 = vunpack.c.l.b16 %v4166
    %v4226 = vunpack.c.h.b16 %v4166
    %v4227 = vunpack.c.l.b16 %v4167
    %v4228 = vunpack.c.h.b16 %v4167
    %v4229 = vunpack.c.l.b16 %v4168
    %v4230 = vunpack.c.h.b16 %v4168
    %v4231 = vpack.c.b16 %v4201, %v4199
    %v4232 = vpack.c.b16 %v4202, %v4200
    %v4233 = vpack.c.b16 %v4205, %v4203
    %v4234 = vpack.c.b16 %v4206, %v4204
    %v4235 = vpack.c.b16 %v4209, %v4207
    %v4236 = vpack.c.b16 %v4210, %v4208
    %v4237 = vpack.c.b16 %v4213, %v4211
    %v4238 = vpack.c.b16 %v4214, %v4212
    %v4239 = vpack.c.b16 %v4217, %v4215
    %v4240 = vpack.c.b16 %v4218, %v4216
    %v4241 = vpack.c.b16 %v4221, %v4219
    %v4242 = vpack.c.b16 %v4222, %v4220
    %v4243 = vpack.c.b16 %v4225, %v4223
    %v4244 = vpack.c.b16 %v4226, %v4224
    %v4245 = vpack.c.b16 %v4229, %v4227
    %v4246 = vpack.c.b16 %v4230, %v4228
    %4263 = vmatprep.subr.bf16.mxu0 %v4232
    %4264 = vmatpush1.bf16.msra.mxu0 %v4231
    %4265 = vmatprep.subr.bf16.mxu0 %v4234
    %4266 = vmatpush1.bf16.msra.mxu0 %v4233
    %4267 = vmatprep.subr.bf16.mxu0 %v4236
    %4268 = vmatpush1.bf16.msra.mxu0 %v4235
    %4269 = vmatprep.subr.bf16.mxu0 %v4238
    %4270 = vmatpush1.bf16.msra.mxu0 %v4237
    %4271 = vmatprep.subr.bf16.mxu0 %v4240
    %4272 = vmatpush1.bf16.msra.mxu0 %v4239
    %4273 = vmatprep.subr.bf16.mxu0 %v4242
    %4274 = vmatpush1.bf16.msra.mxu0 %v4241
    %4275 = vmatprep.subr.bf16.mxu0 %v4244
    %4276 = vmatpush1.bf16.msra.mxu0 %v4243
    %4277 = vmatprep.subr.bf16.mxu0 %v4246
    %4278 = vmatpush1.bf16.msra.mxu0 %v4245
    %4279 = vmatprep.subr.bf16.mxu0 0
    %4280 = vmatpush1.bf16.msra.mxu0 0
    %4281 = vmatprep.subr.bf16.mxu0 0
    %4282 = vmatpush1.bf16.msra.mxu0 0
    %4283 = vmatprep.subr.bf16.mxu0 0
    %4284 = vmatpush1.bf16.msra.mxu0 0
    %4285 = vmatprep.subr.bf16.mxu0 0
    %4286 = vmatpush1.bf16.msra.mxu0 0
    %4287 = vmatprep.subr.bf16.mxu0 0
    %4288 = vmatpush1.bf16.msra.mxu0 0
    %4289 = vmatprep.subr.bf16.mxu0 0
    %4290 = vmatpush1.bf16.msra.mxu0 0
    %4291 = vmatprep.subr.bf16.mxu0 0
    %4292 = vmatpush1.bf16.msra.mxu0 0
    %4293 = vmatprep.subr.bf16.mxu0 0
    %4294 = vmatpush1.bf16.msra.mxu0 0
    %4295 = vmatprep.mubr.bf16.mxu0 0
    %4296 = vmatmul.mubr.bf16.gmra.mrb[0].mxu0 %v4169
    %v4297 = vpop.f32.mrb[0].mxu0
    %v4298 = vadd.f32 %v4176, %v4297
    %v4299 = vpop.f32.mrb[0].mxu0
    %v4300 = vadd.f32 %v4180, %v4299
    %v4301 = vpop.f32.mrb[0].mxu0
    %v4302 = vadd.f32 %v4176, %v4301
    %v4303 = vpop.f32.mrb[0].mxu0
    %v4304 = vadd.f32 %v4180, %v4303
    %4305 = vdwg.mxu0
    %v4306 = vmul.f32 %v4298, 0.5
    %v4307 = vmul.f32 %v4300, 0.5
    %v4308 = vmul.f32 %v4302, 0.5
    %v4309 = vmul.f32 %v4304, 0.5
    %v4310 = vmul.f32 %v4298, 0.044715
    %v4311 = vmul.f32 %v4300, 0.044715
    %v4312 = vmul.f32 %v4302, 0.044715
    %v4313 = vmul.f32 %v4304, 0.044715
    %v4314 = vmul.f32 %v4310, %v4298
    %v4315 = vmul.f32 %v4311, %v4300
    %v4316 = vmul.f32 %v4312, %v4302
    %v4317 = vmul.f32 %v4313, %v4304
    %v4318 = vmul.f32 %v4314, %v4298
    %v4319 = vmul.f32 %v4315, %v4300
    %v4320 = vmul.f32 %v4316, %v4302
    %v4321 = vmul.f32 %v4317, %v4304
    %v4322 = vadd.f32 %v4298, %v4318
    %v4323 = vadd.f32 %v4300, %v4319
    %v4324 = vadd.f32 %v4302, %v4320
    %v4325 = vadd.f32 %v4304, %v4321
    %v4326 = vmul.f32 %v4322, 0.7978846
    %v4327 = vmul.f32 %v4323, 0.7978846
    %v4328 = vmul.f32 %v4324, 0.7978846
    %v4329 = vmul.f32 %v4325, 0.7978846
    %v4330 = vtanh.pop %v4326
    %v4331 = vtanh.pop %v4327
    %v4332 = vtanh.pop %v4328
    %v4333 = vtanh.pop %v4329
    %v4334 = vadd.f32 %v4330, 1.0
    %v4335 = vadd.f32 %v4331, 1.0
    %v4336 = vadd.f32 %v4332, 1.0
    %v4337 = vadd.f32 %v4333, 1.0
    %v4338 = vmul.f32 %v4306, %v4334
    %v4339 = vmul.f32 %v4307, %v4335
    %v4340 = vmul.f32 %v4308, %v4336
    %v4341 = vmul.f32 %v4309, %v4337
    %s4342 = scalar_lea.vmem [#allocation9], 128
    %v4343 = vld [vmem:[%s4342] sm:$0xf]
    %v4344 = vld [vmem:[%s4342 + $0x4] sm:$0xf]
    %v4345 = vld [vmem:[%s4342 + $0x8] sm:$0xf]
    %v4346 = vld [vmem:[%s4342 + $0xc] sm:$0xf]
    %v4347 = vld [vmem:[%s4342 + $0x10] sm:$0xf]
    %v4348 = vld [vmem:[%s4342 + $0x14] sm:$0xf]
    %v4349 = vld [vmem:[%s4342 + $0x18] sm:$0xf]
    %v4350 = vld [vmem:[%s4342 + $0x1c] sm:$0xf]
    %v4351 = vld [vmem:[%s4342 + $0x20] sm:$0xf]
    %v4352 = vld [vmem:[%s4342 + $0x24] sm:$0xf]
    %v4353 = vld [vmem:[%s4342 + $0x28] sm:$0xf]
    %v4354 = vld [vmem:[%s4342 + $0x2c] sm:$0xf]
    %v4355 = vld [vmem:[%s4342 + $0x30] sm:$0xf]
    %v4356 = vld [vmem:[%s4342 + $0x34] sm:$0xf]
    %v4357 = vld [vmem:[%s4342 + $0x38] sm:$0xf]
    %v4358 = vld [vmem:[%s4342 + $0x3c] sm:$0xf]
    %v4359 = vld [vmem:[%s4342 + $0x40] sm:$0xf]
    %v4360 = vld [vmem:[%s4342 + $0x44] sm:$0xf]
    %v4361 = vld [vmem:[%s4342 + $0x48] sm:$0xf]
    %v4362 = vld [vmem:[%s4342 + $0x4c] sm:$0xf]
    %v4363 = vld [vmem:[%s4342 + $0x50] sm:$0xf]
    %v4364 = vld [vmem:[%s4342 + $0x54] sm:$0xf]
    %v4365 = vld [vmem:[%s4342 + $0x58] sm:$0xf]
    %v4366 = vld [vmem:[%s4342 + $0x5c] sm:$0xf]
    %v4367 = vld [vmem:[%s4342 + $0x60] sm:$0xf]
    %v4368 = vld [vmem:[%s4342 + $0x64] sm:$0xf]
    %v4369 = vld [vmem:[%s4342 + $0x68] sm:$0xf]
    %v4370 = vld [vmem:[%s4342 + $0x6c] sm:$0xf]
    %v4371 = vld [vmem:[%s4342 + $0x70] sm:$0xf]
    %v4372 = vld [vmem:[%s4342 + $0x74] sm:$0xf]
    %v4373 = vld [vmem:[%s4342 + $0x78] sm:$0xf]
    %v4374 = vld [vmem:[%s4342 + $0x7c] sm:$0xf]
    %v4375 = vpack.c.bf16 %v4340, %v4338
    %v4376 = vpack.c.bf16 %v4341, %v4339
    %s4377 = scalar_lea.vmem %s13, 1
    %v4378 = vld [vmem:[%s4377] sm:$0x1]
    %v4380 = vlaneseq
    %v4381 = vshrl.u32 %v4380, 7
    %v4382 = vsub.s32 0, %v4381
    %v4383 = vrot.slane %v4378, %v4382
    %v4417 = vunpack.c.l.b16 %v4343
    %v4418 = vunpack.c.l.b16 %v4344
    %v4419 = vunpack.c.l.b16 %v4345
    %v4420 = vunpack.c.l.b16 %v4346
    %v4421 = vunpack.c.l.b16 %v4347
    %v4422 = vunpack.c.l.b16 %v4348
    %v4423 = vunpack.c.l.b16 %v4349
    %v4424 = vunpack.c.l.b16 %v4350
    %v4425 = vunpack.c.l.b16 %v4351
    %v4426 = vunpack.c.l.b16 %v4352
    %v4427 = vunpack.c.l.b16 %v4353
    %v4428 = vunpack.c.l.b16 %v4354
    %v4429 = vunpack.c.l.b16 %v4355
    %v4430 = vunpack.c.l.b16 %v4356
    %v4431 = vunpack.c.l.b16 %v4357
    %v4432 = vunpack.c.l.b16 %v4358
    %v4433 = vunpack.c.l.b16 %v4359
    %v4434 = vunpack.c.l.b16 %v4360
    %v4435 = vunpack.c.l.b16 %v4361
    %v4436 = vunpack.c.l.b16 %v4362
    %v4437 = vunpack.c.l.b16 %v4363
    %v4438 = vunpack.c.l.b16 %v4364
    %v4439 = vunpack.c.l.b16 %v4365
    %v4440 = vunpack.c.l.b16 %v4366
    %v4441 = vunpack.c.l.b16 %v4367
    %v4442 = vunpack.c.l.b16 %v4368
    %v4443 = vunpack.c.l.b16 %v4369
    %v4444 = vunpack.c.l.b16 %v4370
    %v4445 = vunpack.c.l.b16 %v4371
    %v4446 = vunpack.c.l.b16 %v4372
    %v4447 = vunpack.c.l.b16 %v4373
    %v4448 = vunpack.c.l.b16 %v4374
    %v4449 = vpack.c.b16 %v4418, %v4417
    %v4450 = vpack.c.b16 %v4420, %v4419
    %v4451 = vpack.c.b16 %v4422, %v4421
    %v4452 = vpack.c.b16 %v4424, %v4423
    %v4453 = vpack.c.b16 %v4426, %v4425
    %v4454 = vpack.c.b16 %v4428, %v4427
    %v4455 = vpack.c.b16 %v4430, %v4429
    %v4456 = vpack.c.b16 %v4432, %v4431
    %v4457 = vpack.c.b16 %v4434, %v4433
    %v4458 = vpack.c.b16 %v4436, %v4435
    %v4459 = vpack.c.b16 %v4438, %v4437
    %v4460 = vpack.c.b16 %v4440, %v4439
    %v4461 = vpack.c.b16 %v4442, %v4441
    %v4462 = vpack.c.b16 %v4444, %v4443
    %v4463 = vpack.c.b16 %v4446, %v4445
    %v4464 = vpack.c.b16 %v4448, %v4447
    %4481 = vmatprep.subr.bf16.mxu0 0
    %4482 = vmatpush1.bf16.msra.mxu0 %v4449
    %4483 = vmatprep.subr.bf16.mxu0 0
    %4484 = vmatpush1.bf16.msra.mxu0 %v4450
    %4485 = vmatprep.subr.bf16.mxu0 0
    %4486 = vmatpush1.bf16.msra.mxu0 %v4451
    %4487 = vmatprep.subr.bf16.mxu0 0
    %4488 = vmatpush1.bf16.msra.mxu0 %v4452
    %4489 = vmatprep.subr.bf16.mxu0 0
    %4490 = vmatpush1.bf16.msra.mxu0 %v4453
    %4491 = vmatprep.subr.bf16.mxu0 0
    %4492 = vmatpush1.bf16.msra.mxu0 %v4454
    %4493 = vmatprep.subr.bf16.mxu0 0
    %4494 = vmatpush1.bf16.msra.mxu0 %v4455
    %4495 = vmatprep.subr.bf16.mxu0 0
    %4496 = vmatpush1.bf16.msra.mxu0 %v4456
    %4497 = vmatprep.subr.bf16.mxu0 0
    %4498 = vmatpush1.bf16.msra.mxu0 %v4457
    %4499 = vmatprep.subr.bf16.mxu0 0
    %4500 = vmatpush1.bf16.msra.mxu0 %v4458
    %4501 = vmatprep.subr.bf16.mxu0 0
    %4502 = vmatpush1.bf16.msra.mxu0 %v4459
    %4503 = vmatprep.subr.bf16.mxu0 0
    %4504 = vmatpush1.bf16.msra.mxu0 %v4460
    %4505 = vmatprep.subr.bf16.mxu0 0
    %4506 = vmatpush1.bf16.msra.mxu0 %v4461
    %4507 = vmatprep.subr.bf16.mxu0 0
    %4508 = vmatpush1.bf16.msra.mxu0 %v4462
    %4509 = vmatprep.subr.bf16.mxu0 0
    %4510 = vmatpush1.bf16.msra.mxu0 %v4463
    %4511 = vmatprep.subr.bf16.mxu0 0
    %4512 = vmatpush1.bf16.msra.mxu0 %v4464
    %4513 = vmatprep.mubr.bf16.mxu0 %v4376
    %4514 = vmatmul.mubr.bf16.gmra.mrb[0].mxu0 %v4375
    %v4515 = vpop.f32.mrb[0].mxu0
    %v4516 = vadd.f32 %v4383, %v4515
    %v4517 = vpop.f32.mrb[0].mxu0
    %v4518 = vpop.f32.mrb[0].mxu0
    %v4519 = vadd.f32 %v4383, %v4518
    %v4520 = vpop.f32.mrb[0].mxu0
    %4521 = vdwg.mxu0
    %v4522 = vadd.f32 %v4516, %v4150
    %v4523 = vadd.f32 %v4519, %v4151
    %s4524 = scalar_lea.vmem %s14, 1
    %v4525 = vld [vmem:[%s4524] sm:$0x1]
    %s4526 = scalar_lea.vmem %s15, 1
    %v4527 = vld [vmem:[%s4526] sm:$0x1]
    %4528 = vadd.xlane.f32.xlu0 %v4522
    %v4529 = vpop.xlane.xlu0 %4528
    %4530 = vadd.xlane.f32.xlu0 %v4523
    %v4531 = vpop.xlane.xlu0 %4530
    %v4532 = vmul.f32 %v4529, %v120
    %v4533 = vmul.f32 %v4531, %v120
    %v4534 = vsub.f32 %v4522, %v4532
    %v4535 = vsub.f32 %v4523, %v4533
    %v4536 = vmul.f32 %v4534, %v4534
    %v4537 = vmul.f32 %v4535, %v4535
    %4538 = vadd.xlane.f32.xlu0 %v4536
    %v4539 = vpop.xlane.xlu0 %4538
    %4540 = vadd.xlane.f32.xlu0 %v4537
    %v4541 = vpop.xlane.xlu0 %4540
    %v4542 = vmul.f32 %v4539, %v120
    %v4543 = vmul.f32 %v4541, %v120
    %v4544 = vadd.f32 %v4542, 1e-12
    %v4545 = vadd.f32 %v4543, 1e-12
    %v4546 = vrsqrt.pop %v4544
    %v4547 = vrsqrt.pop %v4545
    %v4548 = vmul.f32 %v4534, %v4546
    %v4549 = vmul.f32 %v4535, %v4547
    %v4551 = vlaneseq
    %v4552 = vshrl.u32 %v4551, 7
    %v4553 = vsub.s32 0, %v4552
    %v4554 = vrot.slane %v4525, %v4553
    %v4556 = vmul.f32 %v4548, %v4554
    %v4557 = vmul.f32 %v4549, %v4554
    %v4559 = vlaneseq
    %v4560 = vshrl.u32 %v4559, 7
    %v4561 = vsub.s32 0, %v4560
    %v4562 = vrot.slane %v4527, %v4561
    %v4564 = vadd.f32 %v4556, %v4562
    %v4565 = vadd.f32 %v4557, %v4562
    %v4567 = vrot.slane %v4565, 7
    %vm4569 = vcmask 1040384
    %v4570 = vsel %vm4569, %v4564, %v4567
    %v4571 = vld [vmem:[%s16] sm:$0xf]
    %v4572 = vld [vmem:[%s16 + $0x4] sm:$0xf]
    %v4573 = vld [vmem:[%s16 + $0x8] sm:$0xf]
    %v4574 = vld [vmem:[%s16 + $0xc] sm:$0xf]
    %v4575 = vld [vmem:[%s16 + $0x10] sm:$0xf]
    %v4576 = vld [vmem:[%s16 + $0x14] sm:$0xf]
    %v4577 = vld [vmem:[%s16 + $0x18] sm:$0xf]
    %v4578 = vld [vmem:[%s16 + $0x1c] sm:$0xf]
    %v4579 = vld [vmem:[%s16 + $0x20] sm:$0xf]
    %v4580 = vld [vmem:[%s16 + $0x24] sm:$0xf]
    %v4581 = vld [vmem:[%s16 + $0x28] sm:$0xf]
    %v4582 = vld [vmem:[%s16 + $0x2c] sm:$0xf]
    %v4583 = vld [vmem:[%s16 + $0x30] sm:$0xf]
    %v4584 = vld [vmem:[%s16 + $0x34] sm:$0xf]
    %v4585 = vld [vmem:[%s16 + $0x38] sm:$0xf]
    %v4586 = vld [vmem:[%s16 + $0x3c] sm:$0xf]
    %v4587 = vpack.c.bf16 %v4570, %v4570
    %v4588 = vld [vmem:[%s17] sm:$0x1]
    %v4590 = vlaneseq
    %v4591 = vshrl.u32 %v4590, 7
    %v4592 = vsub.s32 0, %v4591
    %v4593 = vrot.slane %v4588, %v4592
    %v4611 = vunpack.c.l.b16 %v4571
    %v4612 = vunpack.c.l.b16 %v4572
    %v4613 = vunpack.c.l.b16 %v4573
    %v4614 = vunpack.c.l.b16 %v4574
    %v4615 = vunpack.c.l.b16 %v4575
    %v4616 = vunpack.c.l.b16 %v4576
    %v4617 = vunpack.c.l.b16 %v4577
    %v4618 = vunpack.c.l.b16 %v4578
    %v4619 = vunpack.c.l.b16 %v4579
    %v4620 = vunpack.c.l.b16 %v4580
    %v4621 = vunpack.c.l.b16 %v4581
    %v4622 = vunpack.c.l.b16 %v4582
    %v4623 = vunpack.c.l.b16 %v4583
    %v4624 = vunpack.c.l.b16 %v4584
    %v4625 = vunpack.c.l.b16 %v4585
    %v4626 = vunpack.c.l.b16 %v4586
    %v4627 = vpack.c.b16 %v4612, %v4611
    %v4628 = vpack.c.b16 %v4614, %v4613
    %v4629 = vpack.c.b16 %v4616, %v4615
    %v4630 = vpack.c.b16 %v4618, %v4617
    %v4631 = vpack.c.b16 %v4620, %v4619
    %v4632 = vpack.c.b16 %v4622, %v4621
    %v4633 = vpack.c.b16 %v4624, %v4623
    %v4634 = vpack.c.b16 %v4626, %v4625
    %4643 = vmatprep.subr.bf16.mxu0 0
    %4644 = vmatpush1.bf16.msra.mxu0 %v4627
    %4645 = vmatprep.subr.bf16.mxu0 0
    %4646 = vmatpush1.bf16.msra.mxu0 %v4628
    %4647 = vmatprep.subr.bf16.mxu0 0
    %4648 = vmatpush1.bf16.msra.mxu0 %v4629
    %4649 = vmatprep.subr.bf16.mxu0 0
    %4650 = vmatpush1.bf16.msra.mxu0 %v4630
    %4651 = vmatprep.subr.bf16.mxu0 0
    %4652 = vmatpush1.bf16.msra.mxu0 %v4631
    %4653 = vmatprep.subr.bf16.mxu0 0
    %4654 = vmatpush1.bf16.msra.mxu0 %v4632
    %4655 = vmatprep.subr.bf16.mxu0 0
    %4656 = vmatpush1.bf16.msra.mxu0 %v4633
    %4657 = vmatprep.subr.bf16.mxu0 0
    %4658 = vmatpush1.bf16.msra.mxu0 %v4634
    %4659 = vmatprep.subr.bf16.mxu0 0
    %4660 = vmatpush1.bf16.msra.mxu0 0
    %4661 = vmatprep.subr.bf16.mxu0 0
    %4662 = vmatpush1.bf16.msra.mxu0 0
    %4663 = vmatprep.subr.bf16.mxu0 0
    %4664 = vmatpush1.bf16.msra.mxu0 0
    %4665 = vmatprep.subr.bf16.mxu0 0
    %4666 = vmatpush1.bf16.msra.mxu0 0
    %4667 = vmatprep.subr.bf16.mxu0 0
    %4668 = vmatpush1.bf16.msra.mxu0 0
    %4669 = vmatprep.subr.bf16.mxu0 0
    %4670 = vmatpush1.bf16.msra.mxu0 0
    %4671 = vmatprep.subr.bf16.mxu0 0
    %4672 = vmatpush1.bf16.msra.mxu0 0
    %4673 = vmatprep.subr.bf16.mxu0 0
    %4674 = vmatpush1.bf16.msra.mxu0 0
    %4675 = vmatprep.mubr.bf16.mxu0 0
    %4676 = vmatmul.mubr.bf16.gmra.mrb[0].mxu0 %v4587
    %v4677 = vpop.f32.mrb[0].mxu0
    %v4678 = vadd.f32 %v4593, %v4677
    %v4679 = vpop.f32.mrb[0].mxu0
    %v4680 = vpop.f32.mrb[0].mxu0
    %v4681 = vpop.f32.mrb[0].mxu0
    %4682 = vdwg.mxu0
    %4683 = vst [vmem:[#allocation11] sm:$0x3] %v4678
    // Predicated region
    $region90: #{decision_classifier_forward.1} parent=1 // pred_check
      _
    $region91: #{decision_classifier_forward.1} parent=1 // pred_check_branch
      %4685 = sbr.rel (0) target = $region93
    $region92: #{decision_classifier_forward.1} parent=1 // pred_region
      %s4687 = ssub.s32 32, 32
      %4688 = vsyncadd [#allocation5], %s4687
      %s4690 = sshll.u32 [#allocation11], 4
      %s4691 = int_to_ptr.vmem [resolvable:$true] %s4690
      %4693 = dma.vmem_to_hbm [thread:$0]  %s4691, 32, %s18, [#allocation5]
    $region93: #{decision_classifier_forward.1} parent=1 // pred_fallthru
      _
    // Predicated region
    $region94: #{decision_classifier_forward.1} parent=1 // pred_check
      _
    $region95: #{decision_classifier_forward.1} parent=1 // pred_check_branch
      %4695 = sbr.rel (0) target = $region97
    $region96: #{decision_classifier_forward.1} parent=1 // pred_region
      %4696 = dma.done [#allocation5], 32
    $region97: #{decision_classifier_forward.1} parent=1 // pred_fallthru
      _
    %4697 = vsyncpa [#allocation4], 1
    %4698 = vsyncpa [#allocation7], 1
    %4699 = vsyncpa [#allocation10], 1
    %4700 = vsyncpa [#allocation5], 1

</llo_original>
